<compile_context>
chip_gen: v6e
topology: v6e:2x2x1
jax: 0.10.0
libtpu: 0.0.40
codegen_flags: <defaults>
</compile_context>

<pallas_src>
import jax
import jax.numpy as jnp
from jax import lax
from jax.experimental import pallas as pl
from jax.experimental.pallas import tpu as pltpu


def _sigmoid(x):
    # exp goes to the EUP; approx reciprocal also rides the EUP slot (keeps VALU free).
    return pl.reciprocal(1.0 + jnp.exp(-x), approx=True)


def discriminator_kernel(emb_ref,        # (T*B, D)  bf16  time-major flattened embeddings
                         mask_ref,       # (T, B, 1) f32
                         wih_ref,        # (D, 8D)   bf16  [wih_fwd | wih_bwd]
                         b_in_ref,       # (1, 8D)   f32   [b_fwd  | b_bwd]
                         whh_f_ref,      # (D, 4D)   bf16
                         whh_b_ref,      # (D, 4D)   bf16
                         w1a_ref,        # (D, 4D)   bf16  (w1 rows for the fwd half)
                         w1b_ref,        # (D, 4D)   bf16  (w1 rows for the bwd half)
                         b1_ref,         # (1, 4D)   f32
                         w2_ref,         # (1, 4D)   f32   (final linear as a row vector)
                         b2_ref,         # (1, 1)    f32
                         out_ref,        # (T, B)    f32
                         gates_scr,      # (T*B, 8D) f32   precomputed input projections
                         hf_scr,         # (T*B, D)  f32   fwd hidden states (masked)
                         hb_scr):        # (T*B, D)  f32   bwd hidden states (masked)
    T, B, _ = mask_ref.shape
    D = emb_ref.shape[1]
    D4 = 4 * D

    # ---- hoisted input projections: one big MXU matmul for both directions ----------
    gates_scr[...] = (
        jnp.dot(emb_ref[...], wih_ref[...], preferred_element_type=jnp.float32)
        + b_in_ref[...])                                           # (T*B, 8D) f32

    # preload recurrent weights once (small; avoids per-step vector loads)
    whh_f = whh_f_ref[...]
    whh_b = whh_b_ref[...]

    zeros = jnp.zeros((B, D), jnp.float32)

    def cell(gates, h, c, m):
        # gate order i, f, g, o (f32 math)
        i_g = _sigmoid(gates[:, 0 * D:1 * D])
        f_g = _sigmoid(gates[:, 1 * D:2 * D])
        g_g = jnp.tanh(gates[:, 2 * D:3 * D])
        o_g = _sigmoid(gates[:, 3 * D:4 * D])
        c_new = f_g * c + i_g * g_g
        h_new = o_g * jnp.tanh(c_new)
        h = m * h_new + (1.0 - m) * h          # carry state through (trailing) padding
        c = m * c_new + (1.0 - m) * c
        return h, c

    # ---- fused fwd/bwd recurrence: fwd step at t=i, bwd step at t=T-1-i --------------
    def step(i, carry):
        hf, cf, hb, cb = carry
        tb = T - 1 - i
        rf = pl.ds(i * B, B)                   # row block, tile-aligned (B = 8 rows)
        rb = pl.ds(tb * B, B)

        # forward direction
        mf = mask_ref[i]                                            # (B, 1)
        gf = gates_scr[rf, 0:D4] + jnp.dot(
            hf.astype(jnp.bfloat16), whh_f, preferred_element_type=jnp.float32)
        hf, cf = cell(gf, hf, cf, mf)
        hf_scr[rf, :] = hf * mf                                     # pads emit zeros

        # backward direction (independent of fwd -> overlapped by the scheduler)
        mb = mask_ref[tb]                                           # (B, 1)
        gb = gates_scr[rb, D4:2 * D4] + jnp.dot(
            hb.astype(jnp.bfloat16), whh_b, preferred_element_type=jnp.float32)
        hb, cb = cell(gb, hb, cb, mb)
        hb_scr[rb, :] = hb * mb

        return hf, cf, hb, cb

    carry = (zeros, zeros, zeros, zeros)
    if T <= 32:
        # fully unrolled straight-line recurrence for short sequences
        for i in range(T):
            carry = step(i, carry)
    else:
        lax.fori_loop(0, T, step, carry, unroll=2)

    # ---- MLP head (Dropout is identity in eval mode) ---------------------------------
    # ReLU(rep) with rep = [hf | hb]; the concat is avoided by splitting w1 in halves.
    relu_f = jnp.maximum(hf_scr[...], 0.0).astype(jnp.bfloat16)     # (T*B, D)
    relu_b = jnp.maximum(hb_scr[...], 0.0).astype(jnp.bfloat16)     # (T*B, D)
    h1 = jnp.maximum(
        jnp.dot(relu_f, w1a_ref[...], preferred_element_type=jnp.float32)
        + jnp.dot(relu_b, w1b_ref[...], preferred_element_type=jnp.float32)
        + b1_ref[...], 0.0)                                         # (T*B, 4D)
    # final Linear(4D, 1): VPU multiply + lane reduction instead of an N=1 MXU matmul
    logit = jnp.sum(h1 * w2_ref[...], axis=-1, keepdims=True) + b2_ref[...]   # (T*B, 1)
    out_ref[...] = _sigmoid(logit).reshape(T, B)


def discriminator_forward(encoded_smiles, params, start_token):
    B0, S = encoded_smiles.shape
    D = params['embedding'].shape[1]
    T = S + 1

    starts = jnp.full((B0, 1), start_token, dtype=encoded_smiles.dtype)
    tokens = jnp.concatenate([starts, encoded_smiles], axis=1)      # (B0, T)
    mask = tokens > 0                                               # (B0, T) bool

    # Pad batch to the f32 sublane width (8); padded rows are all-PAD (mask 0) and
    # are sliced away after the kernel.
    B = ((max(B0, 8) + 7) // 8) * 8
    tokens_p = jnp.pad(tokens, ((0, B - B0), (0, 0)))
    mask_p = tokens_p > 0                                           # (B, T)

    # Embedding gather (glue, plain JAX); padding_idx row 0 is zero.
    emb = jnp.take(params['embedding'], tokens_p, axis=0)           # (B, T, D) f32

    # Time-major, flat (T*B, D) bf16 activations for one big MXU input projection.
    emb_flat = jnp.transpose(emb, (1, 0, 2)).reshape(T * B, D).astype(jnp.bfloat16)
    mask_t = jnp.transpose(mask_p, (1, 0)).astype(jnp.float32)[:, :, None]   # (T, B, 1)

    bf16 = jnp.bfloat16
    wih = jnp.concatenate([params['wih_f'], params['wih_b']], axis=1).astype(bf16)  # (D, 8D)
    b_in = jnp.concatenate([params['b_f'], params['b_b']], axis=1)                  # (1, 8D)
    whh_f = params['whh_f'].astype(bf16)                                            # (D, 4D)
    whh_b = params['whh_b'].astype(bf16)                                            # (D, 4D)
    w1a = params['w1'][:D].astype(bf16)                                             # (D, 4D)
    w1b = params['w1'][D:].astype(bf16)                                             # (D, 4D)
    b1 = params['b1']                                                               # (1, 4D)
    w2_row = params['w2'].reshape(1, -1)                                            # (1, 4D)
    b2 = params['b2']                                                               # (1, 1)

    vmem = pl.BlockSpec(memory_space=pltpu.MemorySpace.VMEM)
    out_t = pl.pallas_call(
        discriminator_kernel,
        out_shape=jax.ShapeDtypeStruct((T, B), jnp.float32),
        in_specs=[vmem] * 11,
        out_specs=vmem,
        scratch_shapes=[
            pltpu.VMEM((T * B, 8 * D), jnp.float32),   # precomputed input gates
            pltpu.VMEM((T * B, D), jnp.float32),       # fwd hidden states
            pltpu.VMEM((T * B, D), jnp.float32),       # bwd hidden states
        ],
        compiler_params=pltpu.CompilerParams(vmem_limit_bytes=32 * 1024 * 1024),
    )(emb_flat, mask_t, wih, b_in, whh_f, whh_b, w1a, w1b, b1, w2_row, b2)

    out = jnp.transpose(out_t, (1, 0))[:B0]                         # (B0, T)
    return {'out': out[:, 1:], 'mask': mask.astype(jnp.float32)[:, 1:]}


def init_params(key, vocab_size, latent_dim):
    D = latent_dim
    D2 = 2 * D          # bidirectional rep dim
    ks = jax.random.split(key, 16)

    def u(k, shape, scale):
        return jax.random.uniform(k, shape, jnp.float32, -scale, scale)

    emb = jax.random.normal(ks[0], (vocab_size, D), jnp.float32)
    emb = emb.at[0].set(0.0)                     # padding_idx=0

    s_lstm = 1.0 / float(D) ** 0.5
    # forward-direction LSTM (PyTorch layout (4D, in) -> transpose to (in, 4D))
    wih_f = u(ks[1], (4 * D, D), s_lstm).T
    whh_f = u(ks[2], (4 * D, D), s_lstm).T
    b_f = (u(ks[3], (4 * D,), s_lstm) + u(ks[4], (4 * D,), s_lstm)).reshape(1, 4 * D)
    # reverse-direction LSTM
    wih_b = u(ks[5], (4 * D, D), s_lstm).T
    whh_b = u(ks[6], (4 * D, D), s_lstm).T
    b_b = (u(ks[7], (4 * D,), s_lstm) + u(ks[8], (4 * D,), s_lstm)).reshape(1, 4 * D)

    # fc: Linear(2D, 4D) then Linear(4D, 1)
    s1 = 1.0 / float(D2) ** 0.5
    w1 = u(ks[9], (2 * D2, D2), s1).T            # (2D, 4D)
    b1 = u(ks[10], (2 * D2,), s1).reshape(1, 2 * D2)
    s2 = 1.0 / float(2 * D2) ** 0.5
    w2 = u(ks[11], (1, 2 * D2), s2).T            # (4D, 1)
    b2 = u(ks[12], (1,), s2).reshape(1, 1)

    return dict(embedding=emb,
                wih_f=wih_f, whh_f=whh_f, b_f=b_f,
                wih_b=wih_b, whh_b=whh_b, b_b=b_b,
                w1=w1, b1=b1, w2=w2, b2=b2)


if __name__ == "__main__":
    key = jax.random.PRNGKey(0)
    vocab_size, latent_dim, start_token = 16, 32, 1
    B, S = 2, 8

    kp, kt = jax.random.split(key)
    params = init_params(kp, vocab_size, latent_dim)

    tokens = jax.random.randint(kt, (B, S), 1, vocab_size, dtype=jnp.int32)
    tokens = tokens.at[1, S - 2:].set(0)         # trailing padding on sample 1

    result = discriminator_forward(tokens, params, start_token)
    jax.block_until_ready(result)

    assert result['out'].shape == (B, S)
    assert result['mask'].shape == (B, S)
    print("KERNEL_OK")
</pallas_src>

<mosaic_0001>
module attributes {stable_mosaic.version = 11 : i64} {
  func.func @discriminator_kernel(%arg0: memref<72x32xbf16, #tpu.memory_space<vmem>>, %arg1: memref<9x8x1xf32, #tpu.memory_space<vmem>>, %arg2: memref<32x256xbf16, #tpu.memory_space<vmem>>, %arg3: memref<1x256xf32, #tpu.memory_space<vmem>>, %arg4: memref<32x128xbf16, #tpu.memory_space<vmem>>, %arg5: memref<32x128xbf16, #tpu.memory_space<vmem>>, %arg6: memref<32x128xbf16, #tpu.memory_space<vmem>>, %arg7: memref<32x128xbf16, #tpu.memory_space<vmem>>, %arg8: memref<1x128xf32, #tpu.memory_space<vmem>>, %arg9: memref<1x128xf32, #tpu.memory_space<vmem>>, %arg10: memref<1x1xf32, #tpu.memory_space<vmem>>, %arg11: memref<9x8xf32, #tpu.memory_space<vmem>>, %arg12: memref<72x256xf32, #tpu.memory_space<vmem>>, %arg13: memref<72x32xf32, #tpu.memory_space<vmem>>, %arg14: memref<72x32xf32, #tpu.memory_space<vmem>>) attributes {dimension_semantics = [], scalar_prefetch = 0 : i64, scratch_operands = 3 : i64, tpu.core_type = #tpu.core_type<tc>} {
    %c0 = arith.constant 0 : index
    %c0_0 = arith.constant 0 : index
    %0 = vector.load %arg0[%c0, %c0_0] : memref<72x32xbf16, #tpu.memory_space<vmem>>, vector<72x32xbf16>
    %c0_1 = arith.constant 0 : index
    %c0_2 = arith.constant 0 : index
    %1 = vector.load %arg2[%c0_1, %c0_2] : memref<32x256xbf16, #tpu.memory_space<vmem>>, vector<32x256xbf16>
    %cst = arith.constant dense<0.000000e+00> : vector<72x256xf32>
    %2 = tpu.matmul %0, %1, %cst {dimension_numbers = #tpu.dot_dimension_numbers<[1], [0], [0], [1], [0, 0, 1, 1], [], []>} : vector<72x32xbf16>, vector<32x256xbf16>, vector<72x256xf32> -> vector<72x256xf32>
    %c0_3 = arith.constant 0 : index
    %c0_4 = arith.constant 0 : index
    %3 = vector.load %arg3[%c0_3, %c0_4] : memref<1x256xf32, #tpu.memory_space<vmem>>, vector<1x256xf32>
    %4 = vector.broadcast %3 : vector<1x256xf32> to vector<72x256xf32>
    %5 = arith.addf %2, %4 : vector<72x256xf32>
    %c0_5 = arith.constant 0 : index
    %c0_6 = arith.constant 0 : index
    %6 = vector.load %arg12[%c0_5, %c0_6] : memref<72x256xf32, #tpu.memory_space<vmem>>, vector<72x256xf32>
    tpu.vector_store %arg12[%c0_5, %c0_6], %5 {strides = array<i32>} : memref<72x256xf32, #tpu.memory_space<vmem>>, vector<72x256xf32>,
    %c0_7 = arith.constant 0 : index
    %c0_8 = arith.constant 0 : index
    %7 = vector.load %arg4[%c0_7, %c0_8] : memref<32x128xbf16, #tpu.memory_space<vmem>>, vector<32x128xbf16>
    %c0_9 = arith.constant 0 : index
    %c0_10 = arith.constant 0 : index
    %8 = vector.load %arg5[%c0_9, %c0_10] : memref<32x128xbf16, #tpu.memory_space<vmem>>, vector<32x128xbf16>
    %cst_11 = arith.constant 0.000000e+00 : f32
    %9 = vector.broadcast %cst_11 : f32 to vector<8x32xf32>
    %c0_12 = arith.constant 0 : index
    %c0_13 = arith.constant 0 : index
    %c0_14 = arith.constant 0 : index
    %10 = vector.load %arg1[%c0_12, %c0_13, %c0_14] : memref<9x8x1xf32, #tpu.memory_space<vmem>>, vector<1x8x1xf32>
    %11 = vector.shape_cast %10 : vector<1x8x1xf32> to vector<8x1xf32>
    %c0_15 = arith.constant 0 : index
    %c0_16 = arith.constant 0 : index
    %12 = vector.load %arg12[%c0_15, %c0_16] : memref<72x256xf32, #tpu.memory_space<vmem>>, vector<8x128xf32>
    %13 = arith.truncf %9 : vector<8x32xf32> to vector<8x32xbf16>
    %cst_17 = arith.constant dense<0.000000e+00> : vector<8x128xf32>
    %14 = tpu.matmul %13, %7, %cst_17 {dimension_numbers = #tpu.dot_dimension_numbers<[1], [0], [0], [1], [0, 0, 1, 1], [], []>} : vector<8x32xbf16>, vector<32x128xbf16>, vector<8x128xf32> -> vector<8x128xf32>
    %15 = arith.addf %12, %14 : vector<8x128xf32>
    %16 = vector.extract_strided_slice %15 {offsets = [0, 0], sizes = [8, 32], strides = [1, 1]} : vector<8x128xf32> to vector<8x32xf32>
    %cst_18 = arith.constant 0.000000e+00 : f32
    %17 = vector.broadcast %cst_18 : f32 to vector<8x32xf32>
    %18 = arith.subf %17, %16 : vector<8x32xf32>
    %19 = math.exp %18 : vector<8x32xf32>
    %cst_19 = arith.constant 1.000000e+00 : f32
    %20 = vector.broadcast %cst_19 : f32 to vector<8x32xf32>
    %21 = arith.addf %20, %19 : vector<8x32xf32>
    %22 = tpu.reciprocal %21 {approx = true} : vector<8x32xf32> -> vector<8x32xf32>
    %23 = vector.extract_strided_slice %15 {offsets = [0, 32], sizes = [8, 32], strides = [1, 1]} : vector<8x128xf32> to vector<8x32xf32>
    %cst_20 = arith.constant 0.000000e+00 : f32
    %24 = vector.broadcast %cst_20 : f32 to vector<8x32xf32>
    %25 = arith.subf %24, %23 : vector<8x32xf32>
    %26 = math.exp %25 : vector<8x32xf32>
    %cst_21 = arith.constant 1.000000e+00 : f32
    %27 = vector.broadcast %cst_21 : f32 to vector<8x32xf32>
    %28 = arith.addf %27, %26 : vector<8x32xf32>
    %29 = tpu.reciprocal %28 {approx = true} : vector<8x32xf32> -> vector<8x32xf32>
    %30 = vector.extract_strided_slice %15 {offsets = [0, 64], sizes = [8, 32], strides = [1, 1]} : vector<8x128xf32> to vector<8x32xf32>
    %31 = math.tanh %30 : vector<8x32xf32>
    %32 = vector.extract_strided_slice %15 {offsets = [0, 96], sizes = [8, 32], strides = [1, 1]} : vector<8x128xf32> to vector<8x32xf32>
    %cst_22 = arith.constant 0.000000e+00 : f32
    %33 = vector.broadcast %cst_22 : f32 to vector<8x32xf32>
    %34 = arith.subf %33, %32 : vector<8x32xf32>
    %35 = math.exp %34 : vector<8x32xf32>
    %cst_23 = arith.constant 1.000000e+00 : f32
    %36 = vector.broadcast %cst_23 : f32 to vector<8x32xf32>
    %37 = arith.addf %36, %35 : vector<8x32xf32>
    %38 = tpu.reciprocal %37 {approx = true} : vector<8x32xf32> -> vector<8x32xf32>
    %39 = arith.mulf %29, %9 : vector<8x32xf32>
    %40 = arith.mulf %22, %31 : vector<8x32xf32>
    %41 = arith.addf %39, %40 : vector<8x32xf32>
    %42 = math.tanh %41 : vector<8x32xf32>
    %43 = arith.mulf %38, %42 : vector<8x32xf32>
    %44 = vector.broadcast %11 : vector<8x1xf32> to vector<8x32xf32>
    %45 = arith.mulf %44, %43 : vector<8x32xf32>
    %cst_24 = arith.constant 1.000000e+00 : f32
    %46 = vector.broadcast %cst_24 : f32 to vector<8x1xf32>
    %47 = arith.subf %46, %11 : vector<8x1xf32>
    %48 = vector.broadcast %47 : vector<8x1xf32> to vector<8x32xf32>
    %49 = arith.mulf %48, %9 : vector<8x32xf32>
    %50 = arith.addf %45, %49 : vector<8x32xf32>
    %51 = vector.broadcast %11 : vector<8x1xf32> to vector<8x32xf32>
    %52 = arith.mulf %51, %41 : vector<8x32xf32>
    %cst_25 = arith.constant 1.000000e+00 : f32
    %53 = vector.broadcast %cst_25 : f32 to vector<8x1xf32>
    %54 = arith.subf %53, %11 : vector<8x1xf32>
    %55 = vector.broadcast %54 : vector<8x1xf32> to vector<8x32xf32>
    %56 = arith.mulf %55, %9 : vector<8x32xf32>
    %57 = arith.addf %52, %56 : vector<8x32xf32>
    %58 = vector.broadcast %11 : vector<8x1xf32> to vector<8x32xf32>
    %59 = arith.mulf %50, %58 : vector<8x32xf32>
    %c0_26 = arith.constant 0 : index
    %c0_27 = arith.constant 0 : index
    %60 = vector.load %arg13[%c0_26, %c0_27] : memref<72x32xf32, #tpu.memory_space<vmem>>, vector<8x32xf32>
    tpu.vector_store %arg13[%c0_26, %c0_27], %59 {strides = array<i32>} : memref<72x32xf32, #tpu.memory_space<vmem>>, vector<8x32xf32>,
    %c8 = arith.constant 8 : index
    %c0_28 = arith.constant 0 : index
    %c0_29 = arith.constant 0 : index
    %61 = vector.load %arg1[%c8, %c0_28, %c0_29] : memref<9x8x1xf32, #tpu.memory_space<vmem>>, vector<1x8x1xf32>
    %62 = vector.shape_cast %61 : vector<1x8x1xf32> to vector<8x1xf32>
    %c64 = arith.constant 64 : index
    %c128 = arith.constant 128 : index
    %63 = vector.load %arg12[%c64, %c128] : memref<72x256xf32, #tpu.memory_space<vmem>>, vector<8x128xf32>
    %64 = arith.truncf %9 : vector<8x32xf32> to vector<8x32xbf16>
    %cst_30 = arith.constant dense<0.000000e+00> : vector<8x128xf32>
    %65 = tpu.matmul %64, %8, %cst_30 {dimension_numbers = #tpu.dot_dimension_numbers<[1], [0], [0], [1], [0, 0, 1, 1], [], []>} : vector<8x32xbf16>, vector<32x128xbf16>, vector<8x128xf32> -> vector<8x128xf32>
    %66 = arith.addf %63, %65 : vector<8x128xf32>
    %67 = vector.extract_strided_slice %66 {offsets = [0, 0], sizes = [8, 32], strides = [1, 1]} : vector<8x128xf32> to vector<8x32xf32>
    %cst_31 = arith.constant 0.000000e+00 : f32
    %68 = vector.broadcast %cst_31 : f32 to vector<8x32xf32>
    %69 = arith.subf %68, %67 : vector<8x32xf32>
    %70 = math.exp %69 : vector<8x32xf32>
    %cst_32 = arith.constant 1.000000e+00 : f32
    %71 = vector.broadcast %cst_32 : f32 to vector<8x32xf32>
    %72 = arith.addf %71, %70 : vector<8x32xf32>
    %73 = tpu.reciprocal %72 {approx = true} : vector<8x32xf32> -> vector<8x32xf32>
    %74 = vector.extract_strided_slice %66 {offsets = [0, 32], sizes = [8, 32], strides = [1, 1]} : vector<8x128xf32> to vector<8x32xf32>
    %cst_33 = arith.constant 0.000000e+00 : f32
    %75 = vector.broadcast %cst_33 : f32 to vector<8x32xf32>
    %76 = arith.subf %75, %74 : vector<8x32xf32>
    %77 = math.exp %76 : vector<8x32xf32>
    %cst_34 = arith.constant 1.000000e+00 : f32
    %78 = vector.broadcast %cst_34 : f32 to vector<8x32xf32>
    %79 = arith.addf %78, %77 : vector<8x32xf32>
    %80 = tpu.reciprocal %79 {approx = true} : vector<8x32xf32> -> vector<8x32xf32>
    %81 = vector.extract_strided_slice %66 {offsets = [0, 64], sizes = [8, 32], strides = [1, 1]} : vector<8x128xf32> to vector<8x32xf32>
    %82 = math.tanh %81 : vector<8x32xf32>
    %83 = vector.extract_strided_slice %66 {offsets = [0, 96], sizes = [8, 32], strides = [1, 1]} : vector<8x128xf32> to vector<8x32xf32>
    %cst_35 = arith.constant 0.000000e+00 : f32
    %84 = vector.broadcast %cst_35 : f32 to vector<8x32xf32>
    %85 = arith.subf %84, %83 : vector<8x32xf32>
    %86 = math.exp %85 : vector<8x32xf32>
    %cst_36 = arith.constant 1.000000e+00 : f32
    %87 = vector.broadcast %cst_36 : f32 to vector<8x32xf32>
    %88 = arith.addf %87, %86 : vector<8x32xf32>
    %89 = tpu.reciprocal %88 {approx = true} : vector<8x32xf32> -> vector<8x32xf32>
    %90 = arith.mulf %80, %9 : vector<8x32xf32>
    %91 = arith.mulf %73, %82 : vector<8x32xf32>
    %92 = arith.addf %90, %91 : vector<8x32xf32>
    %93 = math.tanh %92 : vector<8x32xf32>
    %94 = arith.mulf %89, %93 : vector<8x32xf32>
    %95 = vector.broadcast %62 : vector<8x1xf32> to vector<8x32xf32>
    %96 = arith.mulf %95, %94 : vector<8x32xf32>
    %cst_37 = arith.constant 1.000000e+00 : f32
    %97 = vector.broadcast %cst_37 : f32 to vector<8x1xf32>
    %98 = arith.subf %97, %62 : vector<8x1xf32>
    %99 = vector.broadcast %98 : vector<8x1xf32> to vector<8x32xf32>
    %100 = arith.mulf %99, %9 : vector<8x32xf32>
    %101 = arith.addf %96, %100 : vector<8x32xf32>
    %102 = vector.broadcast %62 : vector<8x1xf32> to vector<8x32xf32>
    %103 = arith.mulf %102, %92 : vector<8x32xf32>
    %cst_38 = arith.constant 1.000000e+00 : f32
    %104 = vector.broadcast %cst_38 : f32 to vector<8x1xf32>
    %105 = arith.subf %104, %62 : vector<8x1xf32>
    %106 = vector.broadcast %105 : vector<8x1xf32> to vector<8x32xf32>
    %107 = arith.mulf %106, %9 : vector<8x32xf32>
    %108 = arith.addf %103, %107 : vector<8x32xf32>
    %109 = vector.broadcast %62 : vector<8x1xf32> to vector<8x32xf32>
    %110 = arith.mulf %101, %109 : vector<8x32xf32>
    %c64_39 = arith.constant 64 : index
    %c0_40 = arith.constant 0 : index
    %111 = vector.load %arg14[%c64_39, %c0_40] : memref<72x32xf32, #tpu.memory_space<vmem>>, vector<8x32xf32>
    tpu.vector_store %arg14[%c64_39, %c0_40], %110 {strides = array<i32>} : memref<72x32xf32, #tpu.memory_space<vmem>>, vector<8x32xf32>,
    %c1 = arith.constant 1 : index
    %c0_41 = arith.constant 0 : index
    %c0_42 = arith.constant 0 : index
    %112 = vector.load %arg1[%c1, %c0_41, %c0_42] : memref<9x8x1xf32, #tpu.memory_space<vmem>>, vector<1x8x1xf32>
    %113 = vector.shape_cast %112 : vector<1x8x1xf32> to vector<8x1xf32>
    %c8_43 = arith.constant 8 : index
    %c0_44 = arith.constant 0 : index
    %114 = vector.load %arg12[%c8_43, %c0_44] : memref<72x256xf32, #tpu.memory_space<vmem>>, vector<8x128xf32>
    %115 = arith.truncf %50 : vector<8x32xf32> to vector<8x32xbf16>
    %cst_45 = arith.constant dense<0.000000e+00> : vector<8x128xf32>
    %116 = tpu.matmul %115, %7, %cst_45 {dimension_numbers = #tpu.dot_dimension_numbers<[1], [0], [0], [1], [0, 0, 1, 1], [], []>} : vector<8x32xbf16>, vector<32x128xbf16>, vector<8x128xf32> -> vector<8x128xf32>
    %117 = arith.addf %114, %116 : vector<8x128xf32>
    %118 = vector.extract_strided_slice %117 {offsets = [0, 0], sizes = [8, 32], strides = [1, 1]} : vector<8x128xf32> to vector<8x32xf32>
    %cst_46 = arith.constant 0.000000e+00 : f32
    %119 = vector.broadcast %cst_46 : f32 to vector<8x32xf32>
    %120 = arith.subf %119, %118 : vector<8x32xf32>
    %121 = math.exp %120 : vector<8x32xf32>
    %cst_47 = arith.constant 1.000000e+00 : f32
    %122 = vector.broadcast %cst_47 : f32 to vector<8x32xf32>
    %123 = arith.addf %122, %121 : vector<8x32xf32>
    %124 = tpu.reciprocal %123 {approx = true} : vector<8x32xf32> -> vector<8x32xf32>
    %125 = vector.extract_strided_slice %117 {offsets = [0, 32], sizes = [8, 32], strides = [1, 1]} : vector<8x128xf32> to vector<8x32xf32>
    %cst_48 = arith.constant 0.000000e+00 : f32
    %126 = vector.broadcast %cst_48 : f32 to vector<8x32xf32>
    %127 = arith.subf %126, %125 : vector<8x32xf32>
    %128 = math.exp %127 : vector<8x32xf32>
    %cst_49 = arith.constant 1.000000e+00 : f32
    %129 = vector.broadcast %cst_49 : f32 to vector<8x32xf32>
    %130 = arith.addf %129, %128 : vector<8x32xf32>
    %131 = tpu.reciprocal %130 {approx = true} : vector<8x32xf32> -> vector<8x32xf32>
    %132 = vector.extract_strided_slice %117 {offsets = [0, 64], sizes = [8, 32], strides = [1, 1]} : vector<8x128xf32> to vector<8x32xf32>
    %133 = math.tanh %132 : vector<8x32xf32>
    %134 = vector.extract_strided_slice %117 {offsets = [0, 96], sizes = [8, 32], strides = [1, 1]} : vector<8x128xf32> to vector<8x32xf32>
    %cst_50 = arith.constant 0.000000e+00 : f32
    %135 = vector.broadcast %cst_50 : f32 to vector<8x32xf32>
    %136 = arith.subf %135, %134 : vector<8x32xf32>
    %137 = math.exp %136 : vector<8x32xf32>
    %cst_51 = arith.constant 1.000000e+00 : f32
    %138 = vector.broadcast %cst_51 : f32 to vector<8x32xf32>
    %139 = arith.addf %138, %137 : vector<8x32xf32>
    %140 = tpu.reciprocal %139 {approx = true} : vector<8x32xf32> -> vector<8x32xf32>
    %141 = arith.mulf %131, %57 : vector<8x32xf32>
    %142 = arith.mulf %124, %133 : vector<8x32xf32>
    %143 = arith.addf %141, %142 : vector<8x32xf32>
    %144 = math.tanh %143 : vector<8x32xf32>
    %145 = arith.mulf %140, %144 : vector<8x32xf32>
    %146 = vector.broadcast %113 : vector<8x1xf32> to vector<8x32xf32>
    %147 = arith.mulf %146, %145 : vector<8x32xf32>
    %cst_52 = arith.constant 1.000000e+00 : f32
    %148 = vector.broadcast %cst_52 : f32 to vector<8x1xf32>
    %149 = arith.subf %148, %113 : vector<8x1xf32>
    %150 = vector.broadcast %149 : vector<8x1xf32> to vector<8x32xf32>
    %151 = arith.mulf %150, %50 : vector<8x32xf32>
    %152 = arith.addf %147, %151 : vector<8x32xf32>
    %153 = vector.broadcast %113 : vector<8x1xf32> to vector<8x32xf32>
    %154 = arith.mulf %153, %143 : vector<8x32xf32>
    %cst_53 = arith.constant 1.000000e+00 : f32
    %155 = vector.broadcast %cst_53 : f32 to vector<8x1xf32>
    %156 = arith.subf %155, %113 : vector<8x1xf32>
    %157 = vector.broadcast %156 : vector<8x1xf32> to vector<8x32xf32>
    %158 = arith.mulf %157, %57 : vector<8x32xf32>
    %159 = arith.addf %154, %158 : vector<8x32xf32>
    %160 = vector.broadcast %113 : vector<8x1xf32> to vector<8x32xf32>
    %161 = arith.mulf %152, %160 : vector<8x32xf32>
    %c8_54 = arith.constant 8 : index
    %c0_55 = arith.constant 0 : index
    %162 = vector.load %arg13[%c8_54, %c0_55] : memref<72x32xf32, #tpu.memory_space<vmem>>, vector<8x32xf32>
    tpu.vector_store %arg13[%c8_54, %c0_55], %161 {strides = array<i32>} : memref<72x32xf32, #tpu.memory_space<vmem>>, vector<8x32xf32>,
    %c7 = arith.constant 7 : index
    %c0_56 = arith.constant 0 : index
    %c0_57 = arith.constant 0 : index
    %163 = vector.load %arg1[%c7, %c0_56, %c0_57] : memref<9x8x1xf32, #tpu.memory_space<vmem>>, vector<1x8x1xf32>
    %164 = vector.shape_cast %163 : vector<1x8x1xf32> to vector<8x1xf32>
    %c56 = arith.constant 56 : index
    %c128_58 = arith.constant 128 : index
    %165 = vector.load %arg12[%c56, %c128_58] : memref<72x256xf32, #tpu.memory_space<vmem>>, vector<8x128xf32>
    %166 = arith.truncf %101 : vector<8x32xf32> to vector<8x32xbf16>
    %cst_59 = arith.constant dense<0.000000e+00> : vector<8x128xf32>
    %167 = tpu.matmul %166, %8, %cst_59 {dimension_numbers = #tpu.dot_dimension_numbers<[1], [0], [0], [1], [0, 0, 1, 1], [], []>} : vector<8x32xbf16>, vector<32x128xbf16>, vector<8x128xf32> -> vector<8x128xf32>
    %168 = arith.addf %165, %167 : vector<8x128xf32>
    %169 = vector.extract_strided_slice %168 {offsets = [0, 0], sizes = [8, 32], strides = [1, 1]} : vector<8x128xf32> to vector<8x32xf32>
    %cst_60 = arith.constant 0.000000e+00 : f32
    %170 = vector.broadcast %cst_60 : f32 to vector<8x32xf32>
    %171 = arith.subf %170, %169 : vector<8x32xf32>
    %172 = math.exp %171 : vector<8x32xf32>
    %cst_61 = arith.constant 1.000000e+00 : f32
    %173 = vector.broadcast %cst_61 : f32 to vector<8x32xf32>
    %174 = arith.addf %173, %172 : vector<8x32xf32>
    %175 = tpu.reciprocal %174 {approx = true} : vector<8x32xf32> -> vector<8x32xf32>
    %176 = vector.extract_strided_slice %168 {offsets = [0, 32], sizes = [8, 32], strides = [1, 1]} : vector<8x128xf32> to vector<8x32xf32>
    %cst_62 = arith.constant 0.000000e+00 : f32
    %177 = vector.broadcast %cst_62 : f32 to vector<8x32xf32>
    %178 = arith.subf %177, %176 : vector<8x32xf32>
    %179 = math.exp %178 : vector<8x32xf32>
    %cst_63 = arith.constant 1.000000e+00 : f32
    %180 = vector.broadcast %cst_63 : f32 to vector<8x32xf32>
    %181 = arith.addf %180, %179 : vector<8x32xf32>
    %182 = tpu.reciprocal %181 {approx = true} : vector<8x32xf32> -> vector<8x32xf32>
    %183 = vector.extract_strided_slice %168 {offsets = [0, 64], sizes = [8, 32], strides = [1, 1]} : vector<8x128xf32> to vector<8x32xf32>
    %184 = math.tanh %183 : vector<8x32xf32>
    %185 = vector.extract_strided_slice %168 {offsets = [0, 96], sizes = [8, 32], strides = [1, 1]} : vector<8x128xf32> to vector<8x32xf32>
    %cst_64 = arith.constant 0.000000e+00 : f32
    %186 = vector.broadcast %cst_64 : f32 to vector<8x32xf32>
    %187 = arith.subf %186, %185 : vector<8x32xf32>
    %188 = math.exp %187 : vector<8x32xf32>
    %cst_65 = arith.constant 1.000000e+00 : f32
    %189 = vector.broadcast %cst_65 : f32 to vector<8x32xf32>
    %190 = arith.addf %189, %188 : vector<8x32xf32>
    %191 = tpu.reciprocal %190 {approx = true} : vector<8x32xf32> -> vector<8x32xf32>
    %192 = arith.mulf %182, %108 : vector<8x32xf32>
    %193 = arith.mulf %175, %184 : vector<8x32xf32>
    %194 = arith.addf %192, %193 : vector<8x32xf32>
    %195 = math.tanh %194 : vector<8x32xf32>
    %196 = arith.mulf %191, %195 : vector<8x32xf32>
    %197 = vector.broadcast %164 : vector<8x1xf32> to vector<8x32xf32>
    %198 = arith.mulf %197, %196 : vector<8x32xf32>
    %cst_66 = arith.constant 1.000000e+00 : f32
    %199 = vector.broadcast %cst_66 : f32 to vector<8x1xf32>
    %200 = arith.subf %199, %164 : vector<8x1xf32>
    %201 = vector.broadcast %200 : vector<8x1xf32> to vector<8x32xf32>
    %202 = arith.mulf %201, %101 : vector<8x32xf32>
    %203 = arith.addf %198, %202 : vector<8x32xf32>
    %204 = vector.broadcast %164 : vector<8x1xf32> to vector<8x32xf32>
    %205 = arith.mulf %204, %194 : vector<8x32xf32>
    %cst_67 = arith.constant 1.000000e+00 : f32
    %206 = vector.broadcast %cst_67 : f32 to vector<8x1xf32>
    %207 = arith.subf %206, %164 : vector<8x1xf32>
    %208 = vector.broadcast %207 : vector<8x1xf32> to vector<8x32xf32>
    %209 = arith.mulf %208, %108 : vector<8x32xf32>
    %210 = arith.addf %205, %209 : vector<8x32xf32>
    %211 = vector.broadcast %164 : vector<8x1xf32> to vector<8x32xf32>
    %212 = arith.mulf %203, %211 : vector<8x32xf32>
    %c56_68 = arith.constant 56 : index
    %c0_69 = arith.constant 0 : index
    %213 = vector.load %arg14[%c56_68, %c0_69] : memref<72x32xf32, #tpu.memory_space<vmem>>, vector<8x32xf32>
    tpu.vector_store %arg14[%c56_68, %c0_69], %212 {strides = array<i32>} : memref<72x32xf32, #tpu.memory_space<vmem>>, vector<8x32xf32>,
    %c2 = arith.constant 2 : index
    %c0_70 = arith.constant 0 : index
    %c0_71 = arith.constant 0 : index
    %214 = vector.load %arg1[%c2, %c0_70, %c0_71] : memref<9x8x1xf32, #tpu.memory_space<vmem>>, vector<1x8x1xf32>
    %215 = vector.shape_cast %214 : vector<1x8x1xf32> to vector<8x1xf32>
    %c16 = arith.constant 16 : index
    %c0_72 = arith.constant 0 : index
    %216 = vector.load %arg12[%c16, %c0_72] : memref<72x256xf32, #tpu.memory_space<vmem>>, vector<8x128xf32>
    %217 = arith.truncf %152 : vector<8x32xf32> to vector<8x32xbf16>
    %cst_73 = arith.constant dense<0.000000e+00> : vector<8x128xf32>
    %218 = tpu.matmul %217, %7, %cst_73 {dimension_numbers = #tpu.dot_dimension_numbers<[1], [0], [0], [1], [0, 0, 1, 1], [], []>} : vector<8x32xbf16>, vector<32x128xbf16>, vector<8x128xf32> -> vector<8x128xf32>
    %219 = arith.addf %216, %218 : vector<8x128xf32>
    %220 = vector.extract_strided_slice %219 {offsets = [0, 0], sizes = [8, 32], strides = [1, 1]} : vector<8x128xf32> to vector<8x32xf32>
    %cst_74 = arith.constant 0.000000e+00 : f32
    %221 = vector.broadcast %cst_74 : f32 to vector<8x32xf32>
    %222 = arith.subf %221, %220 : vector<8x32xf32>
    %223 = math.exp %222 : vector<8x32xf32>
    %cst_75 = arith.constant 1.000000e+00 : f32
    %224 = vector.broadcast %cst_75 : f32 to vector<8x32xf32>
    %225 = arith.addf %224, %223 : vector<8x32xf32>
    %226 = tpu.reciprocal %225 {approx = true} : vector<8x32xf32> -> vector<8x32xf32>
    %227 = vector.extract_strided_slice %219 {offsets = [0, 32], sizes = [8, 32], strides = [1, 1]} : vector<8x128xf32> to vector<8x32xf32>
    %cst_76 = arith.constant 0.000000e+00 : f32
    %228 = vector.broadcast %cst_76 : f32 to vector<8x32xf32>
    %229 = arith.subf %228, %227 : vector<8x32xf32>
    %230 = math.exp %229 : vector<8x32xf32>
    %cst_77 = arith.constant 1.000000e+00 : f32
    %231 = vector.broadcast %cst_77 : f32 to vector<8x32xf32>
    %232 = arith.addf %231, %230 : vector<8x32xf32>
    %233 = tpu.reciprocal %232 {approx = true} : vector<8x32xf32> -> vector<8x32xf32>
    %234 = vector.extract_strided_slice %219 {offsets = [0, 64], sizes = [8, 32], strides = [1, 1]} : vector<8x128xf32> to vector<8x32xf32>
    %235 = math.tanh %234 : vector<8x32xf32>
    %236 = vector.extract_strided_slice %219 {offsets = [0, 96], sizes = [8, 32], strides = [1, 1]} : vector<8x128xf32> to vector<8x32xf32>
    %cst_78 = arith.constant 0.000000e+00 : f32
    %237 = vector.broadcast %cst_78 : f32 to vector<8x32xf32>
    %238 = arith.subf %237, %236 : vector<8x32xf32>
    %239 = math.exp %238 : vector<8x32xf32>
    %cst_79 = arith.constant 1.000000e+00 : f32
    %240 = vector.broadcast %cst_79 : f32 to vector<8x32xf32>
    %241 = arith.addf %240, %239 : vector<8x32xf32>
    %242 = tpu.reciprocal %241 {approx = true} : vector<8x32xf32> -> vector<8x32xf32>
    %243 = arith.mulf %233, %159 : vector<8x32xf32>
    %244 = arith.mulf %226, %235 : vector<8x32xf32>
    %245 = arith.addf %243, %244 : vector<8x32xf32>
    %246 = math.tanh %245 : vector<8x32xf32>
    %247 = arith.mulf %242, %246 : vector<8x32xf32>
    %248 = vector.broadcast %215 : vector<8x1xf32> to vector<8x32xf32>
    %249 = arith.mulf %248, %247 : vector<8x32xf32>
    %cst_80 = arith.constant 1.000000e+00 : f32
    %250 = vector.broadcast %cst_80 : f32 to vector<8x1xf32>
    %251 = arith.subf %250, %215 : vector<8x1xf32>
    %252 = vector.broadcast %251 : vector<8x1xf32> to vector<8x32xf32>
    %253 = arith.mulf %252, %152 : vector<8x32xf32>
    %254 = arith.addf %249, %253 : vector<8x32xf32>
    %255 = vector.broadcast %215 : vector<8x1xf32> to vector<8x32xf32>
    %256 = arith.mulf %255, %245 : vector<8x32xf32>
    %cst_81 = arith.constant 1.000000e+00 : f32
    %257 = vector.broadcast %cst_81 : f32 to vector<8x1xf32>
    %258 = arith.subf %257, %215 : vector<8x1xf32>
    %259 = vector.broadcast %258 : vector<8x1xf32> to vector<8x32xf32>
    %260 = arith.mulf %259, %159 : vector<8x32xf32>
    %261 = arith.addf %256, %260 : vector<8x32xf32>
    %262 = vector.broadcast %215 : vector<8x1xf32> to vector<8x32xf32>
    %263 = arith.mulf %254, %262 : vector<8x32xf32>
    %c16_82 = arith.constant 16 : index
    %c0_83 = arith.constant 0 : index
    %264 = vector.load %arg13[%c16_82, %c0_83] : memref<72x32xf32, #tpu.memory_space<vmem>>, vector<8x32xf32>
    tpu.vector_store %arg13[%c16_82, %c0_83], %263 {strides = array<i32>} : memref<72x32xf32, #tpu.memory_space<vmem>>, vector<8x32xf32>,
    %c6 = arith.constant 6 : index
    %c0_84 = arith.constant 0 : index
    %c0_85 = arith.constant 0 : index
    %265 = vector.load %arg1[%c6, %c0_84, %c0_85] : memref<9x8x1xf32, #tpu.memory_space<vmem>>, vector<1x8x1xf32>
    %266 = vector.shape_cast %265 : vector<1x8x1xf32> to vector<8x1xf32>
    %c48 = arith.constant 48 : index
    %c128_86 = arith.constant 128 : index
    %267 = vector.load %arg12[%c48, %c128_86] : memref<72x256xf32, #tpu.memory_space<vmem>>, vector<8x128xf32>
    %268 = arith.truncf %203 : vector<8x32xf32> to vector<8x32xbf16>
    %cst_87 = arith.constant dense<0.000000e+00> : vector<8x128xf32>
    %269 = tpu.matmul %268, %8, %cst_87 {dimension_numbers = #tpu.dot_dimension_numbers<[1], [0], [0], [1], [0, 0, 1, 1], [], []>} : vector<8x32xbf16>, vector<32x128xbf16>, vector<8x128xf32> -> vector<8x128xf32>
    %270 = arith.addf %267, %269 : vector<8x128xf32>
    %271 = vector.extract_strided_slice %270 {offsets = [0, 0], sizes = [8, 32], strides = [1, 1]} : vector<8x128xf32> to vector<8x32xf32>
    %cst_88 = arith.constant 0.000000e+00 : f32
    %272 = vector.broadcast %cst_88 : f32 to vector<8x32xf32>
    %273 = arith.subf %272, %271 : vector<8x32xf32>
    %274 = math.exp %273 : vector<8x32xf32>
    %cst_89 = arith.constant 1.000000e+00 : f32
    %275 = vector.broadcast %cst_89 : f32 to vector<8x32xf32>
    %276 = arith.addf %275, %274 : vector<8x32xf32>
    %277 = tpu.reciprocal %276 {approx = true} : vector<8x32xf32> -> vector<8x32xf32>
    %278 = vector.extract_strided_slice %270 {offsets = [0, 32], sizes = [8, 32], strides = [1, 1]} : vector<8x128xf32> to vector<8x32xf32>
    %cst_90 = arith.constant 0.000000e+00 : f32
    %279 = vector.broadcast %cst_90 : f32 to vector<8x32xf32>
    %280 = arith.subf %279, %278 : vector<8x32xf32>
    %281 = math.exp %280 : vector<8x32xf32>
    %cst_91 = arith.constant 1.000000e+00 : f32
    %282 = vector.broadcast %cst_91 : f32 to vector<8x32xf32>
    %283 = arith.addf %282, %281 : vector<8x32xf32>
    %284 = tpu.reciprocal %283 {approx = true} : vector<8x32xf32> -> vector<8x32xf32>
    %285 = vector.extract_strided_slice %270 {offsets = [0, 64], sizes = [8, 32], strides = [1, 1]} : vector<8x128xf32> to vector<8x32xf32>
    %286 = math.tanh %285 : vector<8x32xf32>
    %287 = vector.extract_strided_slice %270 {offsets = [0, 96], sizes = [8, 32], strides = [1, 1]} : vector<8x128xf32> to vector<8x32xf32>
    %cst_92 = arith.constant 0.000000e+00 : f32
    %288 = vector.broadcast %cst_92 : f32 to vector<8x32xf32>
    %289 = arith.subf %288, %287 : vector<8x32xf32>
    %290 = math.exp %289 : vector<8x32xf32>
    %cst_93 = arith.constant 1.000000e+00 : f32
    %291 = vector.broadcast %cst_93 : f32 to vector<8x32xf32>
    %292 = arith.addf %291, %290 : vector<8x32xf32>
    %293 = tpu.reciprocal %292 {approx = true} : vector<8x32xf32> -> vector<8x32xf32>
    %294 = arith.mulf %284, %210 : vector<8x32xf32>
    %295 = arith.mulf %277, %286 : vector<8x32xf32>
    %296 = arith.addf %294, %295 : vector<8x32xf32>
    %297 = math.tanh %296 : vector<8x32xf32>
    %298 = arith.mulf %293, %297 : vector<8x32xf32>
    %299 = vector.broadcast %266 : vector<8x1xf32> to vector<8x32xf32>
    %300 = arith.mulf %299, %298 : vector<8x32xf32>
    %cst_94 = arith.constant 1.000000e+00 : f32
    %301 = vector.broadcast %cst_94 : f32 to vector<8x1xf32>
    %302 = arith.subf %301, %266 : vector<8x1xf32>
    %303 = vector.broadcast %302 : vector<8x1xf32> to vector<8x32xf32>
    %304 = arith.mulf %303, %203 : vector<8x32xf32>
    %305 = arith.addf %300, %304 : vector<8x32xf32>
    %306 = vector.broadcast %266 : vector<8x1xf32> to vector<8x32xf32>
    %307 = arith.mulf %306, %296 : vector<8x32xf32>
    %cst_95 = arith.constant 1.000000e+00 : f32
    %308 = vector.broadcast %cst_95 : f32 to vector<8x1xf32>
    %309 = arith.subf %308, %266 : vector<8x1xf32>
    %310 = vector.broadcast %309 : vector<8x1xf32> to vector<8x32xf32>
    %311 = arith.mulf %310, %210 : vector<8x32xf32>
    %312 = arith.addf %307, %311 : vector<8x32xf32>
    %313 = vector.broadcast %266 : vector<8x1xf32> to vector<8x32xf32>
    %314 = arith.mulf %305, %313 : vector<8x32xf32>
    %c48_96 = arith.constant 48 : index
    %c0_97 = arith.constant 0 : index
    %315 = vector.load %arg14[%c48_96, %c0_97] : memref<72x32xf32, #tpu.memory_space<vmem>>, vector<8x32xf32>
    tpu.vector_store %arg14[%c48_96, %c0_97], %314 {strides = array<i32>} : memref<72x32xf32, #tpu.memory_space<vmem>>, vector<8x32xf32>,
    %c3 = arith.constant 3 : index
    %c0_98 = arith.constant 0 : index
    %c0_99 = arith.constant 0 : index
    %316 = vector.load %arg1[%c3, %c0_98, %c0_99] : memref<9x8x1xf32, #tpu.memory_space<vmem>>, vector<1x8x1xf32>
    %317 = vector.shape_cast %316 : vector<1x8x1xf32> to vector<8x1xf32>
    %c24 = arith.constant 24 : index
    %c0_100 = arith.constant 0 : index
    %318 = vector.load %arg12[%c24, %c0_100] : memref<72x256xf32, #tpu.memory_space<vmem>>, vector<8x128xf32>
    %319 = arith.truncf %254 : vector<8x32xf32> to vector<8x32xbf16>
    %cst_101 = arith.constant dense<0.000000e+00> : vector<8x128xf32>
    %320 = tpu.matmul %319, %7, %cst_101 {dimension_numbers = #tpu.dot_dimension_numbers<[1], [0], [0], [1], [0, 0, 1, 1], [], []>} : vector<8x32xbf16>, vector<32x128xbf16>, vector<8x128xf32> -> vector<8x128xf32>
    %321 = arith.addf %318, %320 : vector<8x128xf32>
    %322 = vector.extract_strided_slice %321 {offsets = [0, 0], sizes = [8, 32], strides = [1, 1]} : vector<8x128xf32> to vector<8x32xf32>
    %cst_102 = arith.constant 0.000000e+00 : f32
    %323 = vector.broadcast %cst_102 : f32 to vector<8x32xf32>
    %324 = arith.subf %323, %322 : vector<8x32xf32>
    %325 = math.exp %324 : vector<8x32xf32>
    %cst_103 = arith.constant 1.000000e+00 : f32
    %326 = vector.broadcast %cst_103 : f32 to vector<8x32xf32>
    %327 = arith.addf %326, %325 : vector<8x32xf32>
    %328 = tpu.reciprocal %327 {approx = true} : vector<8x32xf32> -> vector<8x32xf32>
    %329 = vector.extract_strided_slice %321 {offsets = [0, 32], sizes = [8, 32], strides = [1, 1]} : vector<8x128xf32> to vector<8x32xf32>
    %cst_104 = arith.constant 0.000000e+00 : f32
    %330 = vector.broadcast %cst_104 : f32 to vector<8x32xf32>
    %331 = arith.subf %330, %329 : vector<8x32xf32>
    %332 = math.exp %331 : vector<8x32xf32>
    %cst_105 = arith.constant 1.000000e+00 : f32
    %333 = vector.broadcast %cst_105 : f32 to vector<8x32xf32>
    %334 = arith.addf %333, %332 : vector<8x32xf32>
    %335 = tpu.reciprocal %334 {approx = true} : vector<8x32xf32> -> vector<8x32xf32>
    %336 = vector.extract_strided_slice %321 {offsets = [0, 64], sizes = [8, 32], strides = [1, 1]} : vector<8x128xf32> to vector<8x32xf32>
    %337 = math.tanh %336 : vector<8x32xf32>
    %338 = vector.extract_strided_slice %321 {offsets = [0, 96], sizes = [8, 32], strides = [1, 1]} : vector<8x128xf32> to vector<8x32xf32>
    %cst_106 = arith.constant 0.000000e+00 : f32
    %339 = vector.broadcast %cst_106 : f32 to vector<8x32xf32>
    %340 = arith.subf %339, %338 : vector<8x32xf32>
    %341 = math.exp %340 : vector<8x32xf32>
    %cst_107 = arith.constant 1.000000e+00 : f32
    %342 = vector.broadcast %cst_107 : f32 to vector<8x32xf32>
    %343 = arith.addf %342, %341 : vector<8x32xf32>
    %344 = tpu.reciprocal %343 {approx = true} : vector<8x32xf32> -> vector<8x32xf32>
    %345 = arith.mulf %335, %261 : vector<8x32xf32>
    %346 = arith.mulf %328, %337 : vector<8x32xf32>
    %347 = arith.addf %345, %346 : vector<8x32xf32>
    %348 = math.tanh %347 : vector<8x32xf32>
    %349 = arith.mulf %344, %348 : vector<8x32xf32>
    %350 = vector.broadcast %317 : vector<8x1xf32> to vector<8x32xf32>
    %351 = arith.mulf %350, %349 : vector<8x32xf32>
    %cst_108 = arith.constant 1.000000e+00 : f32
    %352 = vector.broadcast %cst_108 : f32 to vector<8x1xf32>
    %353 = arith.subf %352, %317 : vector<8x1xf32>
    %354 = vector.broadcast %353 : vector<8x1xf32> to vector<8x32xf32>
    %355 = arith.mulf %354, %254 : vector<8x32xf32>
    %356 = arith.addf %351, %355 : vector<8x32xf32>
    %357 = vector.broadcast %317 : vector<8x1xf32> to vector<8x32xf32>
    %358 = arith.mulf %357, %347 : vector<8x32xf32>
    %cst_109 = arith.constant 1.000000e+00 : f32
    %359 = vector.broadcast %cst_109 : f32 to vector<8x1xf32>
    %360 = arith.subf %359, %317 : vector<8x1xf32>
    %361 = vector.broadcast %360 : vector<8x1xf32> to vector<8x32xf32>
    %362 = arith.mulf %361, %261 : vector<8x32xf32>
    %363 = arith.addf %358, %362 : vector<8x32xf32>
    %364 = vector.broadcast %317 : vector<8x1xf32> to vector<8x32xf32>
    %365 = arith.mulf %356, %364 : vector<8x32xf32>
    %c24_110 = arith.constant 24 : index
    %c0_111 = arith.constant 0 : index
    %366 = vector.load %arg13[%c24_110, %c0_111] : memref<72x32xf32, #tpu.memory_space<vmem>>, vector<8x32xf32>
    tpu.vector_store %arg13[%c24_110, %c0_111], %365 {strides = array<i32>} : memref<72x32xf32, #tpu.memory_space<vmem>>, vector<8x32xf32>,
    %c5 = arith.constant 5 : index
    %c0_112 = arith.constant 0 : index
    %c0_113 = arith.constant 0 : index
    %367 = vector.load %arg1[%c5, %c0_112, %c0_113] : memref<9x8x1xf32, #tpu.memory_space<vmem>>, vector<1x8x1xf32>
    %368 = vector.shape_cast %367 : vector<1x8x1xf32> to vector<8x1xf32>
    %c40 = arith.constant 40 : index
    %c128_114 = arith.constant 128 : index
    %369 = vector.load %arg12[%c40, %c128_114] : memref<72x256xf32, #tpu.memory_space<vmem>>, vector<8x128xf32>
    %370 = arith.truncf %305 : vector<8x32xf32> to vector<8x32xbf16>
    %cst_115 = arith.constant dense<0.000000e+00> : vector<8x128xf32>
    %371 = tpu.matmul %370, %8, %cst_115 {dimension_numbers = #tpu.dot_dimension_numbers<[1], [0], [0], [1], [0, 0, 1, 1], [], []>} : vector<8x32xbf16>, vector<32x128xbf16>, vector<8x128xf32> -> vector<8x128xf32>
    %372 = arith.addf %369, %371 : vector<8x128xf32>
    %373 = vector.extract_strided_slice %372 {offsets = [0, 0], sizes = [8, 32], strides = [1, 1]} : vector<8x128xf32> to vector<8x32xf32>
    %cst_116 = arith.constant 0.000000e+00 : f32
    %374 = vector.broadcast %cst_116 : f32 to vector<8x32xf32>
    %375 = arith.subf %374, %373 : vector<8x32xf32>
    %376 = math.exp %375 : vector<8x32xf32>
    %cst_117 = arith.constant 1.000000e+00 : f32
    %377 = vector.broadcast %cst_117 : f32 to vector<8x32xf32>
    %378 = arith.addf %377, %376 : vector<8x32xf32>
    %379 = tpu.reciprocal %378 {approx = true} : vector<8x32xf32> -> vector<8x32xf32>
    %380 = vector.extract_strided_slice %372 {offsets = [0, 32], sizes = [8, 32], strides = [1, 1]} : vector<8x128xf32> to vector<8x32xf32>
    %cst_118 = arith.constant 0.000000e+00 : f32
    %381 = vector.broadcast %cst_118 : f32 to vector<8x32xf32>
    %382 = arith.subf %381, %380 : vector<8x32xf32>
    %383 = math.exp %382 : vector<8x32xf32>
    %cst_119 = arith.constant 1.000000e+00 : f32
    %384 = vector.broadcast %cst_119 : f32 to vector<8x32xf32>
    %385 = arith.addf %384, %383 : vector<8x32xf32>
    %386 = tpu.reciprocal %385 {approx = true} : vector<8x32xf32> -> vector<8x32xf32>
    %387 = vector.extract_strided_slice %372 {offsets = [0, 64], sizes = [8, 32], strides = [1, 1]} : vector<8x128xf32> to vector<8x32xf32>
    %388 = math.tanh %387 : vector<8x32xf32>
    %389 = vector.extract_strided_slice %372 {offsets = [0, 96], sizes = [8, 32], strides = [1, 1]} : vector<8x128xf32> to vector<8x32xf32>
    %cst_120 = arith.constant 0.000000e+00 : f32
    %390 = vector.broadcast %cst_120 : f32 to vector<8x32xf32>
    %391 = arith.subf %390, %389 : vector<8x32xf32>
    %392 = math.exp %391 : vector<8x32xf32>
    %cst_121 = arith.constant 1.000000e+00 : f32
    %393 = vector.broadcast %cst_121 : f32 to vector<8x32xf32>
    %394 = arith.addf %393, %392 : vector<8x32xf32>
    %395 = tpu.reciprocal %394 {approx = true} : vector<8x32xf32> -> vector<8x32xf32>
    %396 = arith.mulf %386, %312 : vector<8x32xf32>
    %397 = arith.mulf %379, %388 : vector<8x32xf32>
    %398 = arith.addf %396, %397 : vector<8x32xf32>
    %399 = math.tanh %398 : vector<8x32xf32>
    %400 = arith.mulf %395, %399 : vector<8x32xf32>
    %401 = vector.broadcast %368 : vector<8x1xf32> to vector<8x32xf32>
    %402 = arith.mulf %401, %400 : vector<8x32xf32>
    %cst_122 = arith.constant 1.000000e+00 : f32
    %403 = vector.broadcast %cst_122 : f32 to vector<8x1xf32>
    %404 = arith.subf %403, %368 : vector<8x1xf32>
    %405 = vector.broadcast %404 : vector<8x1xf32> to vector<8x32xf32>
    %406 = arith.mulf %405, %305 : vector<8x32xf32>
    %407 = arith.addf %402, %406 : vector<8x32xf32>
    %408 = vector.broadcast %368 : vector<8x1xf32> to vector<8x32xf32>
    %409 = arith.mulf %408, %398 : vector<8x32xf32>
    %cst_123 = arith.constant 1.000000e+00 : f32
    %410 = vector.broadcast %cst_123 : f32 to vector<8x1xf32>
    %411 = arith.subf %410, %368 : vector<8x1xf32>
    %412 = vector.broadcast %411 : vector<8x1xf32> to vector<8x32xf32>
    %413 = arith.mulf %412, %312 : vector<8x32xf32>
    %414 = arith.addf %409, %413 : vector<8x32xf32>
    %415 = vector.broadcast %368 : vector<8x1xf32> to vector<8x32xf32>
    %416 = arith.mulf %407, %415 : vector<8x32xf32>
    %c40_124 = arith.constant 40 : index
    %c0_125 = arith.constant 0 : index
    %417 = vector.load %arg14[%c40_124, %c0_125] : memref<72x32xf32, #tpu.memory_space<vmem>>, vector<8x32xf32>
    tpu.vector_store %arg14[%c40_124, %c0_125], %416 {strides = array<i32>} : memref<72x32xf32, #tpu.memory_space<vmem>>, vector<8x32xf32>,
    %c4 = arith.constant 4 : index
    %c0_126 = arith.constant 0 : index
    %c0_127 = arith.constant 0 : index
    %418 = vector.load %arg1[%c4, %c0_126, %c0_127] : memref<9x8x1xf32, #tpu.memory_space<vmem>>, vector<1x8x1xf32>
    %419 = vector.shape_cast %418 : vector<1x8x1xf32> to vector<8x1xf32>
    %c32 = arith.constant 32 : index
    %c0_128 = arith.constant 0 : index
    %420 = vector.load %arg12[%c32, %c0_128] : memref<72x256xf32, #tpu.memory_space<vmem>>, vector<8x128xf32>
    %421 = arith.truncf %356 : vector<8x32xf32> to vector<8x32xbf16>
    %cst_129 = arith.constant dense<0.000000e+00> : vector<8x128xf32>
    %422 = tpu.matmul %421, %7, %cst_129 {dimension_numbers = #tpu.dot_dimension_numbers<[1], [0], [0], [1], [0, 0, 1, 1], [], []>} : vector<8x32xbf16>, vector<32x128xbf16>, vector<8x128xf32> -> vector<8x128xf32>
    %423 = arith.addf %420, %422 : vector<8x128xf32>
    %424 = vector.extract_strided_slice %423 {offsets = [0, 0], sizes = [8, 32], strides = [1, 1]} : vector<8x128xf32> to vector<8x32xf32>
    %cst_130 = arith.constant 0.000000e+00 : f32
    %425 = vector.broadcast %cst_130 : f32 to vector<8x32xf32>
    %426 = arith.subf %425, %424 : vector<8x32xf32>
    %427 = math.exp %426 : vector<8x32xf32>
    %cst_131 = arith.constant 1.000000e+00 : f32
    %428 = vector.broadcast %cst_131 : f32 to vector<8x32xf32>
    %429 = arith.addf %428, %427 : vector<8x32xf32>
    %430 = tpu.reciprocal %429 {approx = true} : vector<8x32xf32> -> vector<8x32xf32>
    %431 = vector.extract_strided_slice %423 {offsets = [0, 32], sizes = [8, 32], strides = [1, 1]} : vector<8x128xf32> to vector<8x32xf32>
    %cst_132 = arith.constant 0.000000e+00 : f32
    %432 = vector.broadcast %cst_132 : f32 to vector<8x32xf32>
    %433 = arith.subf %432, %431 : vector<8x32xf32>
    %434 = math.exp %433 : vector<8x32xf32>
    %cst_133 = arith.constant 1.000000e+00 : f32
    %435 = vector.broadcast %cst_133 : f32 to vector<8x32xf32>
    %436 = arith.addf %435, %434 : vector<8x32xf32>
    %437 = tpu.reciprocal %436 {approx = true} : vector<8x32xf32> -> vector<8x32xf32>
    %438 = vector.extract_strided_slice %423 {offsets = [0, 64], sizes = [8, 32], strides = [1, 1]} : vector<8x128xf32> to vector<8x32xf32>
    %439 = math.tanh %438 : vector<8x32xf32>
    %440 = vector.extract_strided_slice %423 {offsets = [0, 96], sizes = [8, 32], strides = [1, 1]} : vector<8x128xf32> to vector<8x32xf32>
    %cst_134 = arith.constant 0.000000e+00 : f32
    %441 = vector.broadcast %cst_134 : f32 to vector<8x32xf32>
    %442 = arith.subf %441, %440 : vector<8x32xf32>
    %443 = math.exp %442 : vector<8x32xf32>
    %cst_135 = arith.constant 1.000000e+00 : f32
    %444 = vector.broadcast %cst_135 : f32 to vector<8x32xf32>
    %445 = arith.addf %444, %443 : vector<8x32xf32>
    %446 = tpu.reciprocal %445 {approx = true} : vector<8x32xf32> -> vector<8x32xf32>
    %447 = arith.mulf %437, %363 : vector<8x32xf32>
    %448 = arith.mulf %430, %439 : vector<8x32xf32>
    %449 = arith.addf %447, %448 : vector<8x32xf32>
    %450 = math.tanh %449 : vector<8x32xf32>
    %451 = arith.mulf %446, %450 : vector<8x32xf32>
    %452 = vector.broadcast %419 : vector<8x1xf32> to vector<8x32xf32>
    %453 = arith.mulf %452, %451 : vector<8x32xf32>
    %cst_136 = arith.constant 1.000000e+00 : f32
    %454 = vector.broadcast %cst_136 : f32 to vector<8x1xf32>
    %455 = arith.subf %454, %419 : vector<8x1xf32>
    %456 = vector.broadcast %455 : vector<8x1xf32> to vector<8x32xf32>
    %457 = arith.mulf %456, %356 : vector<8x32xf32>
    %458 = arith.addf %453, %457 : vector<8x32xf32>
    %459 = vector.broadcast %419 : vector<8x1xf32> to vector<8x32xf32>
    %460 = arith.mulf %459, %449 : vector<8x32xf32>
    %cst_137 = arith.constant 1.000000e+00 : f32
    %461 = vector.broadcast %cst_137 : f32 to vector<8x1xf32>
    %462 = arith.subf %461, %419 : vector<8x1xf32>
    %463 = vector.broadcast %462 : vector<8x1xf32> to vector<8x32xf32>
    %464 = arith.mulf %463, %363 : vector<8x32xf32>
    %465 = arith.addf %460, %464 : vector<8x32xf32>
    %466 = vector.broadcast %419 : vector<8x1xf32> to vector<8x32xf32>
    %467 = arith.mulf %458, %466 : vector<8x32xf32>
    %c32_138 = arith.constant 32 : index
    %c0_139 = arith.constant 0 : index
    %468 = vector.load %arg13[%c32_138, %c0_139] : memref<72x32xf32, #tpu.memory_space<vmem>>, vector<8x32xf32>
    tpu.vector_store %arg13[%c32_138, %c0_139], %467 {strides = array<i32>} : memref<72x32xf32, #tpu.memory_space<vmem>>, vector<8x32xf32>,
    %c4_140 = arith.constant 4 : index
    %c0_141 = arith.constant 0 : index
    %c0_142 = arith.constant 0 : index
    %469 = vector.load %arg1[%c4_140, %c0_141, %c0_142] : memref<9x8x1xf32, #tpu.memory_space<vmem>>, vector<1x8x1xf32>
    %470 = vector.shape_cast %469 : vector<1x8x1xf32> to vector<8x1xf32>
    %c32_143 = arith.constant 32 : index
    %c128_144 = arith.constant 128 : index
    %471 = vector.load %arg12[%c32_143, %c128_144] : memref<72x256xf32, #tpu.memory_space<vmem>>, vector<8x128xf32>
    %472 = arith.truncf %407 : vector<8x32xf32> to vector<8x32xbf16>
    %cst_145 = arith.constant dense<0.000000e+00> : vector<8x128xf32>
    %473 = tpu.matmul %472, %8, %cst_145 {dimension_numbers = #tpu.dot_dimension_numbers<[1], [0], [0], [1], [0, 0, 1, 1], [], []>} : vector<8x32xbf16>, vector<32x128xbf16>, vector<8x128xf32> -> vector<8x128xf32>
    %474 = arith.addf %471, %473 : vector<8x128xf32>
    %475 = vector.extract_strided_slice %474 {offsets = [0, 0], sizes = [8, 32], strides = [1, 1]} : vector<8x128xf32> to vector<8x32xf32>
    %cst_146 = arith.constant 0.000000e+00 : f32
    %476 = vector.broadcast %cst_146 : f32 to vector<8x32xf32>
    %477 = arith.subf %476, %475 : vector<8x32xf32>
    %478 = math.exp %477 : vector<8x32xf32>
    %cst_147 = arith.constant 1.000000e+00 : f32
    %479 = vector.broadcast %cst_147 : f32 to vector<8x32xf32>
    %480 = arith.addf %479, %478 : vector<8x32xf32>
    %481 = tpu.reciprocal %480 {approx = true} : vector<8x32xf32> -> vector<8x32xf32>
    %482 = vector.extract_strided_slice %474 {offsets = [0, 32], sizes = [8, 32], strides = [1, 1]} : vector<8x128xf32> to vector<8x32xf32>
    %cst_148 = arith.constant 0.000000e+00 : f32
    %483 = vector.broadcast %cst_148 : f32 to vector<8x32xf32>
    %484 = arith.subf %483, %482 : vector<8x32xf32>
    %485 = math.exp %484 : vector<8x32xf32>
    %cst_149 = arith.constant 1.000000e+00 : f32
    %486 = vector.broadcast %cst_149 : f32 to vector<8x32xf32>
    %487 = arith.addf %486, %485 : vector<8x32xf32>
    %488 = tpu.reciprocal %487 {approx = true} : vector<8x32xf32> -> vector<8x32xf32>
    %489 = vector.extract_strided_slice %474 {offsets = [0, 64], sizes = [8, 32], strides = [1, 1]} : vector<8x128xf32> to vector<8x32xf32>
    %490 = math.tanh %489 : vector<8x32xf32>
    %491 = vector.extract_strided_slice %474 {offsets = [0, 96], sizes = [8, 32], strides = [1, 1]} : vector<8x128xf32> to vector<8x32xf32>
    %cst_150 = arith.constant 0.000000e+00 : f32
    %492 = vector.broadcast %cst_150 : f32 to vector<8x32xf32>
    %493 = arith.subf %492, %491 : vector<8x32xf32>
    %494 = math.exp %493 : vector<8x32xf32>
    %cst_151 = arith.constant 1.000000e+00 : f32
    %495 = vector.broadcast %cst_151 : f32 to vector<8x32xf32>
    %496 = arith.addf %495, %494 : vector<8x32xf32>
    %497 = tpu.reciprocal %496 {approx = true} : vector<8x32xf32> -> vector<8x32xf32>
    %498 = arith.mulf %488, %414 : vector<8x32xf32>
    %499 = arith.mulf %481, %490 : vector<8x32xf32>
    %500 = arith.addf %498, %499 : vector<8x32xf32>
    %501 = math.tanh %500 : vector<8x32xf32>
    %502 = arith.mulf %497, %501 : vector<8x32xf32>
    %503 = vector.broadcast %470 : vector<8x1xf32> to vector<8x32xf32>
    %504 = arith.mulf %503, %502 : vector<8x32xf32>
    %cst_152 = arith.constant 1.000000e+00 : f32
    %505 = vector.broadcast %cst_152 : f32 to vector<8x1xf32>
    %506 = arith.subf %505, %470 : vector<8x1xf32>
    %507 = vector.broadcast %506 : vector<8x1xf32> to vector<8x32xf32>
    %508 = arith.mulf %507, %407 : vector<8x32xf32>
    %509 = arith.addf %504, %508 : vector<8x32xf32>
    %510 = vector.broadcast %470 : vector<8x1xf32> to vector<8x32xf32>
    %511 = arith.mulf %510, %500 : vector<8x32xf32>
    %cst_153 = arith.constant 1.000000e+00 : f32
    %512 = vector.broadcast %cst_153 : f32 to vector<8x1xf32>
    %513 = arith.subf %512, %470 : vector<8x1xf32>
    %514 = vector.broadcast %513 : vector<8x1xf32> to vector<8x32xf32>
    %515 = arith.mulf %514, %414 : vector<8x32xf32>
    %516 = arith.addf %511, %515 : vector<8x32xf32>
    %517 = vector.broadcast %470 : vector<8x1xf32> to vector<8x32xf32>
    %518 = arith.mulf %509, %517 : vector<8x32xf32>
    %c32_154 = arith.constant 32 : index
    %c0_155 = arith.constant 0 : index
    %519 = vector.load %arg14[%c32_154, %c0_155] : memref<72x32xf32, #tpu.memory_space<vmem>>, vector<8x32xf32>
    tpu.vector_store %arg14[%c32_154, %c0_155], %518 {strides = array<i32>} : memref<72x32xf32, #tpu.memory_space<vmem>>, vector<8x32xf32>,
    %c5_156 = arith.constant 5 : index
    %c0_157 = arith.constant 0 : index
    %c0_158 = arith.constant 0 : index
    %520 = vector.load %arg1[%c5_156, %c0_157, %c0_158] : memref<9x8x1xf32, #tpu.memory_space<vmem>>, vector<1x8x1xf32>
    %521 = vector.shape_cast %520 : vector<1x8x1xf32> to vector<8x1xf32>
    %c40_159 = arith.constant 40 : index
    %c0_160 = arith.constant 0 : index
    %522 = vector.load %arg12[%c40_159, %c0_160] : memref<72x256xf32, #tpu.memory_space<vmem>>, vector<8x128xf32>
    %523 = arith.truncf %458 : vector<8x32xf32> to vector<8x32xbf16>
    %cst_161 = arith.constant dense<0.000000e+00> : vector<8x128xf32>
    %524 = tpu.matmul %523, %7, %cst_161 {dimension_numbers = #tpu.dot_dimension_numbers<[1], [0], [0], [1], [0, 0, 1, 1], [], []>} : vector<8x32xbf16>, vector<32x128xbf16>, vector<8x128xf32> -> vector<8x128xf32>
    %525 = arith.addf %522, %524 : vector<8x128xf32>
    %526 = vector.extract_strided_slice %525 {offsets = [0, 0], sizes = [8, 32], strides = [1, 1]} : vector<8x128xf32> to vector<8x32xf32>
    %cst_162 = arith.constant 0.000000e+00 : f32
    %527 = vector.broadcast %cst_162 : f32 to vector<8x32xf32>
    %528 = arith.subf %527, %526 : vector<8x32xf32>
    %529 = math.exp %528 : vector<8x32xf32>
    %cst_163 = arith.constant 1.000000e+00 : f32
    %530 = vector.broadcast %cst_163 : f32 to vector<8x32xf32>
    %531 = arith.addf %530, %529 : vector<8x32xf32>
    %532 = tpu.reciprocal %531 {approx = true} : vector<8x32xf32> -> vector<8x32xf32>
    %533 = vector.extract_strided_slice %525 {offsets = [0, 32], sizes = [8, 32], strides = [1, 1]} : vector<8x128xf32> to vector<8x32xf32>
    %cst_164 = arith.constant 0.000000e+00 : f32
    %534 = vector.broadcast %cst_164 : f32 to vector<8x32xf32>
    %535 = arith.subf %534, %533 : vector<8x32xf32>
    %536 = math.exp %535 : vector<8x32xf32>
    %cst_165 = arith.constant 1.000000e+00 : f32
    %537 = vector.broadcast %cst_165 : f32 to vector<8x32xf32>
    %538 = arith.addf %537, %536 : vector<8x32xf32>
    %539 = tpu.reciprocal %538 {approx = true} : vector<8x32xf32> -> vector<8x32xf32>
    %540 = vector.extract_strided_slice %525 {offsets = [0, 64], sizes = [8, 32], strides = [1, 1]} : vector<8x128xf32> to vector<8x32xf32>
    %541 = math.tanh %540 : vector<8x32xf32>
    %542 = vector.extract_strided_slice %525 {offsets = [0, 96], sizes = [8, 32], strides = [1, 1]} : vector<8x128xf32> to vector<8x32xf32>
    %cst_166 = arith.constant 0.000000e+00 : f32
    %543 = vector.broadcast %cst_166 : f32 to vector<8x32xf32>
    %544 = arith.subf %543, %542 : vector<8x32xf32>
    %545 = math.exp %544 : vector<8x32xf32>
    %cst_167 = arith.constant 1.000000e+00 : f32
    %546 = vector.broadcast %cst_167 : f32 to vector<8x32xf32>
    %547 = arith.addf %546, %545 : vector<8x32xf32>
    %548 = tpu.reciprocal %547 {approx = true} : vector<8x32xf32> -> vector<8x32xf32>
    %549 = arith.mulf %539, %465 : vector<8x32xf32>
    %550 = arith.mulf %532, %541 : vector<8x32xf32>
    %551 = arith.addf %549, %550 : vector<8x32xf32>
    %552 = math.tanh %551 : vector<8x32xf32>
    %553 = arith.mulf %548, %552 : vector<8x32xf32>
    %554 = vector.broadcast %521 : vector<8x1xf32> to vector<8x32xf32>
    %555 = arith.mulf %554, %553 : vector<8x32xf32>
    %cst_168 = arith.constant 1.000000e+00 : f32
    %556 = vector.broadcast %cst_168 : f32 to vector<8x1xf32>
    %557 = arith.subf %556, %521 : vector<8x1xf32>
    %558 = vector.broadcast %557 : vector<8x1xf32> to vector<8x32xf32>
    %559 = arith.mulf %558, %458 : vector<8x32xf32>
    %560 = arith.addf %555, %559 : vector<8x32xf32>
    %561 = vector.broadcast %521 : vector<8x1xf32> to vector<8x32xf32>
    %562 = arith.mulf %561, %551 : vector<8x32xf32>
    %cst_169 = arith.constant 1.000000e+00 : f32
    %563 = vector.broadcast %cst_169 : f32 to vector<8x1xf32>
    %564 = arith.subf %563, %521 : vector<8x1xf32>
    %565 = vector.broadcast %564 : vector<8x1xf32> to vector<8x32xf32>
    %566 = arith.mulf %565, %465 : vector<8x32xf32>
    %567 = arith.addf %562, %566 : vector<8x32xf32>
    %568 = vector.broadcast %521 : vector<8x1xf32> to vector<8x32xf32>
    %569 = arith.mulf %560, %568 : vector<8x32xf32>
    %c40_170 = arith.constant 40 : index
    %c0_171 = arith.constant 0 : index
    %570 = vector.load %arg13[%c40_170, %c0_171] : memref<72x32xf32, #tpu.memory_space<vmem>>, vector<8x32xf32>
    tpu.vector_store %arg13[%c40_170, %c0_171], %569 {strides = array<i32>} : memref<72x32xf32, #tpu.memory_space<vmem>>, vector<8x32xf32>,
    %c3_172 = arith.constant 3 : index
    %c0_173 = arith.constant 0 : index
    %c0_174 = arith.constant 0 : index
    %571 = vector.load %arg1[%c3_172, %c0_173, %c0_174] : memref<9x8x1xf32, #tpu.memory_space<vmem>>, vector<1x8x1xf32>
    %572 = vector.shape_cast %571 : vector<1x8x1xf32> to vector<8x1xf32>
    %c24_175 = arith.constant 24 : index
    %c128_176 = arith.constant 128 : index
    %573 = vector.load %arg12[%c24_175, %c128_176] : memref<72x256xf32, #tpu.memory_space<vmem>>, vector<8x128xf32>
    %574 = arith.truncf %509 : vector<8x32xf32> to vector<8x32xbf16>
    %cst_177 = arith.constant dense<0.000000e+00> : vector<8x128xf32>
    %575 = tpu.matmul %574, %8, %cst_177 {dimension_numbers = #tpu.dot_dimension_numbers<[1], [0], [0], [1], [0, 0, 1, 1], [], []>} : vector<8x32xbf16>, vector<32x128xbf16>, vector<8x128xf32> -> vector<8x128xf32>
    %576 = arith.addf %573, %575 : vector<8x128xf32>
    %577 = vector.extract_strided_slice %576 {offsets = [0, 0], sizes = [8, 32], strides = [1, 1]} : vector<8x128xf32> to vector<8x32xf32>
    %cst_178 = arith.constant 0.000000e+00 : f32
    %578 = vector.broadcast %cst_178 : f32 to vector<8x32xf32>
    %579 = arith.subf %578, %577 : vector<8x32xf32>
    %580 = math.exp %579 : vector<8x32xf32>
    %cst_179 = arith.constant 1.000000e+00 : f32
    %581 = vector.broadcast %cst_179 : f32 to vector<8x32xf32>
    %582 = arith.addf %581, %580 : vector<8x32xf32>
    %583 = tpu.reciprocal %582 {approx = true} : vector<8x32xf32> -> vector<8x32xf32>
    %584 = vector.extract_strided_slice %576 {offsets = [0, 32], sizes = [8, 32], strides = [1, 1]} : vector<8x128xf32> to vector<8x32xf32>
    %cst_180 = arith.constant 0.000000e+00 : f32
    %585 = vector.broadcast %cst_180 : f32 to vector<8x32xf32>
    %586 = arith.subf %585, %584 : vector<8x32xf32>
    %587 = math.exp %586 : vector<8x32xf32>
    %cst_181 = arith.constant 1.000000e+00 : f32
    %588 = vector.broadcast %cst_181 : f32 to vector<8x32xf32>
    %589 = arith.addf %588, %587 : vector<8x32xf32>
    %590 = tpu.reciprocal %589 {approx = true} : vector<8x32xf32> -> vector<8x32xf32>
    %591 = vector.extract_strided_slice %576 {offsets = [0, 64], sizes = [8, 32], strides = [1, 1]} : vector<8x128xf32> to vector<8x32xf32>
    %592 = math.tanh %591 : vector<8x32xf32>
    %593 = vector.extract_strided_slice %576 {offsets = [0, 96], sizes = [8, 32], strides = [1, 1]} : vector<8x128xf32> to vector<8x32xf32>
    %cst_182 = arith.constant 0.000000e+00 : f32
    %594 = vector.broadcast %cst_182 : f32 to vector<8x32xf32>
    %595 = arith.subf %594, %593 : vector<8x32xf32>
    %596 = math.exp %595 : vector<8x32xf32>
    %cst_183 = arith.constant 1.000000e+00 : f32
    %597 = vector.broadcast %cst_183 : f32 to vector<8x32xf32>
    %598 = arith.addf %597, %596 : vector<8x32xf32>
    %599 = tpu.reciprocal %598 {approx = true} : vector<8x32xf32> -> vector<8x32xf32>
    %600 = arith.mulf %590, %516 : vector<8x32xf32>
    %601 = arith.mulf %583, %592 : vector<8x32xf32>
    %602 = arith.addf %600, %601 : vector<8x32xf32>
    %603 = math.tanh %602 : vector<8x32xf32>
    %604 = arith.mulf %599, %603 : vector<8x32xf32>
    %605 = vector.broadcast %572 : vector<8x1xf32> to vector<8x32xf32>
    %606 = arith.mulf %605, %604 : vector<8x32xf32>
    %cst_184 = arith.constant 1.000000e+00 : f32
    %607 = vector.broadcast %cst_184 : f32 to vector<8x1xf32>
    %608 = arith.subf %607, %572 : vector<8x1xf32>
    %609 = vector.broadcast %608 : vector<8x1xf32> to vector<8x32xf32>
    %610 = arith.mulf %609, %509 : vector<8x32xf32>
    %611 = arith.addf %606, %610 : vector<8x32xf32>
    %612 = vector.broadcast %572 : vector<8x1xf32> to vector<8x32xf32>
    %613 = arith.mulf %612, %602 : vector<8x32xf32>
    %cst_185 = arith.constant 1.000000e+00 : f32
    %614 = vector.broadcast %cst_185 : f32 to vector<8x1xf32>
    %615 = arith.subf %614, %572 : vector<8x1xf32>
    %616 = vector.broadcast %615 : vector<8x1xf32> to vector<8x32xf32>
    %617 = arith.mulf %616, %516 : vector<8x32xf32>
    %618 = arith.addf %613, %617 : vector<8x32xf32>
    %619 = vector.broadcast %572 : vector<8x1xf32> to vector<8x32xf32>
    %620 = arith.mulf %611, %619 : vector<8x32xf32>
    %c24_186 = arith.constant 24 : index
    %c0_187 = arith.constant 0 : index
    %621 = vector.load %arg14[%c24_186, %c0_187] : memref<72x32xf32, #tpu.memory_space<vmem>>, vector<8x32xf32>
    tpu.vector_store %arg14[%c24_186, %c0_187], %620 {strides = array<i32>} : memref<72x32xf32, #tpu.memory_space<vmem>>, vector<8x32xf32>,
    %c6_188 = arith.constant 6 : index
    %c0_189 = arith.constant 0 : index
    %c0_190 = arith.constant 0 : index
    %622 = vector.load %arg1[%c6_188, %c0_189, %c0_190] : memref<9x8x1xf32, #tpu.memory_space<vmem>>, vector<1x8x1xf32>
    %623 = vector.shape_cast %622 : vector<1x8x1xf32> to vector<8x1xf32>
    %c48_191 = arith.constant 48 : index
    %c0_192 = arith.constant 0 : index
    %624 = vector.load %arg12[%c48_191, %c0_192] : memref<72x256xf32, #tpu.memory_space<vmem>>, vector<8x128xf32>
    %625 = arith.truncf %560 : vector<8x32xf32> to vector<8x32xbf16>
    %cst_193 = arith.constant dense<0.000000e+00> : vector<8x128xf32>
    %626 = tpu.matmul %625, %7, %cst_193 {dimension_numbers = #tpu.dot_dimension_numbers<[1], [0], [0], [1], [0, 0, 1, 1], [], []>} : vector<8x32xbf16>, vector<32x128xbf16>, vector<8x128xf32> -> vector<8x128xf32>
    %627 = arith.addf %624, %626 : vector<8x128xf32>
    %628 = vector.extract_strided_slice %627 {offsets = [0, 0], sizes = [8, 32], strides = [1, 1]} : vector<8x128xf32> to vector<8x32xf32>
    %cst_194 = arith.constant 0.000000e+00 : f32
    %629 = vector.broadcast %cst_194 : f32 to vector<8x32xf32>
    %630 = arith.subf %629, %628 : vector<8x32xf32>
    %631 = math.exp %630 : vector<8x32xf32>
    %cst_195 = arith.constant 1.000000e+00 : f32
    %632 = vector.broadcast %cst_195 : f32 to vector<8x32xf32>
    %633 = arith.addf %632, %631 : vector<8x32xf32>
    %634 = tpu.reciprocal %633 {approx = true} : vector<8x32xf32> -> vector<8x32xf32>
    %635 = vector.extract_strided_slice %627 {offsets = [0, 32], sizes = [8, 32], strides = [1, 1]} : vector<8x128xf32> to vector<8x32xf32>
    %cst_196 = arith.constant 0.000000e+00 : f32
    %636 = vector.broadcast %cst_196 : f32 to vector<8x32xf32>
    %637 = arith.subf %636, %635 : vector<8x32xf32>
    %638 = math.exp %637 : vector<8x32xf32>
    %cst_197 = arith.constant 1.000000e+00 : f32
    %639 = vector.broadcast %cst_197 : f32 to vector<8x32xf32>
    %640 = arith.addf %639, %638 : vector<8x32xf32>
    %641 = tpu.reciprocal %640 {approx = true} : vector<8x32xf32> -> vector<8x32xf32>
    %642 = vector.extract_strided_slice %627 {offsets = [0, 64], sizes = [8, 32], strides = [1, 1]} : vector<8x128xf32> to vector<8x32xf32>
    %643 = math.tanh %642 : vector<8x32xf32>
    %644 = vector.extract_strided_slice %627 {offsets = [0, 96], sizes = [8, 32], strides = [1, 1]} : vector<8x128xf32> to vector<8x32xf32>
    %cst_198 = arith.constant 0.000000e+00 : f32
    %645 = vector.broadcast %cst_198 : f32 to vector<8x32xf32>
    %646 = arith.subf %645, %644 : vector<8x32xf32>
    %647 = math.exp %646 : vector<8x32xf32>
    %cst_199 = arith.constant 1.000000e+00 : f32
    %648 = vector.broadcast %cst_199 : f32 to vector<8x32xf32>
    %649 = arith.addf %648, %647 : vector<8x32xf32>
    %650 = tpu.reciprocal %649 {approx = true} : vector<8x32xf32> -> vector<8x32xf32>
    %651 = arith.mulf %641, %567 : vector<8x32xf32>
    %652 = arith.mulf %634, %643 : vector<8x32xf32>
    %653 = arith.addf %651, %652 : vector<8x32xf32>
    %654 = math.tanh %653 : vector<8x32xf32>
    %655 = arith.mulf %650, %654 : vector<8x32xf32>
    %656 = vector.broadcast %623 : vector<8x1xf32> to vector<8x32xf32>
    %657 = arith.mulf %656, %655 : vector<8x32xf32>
    %cst_200 = arith.constant 1.000000e+00 : f32
    %658 = vector.broadcast %cst_200 : f32 to vector<8x1xf32>
    %659 = arith.subf %658, %623 : vector<8x1xf32>
    %660 = vector.broadcast %659 : vector<8x1xf32> to vector<8x32xf32>
    %661 = arith.mulf %660, %560 : vector<8x32xf32>
    %662 = arith.addf %657, %661 : vector<8x32xf32>
    %663 = vector.broadcast %623 : vector<8x1xf32> to vector<8x32xf32>
    %664 = arith.mulf %663, %653 : vector<8x32xf32>
    %cst_201 = arith.constant 1.000000e+00 : f32
    %665 = vector.broadcast %cst_201 : f32 to vector<8x1xf32>
    %666 = arith.subf %665, %623 : vector<8x1xf32>
    %667 = vector.broadcast %666 : vector<8x1xf32> to vector<8x32xf32>
    %668 = arith.mulf %667, %567 : vector<8x32xf32>
    %669 = arith.addf %664, %668 : vector<8x32xf32>
    %670 = vector.broadcast %623 : vector<8x1xf32> to vector<8x32xf32>
    %671 = arith.mulf %662, %670 : vector<8x32xf32>
    %c48_202 = arith.constant 48 : index
    %c0_203 = arith.constant 0 : index
    %672 = vector.load %arg13[%c48_202, %c0_203] : memref<72x32xf32, #tpu.memory_space<vmem>>, vector<8x32xf32>
    tpu.vector_store %arg13[%c48_202, %c0_203], %671 {strides = array<i32>} : memref<72x32xf32, #tpu.memory_space<vmem>>, vector<8x32xf32>,
    %c2_204 = arith.constant 2 : index
    %c0_205 = arith.constant 0 : index
    %c0_206 = arith.constant 0 : index
    %673 = vector.load %arg1[%c2_204, %c0_205, %c0_206] : memref<9x8x1xf32, #tpu.memory_space<vmem>>, vector<1x8x1xf32>
    %674 = vector.shape_cast %673 : vector<1x8x1xf32> to vector<8x1xf32>
    %c16_207 = arith.constant 16 : index
    %c128_208 = arith.constant 128 : index
    %675 = vector.load %arg12[%c16_207, %c128_208] : memref<72x256xf32, #tpu.memory_space<vmem>>, vector<8x128xf32>
    %676 = arith.truncf %611 : vector<8x32xf32> to vector<8x32xbf16>
    %cst_209 = arith.constant dense<0.000000e+00> : vector<8x128xf32>
    %677 = tpu.matmul %676, %8, %cst_209 {dimension_numbers = #tpu.dot_dimension_numbers<[1], [0], [0], [1], [0, 0, 1, 1], [], []>} : vector<8x32xbf16>, vector<32x128xbf16>, vector<8x128xf32> -> vector<8x128xf32>
    %678 = arith.addf %675, %677 : vector<8x128xf32>
    %679 = vector.extract_strided_slice %678 {offsets = [0, 0], sizes = [8, 32], strides = [1, 1]} : vector<8x128xf32> to vector<8x32xf32>
    %cst_210 = arith.constant 0.000000e+00 : f32
    %680 = vector.broadcast %cst_210 : f32 to vector<8x32xf32>
    %681 = arith.subf %680, %679 : vector<8x32xf32>
    %682 = math.exp %681 : vector<8x32xf32>
    %cst_211 = arith.constant 1.000000e+00 : f32
    %683 = vector.broadcast %cst_211 : f32 to vector<8x32xf32>
    %684 = arith.addf %683, %682 : vector<8x32xf32>
    %685 = tpu.reciprocal %684 {approx = true} : vector<8x32xf32> -> vector<8x32xf32>
    %686 = vector.extract_strided_slice %678 {offsets = [0, 32], sizes = [8, 32], strides = [1, 1]} : vector<8x128xf32> to vector<8x32xf32>
    %cst_212 = arith.constant 0.000000e+00 : f32
    %687 = vector.broadcast %cst_212 : f32 to vector<8x32xf32>
    %688 = arith.subf %687, %686 : vector<8x32xf32>
    %689 = math.exp %688 : vector<8x32xf32>
    %cst_213 = arith.constant 1.000000e+00 : f32
    %690 = vector.broadcast %cst_213 : f32 to vector<8x32xf32>
    %691 = arith.addf %690, %689 : vector<8x32xf32>
    %692 = tpu.reciprocal %691 {approx = true} : vector<8x32xf32> -> vector<8x32xf32>
    %693 = vector.extract_strided_slice %678 {offsets = [0, 64], sizes = [8, 32], strides = [1, 1]} : vector<8x128xf32> to vector<8x32xf32>
    %694 = math.tanh %693 : vector<8x32xf32>
    %695 = vector.extract_strided_slice %678 {offsets = [0, 96], sizes = [8, 32], strides = [1, 1]} : vector<8x128xf32> to vector<8x32xf32>
    %cst_214 = arith.constant 0.000000e+00 : f32
    %696 = vector.broadcast %cst_214 : f32 to vector<8x32xf32>
    %697 = arith.subf %696, %695 : vector<8x32xf32>
    %698 = math.exp %697 : vector<8x32xf32>
    %cst_215 = arith.constant 1.000000e+00 : f32
    %699 = vector.broadcast %cst_215 : f32 to vector<8x32xf32>
    %700 = arith.addf %699, %698 : vector<8x32xf32>
    %701 = tpu.reciprocal %700 {approx = true} : vector<8x32xf32> -> vector<8x32xf32>
    %702 = arith.mulf %692, %618 : vector<8x32xf32>
    %703 = arith.mulf %685, %694 : vector<8x32xf32>
    %704 = arith.addf %702, %703 : vector<8x32xf32>
    %705 = math.tanh %704 : vector<8x32xf32>
    %706 = arith.mulf %701, %705 : vector<8x32xf32>
    %707 = vector.broadcast %674 : vector<8x1xf32> to vector<8x32xf32>
    %708 = arith.mulf %707, %706 : vector<8x32xf32>
    %cst_216 = arith.constant 1.000000e+00 : f32
    %709 = vector.broadcast %cst_216 : f32 to vector<8x1xf32>
    %710 = arith.subf %709, %674 : vector<8x1xf32>
    %711 = vector.broadcast %710 : vector<8x1xf32> to vector<8x32xf32>
    %712 = arith.mulf %711, %611 : vector<8x32xf32>
    %713 = arith.addf %708, %712 : vector<8x32xf32>
    %714 = vector.broadcast %674 : vector<8x1xf32> to vector<8x32xf32>
    %715 = arith.mulf %714, %704 : vector<8x32xf32>
    %cst_217 = arith.constant 1.000000e+00 : f32
    %716 = vector.broadcast %cst_217 : f32 to vector<8x1xf32>
    %717 = arith.subf %716, %674 : vector<8x1xf32>
    %718 = vector.broadcast %717 : vector<8x1xf32> to vector<8x32xf32>
    %719 = arith.mulf %718, %618 : vector<8x32xf32>
    %720 = arith.addf %715, %719 : vector<8x32xf32>
    %721 = vector.broadcast %674 : vector<8x1xf32> to vector<8x32xf32>
    %722 = arith.mulf %713, %721 : vector<8x32xf32>
    %c16_218 = arith.constant 16 : index
    %c0_219 = arith.constant 0 : index
    %723 = vector.load %arg14[%c16_218, %c0_219] : memref<72x32xf32, #tpu.memory_space<vmem>>, vector<8x32xf32>
    tpu.vector_store %arg14[%c16_218, %c0_219], %722 {strides = array<i32>} : memref<72x32xf32, #tpu.memory_space<vmem>>, vector<8x32xf32>,
    %c7_220 = arith.constant 7 : index
    %c0_221 = arith.constant 0 : index
    %c0_222 = arith.constant 0 : index
    %724 = vector.load %arg1[%c7_220, %c0_221, %c0_222] : memref<9x8x1xf32, #tpu.memory_space<vmem>>, vector<1x8x1xf32>
    %725 = vector.shape_cast %724 : vector<1x8x1xf32> to vector<8x1xf32>
    %c56_223 = arith.constant 56 : index
    %c0_224 = arith.constant 0 : index
    %726 = vector.load %arg12[%c56_223, %c0_224] : memref<72x256xf32, #tpu.memory_space<vmem>>, vector<8x128xf32>
    %727 = arith.truncf %662 : vector<8x32xf32> to vector<8x32xbf16>
    %cst_225 = arith.constant dense<0.000000e+00> : vector<8x128xf32>
    %728 = tpu.matmul %727, %7, %cst_225 {dimension_numbers = #tpu.dot_dimension_numbers<[1], [0], [0], [1], [0, 0, 1, 1], [], []>} : vector<8x32xbf16>, vector<32x128xbf16>, vector<8x128xf32> -> vector<8x128xf32>
    %729 = arith.addf %726, %728 : vector<8x128xf32>
    %730 = vector.extract_strided_slice %729 {offsets = [0, 0], sizes = [8, 32], strides = [1, 1]} : vector<8x128xf32> to vector<8x32xf32>
    %cst_226 = arith.constant 0.000000e+00 : f32
    %731 = vector.broadcast %cst_226 : f32 to vector<8x32xf32>
    %732 = arith.subf %731, %730 : vector<8x32xf32>
    %733 = math.exp %732 : vector<8x32xf32>
    %cst_227 = arith.constant 1.000000e+00 : f32
    %734 = vector.broadcast %cst_227 : f32 to vector<8x32xf32>
    %735 = arith.addf %734, %733 : vector<8x32xf32>
    %736 = tpu.reciprocal %735 {approx = true} : vector<8x32xf32> -> vector<8x32xf32>
    %737 = vector.extract_strided_slice %729 {offsets = [0, 32], sizes = [8, 32], strides = [1, 1]} : vector<8x128xf32> to vector<8x32xf32>
    %cst_228 = arith.constant 0.000000e+00 : f32
    %738 = vector.broadcast %cst_228 : f32 to vector<8x32xf32>
    %739 = arith.subf %738, %737 : vector<8x32xf32>
    %740 = math.exp %739 : vector<8x32xf32>
    %cst_229 = arith.constant 1.000000e+00 : f32
    %741 = vector.broadcast %cst_229 : f32 to vector<8x32xf32>
    %742 = arith.addf %741, %740 : vector<8x32xf32>
    %743 = tpu.reciprocal %742 {approx = true} : vector<8x32xf32> -> vector<8x32xf32>
    %744 = vector.extract_strided_slice %729 {offsets = [0, 64], sizes = [8, 32], strides = [1, 1]} : vector<8x128xf32> to vector<8x32xf32>
    %745 = math.tanh %744 : vector<8x32xf32>
    %746 = vector.extract_strided_slice %729 {offsets = [0, 96], sizes = [8, 32], strides = [1, 1]} : vector<8x128xf32> to vector<8x32xf32>
    %cst_230 = arith.constant 0.000000e+00 : f32
    %747 = vector.broadcast %cst_230 : f32 to vector<8x32xf32>
    %748 = arith.subf %747, %746 : vector<8x32xf32>
    %749 = math.exp %748 : vector<8x32xf32>
    %cst_231 = arith.constant 1.000000e+00 : f32
    %750 = vector.broadcast %cst_231 : f32 to vector<8x32xf32>
    %751 = arith.addf %750, %749 : vector<8x32xf32>
    %752 = tpu.reciprocal %751 {approx = true} : vector<8x32xf32> -> vector<8x32xf32>
    %753 = arith.mulf %743, %669 : vector<8x32xf32>
    %754 = arith.mulf %736, %745 : vector<8x32xf32>
    %755 = arith.addf %753, %754 : vector<8x32xf32>
    %756 = math.tanh %755 : vector<8x32xf32>
    %757 = arith.mulf %752, %756 : vector<8x32xf32>
    %758 = vector.broadcast %725 : vector<8x1xf32> to vector<8x32xf32>
    %759 = arith.mulf %758, %757 : vector<8x32xf32>
    %cst_232 = arith.constant 1.000000e+00 : f32
    %760 = vector.broadcast %cst_232 : f32 to vector<8x1xf32>
    %761 = arith.subf %760, %725 : vector<8x1xf32>
    %762 = vector.broadcast %761 : vector<8x1xf32> to vector<8x32xf32>
    %763 = arith.mulf %762, %662 : vector<8x32xf32>
    %764 = arith.addf %759, %763 : vector<8x32xf32>
    %765 = vector.broadcast %725 : vector<8x1xf32> to vector<8x32xf32>
    %766 = arith.mulf %765, %755 : vector<8x32xf32>
    %cst_233 = arith.constant 1.000000e+00 : f32
    %767 = vector.broadcast %cst_233 : f32 to vector<8x1xf32>
    %768 = arith.subf %767, %725 : vector<8x1xf32>
    %769 = vector.broadcast %768 : vector<8x1xf32> to vector<8x32xf32>
    %770 = arith.mulf %769, %669 : vector<8x32xf32>
    %771 = arith.addf %766, %770 : vector<8x32xf32>
    %772 = vector.broadcast %725 : vector<8x1xf32> to vector<8x32xf32>
    %773 = arith.mulf %764, %772 : vector<8x32xf32>
    %c56_234 = arith.constant 56 : index
    %c0_235 = arith.constant 0 : index
    %774 = vector.load %arg13[%c56_234, %c0_235] : memref<72x32xf32, #tpu.memory_space<vmem>>, vector<8x32xf32>
    tpu.vector_store %arg13[%c56_234, %c0_235], %773 {strides = array<i32>} : memref<72x32xf32, #tpu.memory_space<vmem>>, vector<8x32xf32>,
    %c1_236 = arith.constant 1 : index
    %c0_237 = arith.constant 0 : index
    %c0_238 = arith.constant 0 : index
    %775 = vector.load %arg1[%c1_236, %c0_237, %c0_238] : memref<9x8x1xf32, #tpu.memory_space<vmem>>, vector<1x8x1xf32>
    %776 = vector.shape_cast %775 : vector<1x8x1xf32> to vector<8x1xf32>
    %c8_239 = arith.constant 8 : index
    %c128_240 = arith.constant 128 : index
    %777 = vector.load %arg12[%c8_239, %c128_240] : memref<72x256xf32, #tpu.memory_space<vmem>>, vector<8x128xf32>
    %778 = arith.truncf %713 : vector<8x32xf32> to vector<8x32xbf16>
    %cst_241 = arith.constant dense<0.000000e+00> : vector<8x128xf32>
    %779 = tpu.matmul %778, %8, %cst_241 {dimension_numbers = #tpu.dot_dimension_numbers<[1], [0], [0], [1], [0, 0, 1, 1], [], []>} : vector<8x32xbf16>, vector<32x128xbf16>, vector<8x128xf32> -> vector<8x128xf32>
    %780 = arith.addf %777, %779 : vector<8x128xf32>
    %781 = vector.extract_strided_slice %780 {offsets = [0, 0], sizes = [8, 32], strides = [1, 1]} : vector<8x128xf32> to vector<8x32xf32>
    %cst_242 = arith.constant 0.000000e+00 : f32
    %782 = vector.broadcast %cst_242 : f32 to vector<8x32xf32>
    %783 = arith.subf %782, %781 : vector<8x32xf32>
    %784 = math.exp %783 : vector<8x32xf32>
    %cst_243 = arith.constant 1.000000e+00 : f32
    %785 = vector.broadcast %cst_243 : f32 to vector<8x32xf32>
    %786 = arith.addf %785, %784 : vector<8x32xf32>
    %787 = tpu.reciprocal %786 {approx = true} : vector<8x32xf32> -> vector<8x32xf32>
    %788 = vector.extract_strided_slice %780 {offsets = [0, 32], sizes = [8, 32], strides = [1, 1]} : vector<8x128xf32> to vector<8x32xf32>
    %cst_244 = arith.constant 0.000000e+00 : f32
    %789 = vector.broadcast %cst_244 : f32 to vector<8x32xf32>
    %790 = arith.subf %789, %788 : vector<8x32xf32>
    %791 = math.exp %790 : vector<8x32xf32>
    %cst_245 = arith.constant 1.000000e+00 : f32
    %792 = vector.broadcast %cst_245 : f32 to vector<8x32xf32>
    %793 = arith.addf %792, %791 : vector<8x32xf32>
    %794 = tpu.reciprocal %793 {approx = true} : vector<8x32xf32> -> vector<8x32xf32>
    %795 = vector.extract_strided_slice %780 {offsets = [0, 64], sizes = [8, 32], strides = [1, 1]} : vector<8x128xf32> to vector<8x32xf32>
    %796 = math.tanh %795 : vector<8x32xf32>
    %797 = vector.extract_strided_slice %780 {offsets = [0, 96], sizes = [8, 32], strides = [1, 1]} : vector<8x128xf32> to vector<8x32xf32>
    %cst_246 = arith.constant 0.000000e+00 : f32
    %798 = vector.broadcast %cst_246 : f32 to vector<8x32xf32>
    %799 = arith.subf %798, %797 : vector<8x32xf32>
    %800 = math.exp %799 : vector<8x32xf32>
    %cst_247 = arith.constant 1.000000e+00 : f32
    %801 = vector.broadcast %cst_247 : f32 to vector<8x32xf32>
    %802 = arith.addf %801, %800 : vector<8x32xf32>
    %803 = tpu.reciprocal %802 {approx = true} : vector<8x32xf32> -> vector<8x32xf32>
    %804 = arith.mulf %794, %720 : vector<8x32xf32>
    %805 = arith.mulf %787, %796 : vector<8x32xf32>
    %806 = arith.addf %804, %805 : vector<8x32xf32>
    %807 = math.tanh %806 : vector<8x32xf32>
    %808 = arith.mulf %803, %807 : vector<8x32xf32>
    %809 = vector.broadcast %776 : vector<8x1xf32> to vector<8x32xf32>
    %810 = arith.mulf %809, %808 : vector<8x32xf32>
    %cst_248 = arith.constant 1.000000e+00 : f32
    %811 = vector.broadcast %cst_248 : f32 to vector<8x1xf32>
    %812 = arith.subf %811, %776 : vector<8x1xf32>
    %813 = vector.broadcast %812 : vector<8x1xf32> to vector<8x32xf32>
    %814 = arith.mulf %813, %713 : vector<8x32xf32>
    %815 = arith.addf %810, %814 : vector<8x32xf32>
    %816 = vector.broadcast %776 : vector<8x1xf32> to vector<8x32xf32>
    %817 = arith.mulf %816, %806 : vector<8x32xf32>
    %cst_249 = arith.constant 1.000000e+00 : f32
    %818 = vector.broadcast %cst_249 : f32 to vector<8x1xf32>
    %819 = arith.subf %818, %776 : vector<8x1xf32>
    %820 = vector.broadcast %819 : vector<8x1xf32> to vector<8x32xf32>
    %821 = arith.mulf %820, %720 : vector<8x32xf32>
    %822 = arith.addf %817, %821 : vector<8x32xf32>
    %823 = vector.broadcast %776 : vector<8x1xf32> to vector<8x32xf32>
    %824 = arith.mulf %815, %823 : vector<8x32xf32>
    %c8_250 = arith.constant 8 : index
    %c0_251 = arith.constant 0 : index
    %825 = vector.load %arg14[%c8_250, %c0_251] : memref<72x32xf32, #tpu.memory_space<vmem>>, vector<8x32xf32>
    tpu.vector_store %arg14[%c8_250, %c0_251], %824 {strides = array<i32>} : memref<72x32xf32, #tpu.memory_space<vmem>>, vector<8x32xf32>,
    %c8_252 = arith.constant 8 : index
    %c0_253 = arith.constant 0 : index
    %c0_254 = arith.constant 0 : index
    %826 = vector.load %arg1[%c8_252, %c0_253, %c0_254] : memref<9x8x1xf32, #tpu.memory_space<vmem>>, vector<1x8x1xf32>
    %827 = vector.shape_cast %826 : vector<1x8x1xf32> to vector<8x1xf32>
    %c64_255 = arith.constant 64 : index
    %c0_256 = arith.constant 0 : index
    %828 = vector.load %arg12[%c64_255, %c0_256] : memref<72x256xf32, #tpu.memory_space<vmem>>, vector<8x128xf32>
    %829 = arith.truncf %764 : vector<8x32xf32> to vector<8x32xbf16>
    %cst_257 = arith.constant dense<0.000000e+00> : vector<8x128xf32>
    %830 = tpu.matmul %829, %7, %cst_257 {dimension_numbers = #tpu.dot_dimension_numbers<[1], [0], [0], [1], [0, 0, 1, 1], [], []>} : vector<8x32xbf16>, vector<32x128xbf16>, vector<8x128xf32> -> vector<8x128xf32>
    %831 = arith.addf %828, %830 : vector<8x128xf32>
    %832 = vector.extract_strided_slice %831 {offsets = [0, 0], sizes = [8, 32], strides = [1, 1]} : vector<8x128xf32> to vector<8x32xf32>
    %cst_258 = arith.constant 0.000000e+00 : f32
    %833 = vector.broadcast %cst_258 : f32 to vector<8x32xf32>
    %834 = arith.subf %833, %832 : vector<8x32xf32>
    %835 = math.exp %834 : vector<8x32xf32>
    %cst_259 = arith.constant 1.000000e+00 : f32
    %836 = vector.broadcast %cst_259 : f32 to vector<8x32xf32>
    %837 = arith.addf %836, %835 : vector<8x32xf32>
    %838 = tpu.reciprocal %837 {approx = true} : vector<8x32xf32> -> vector<8x32xf32>
    %839 = vector.extract_strided_slice %831 {offsets = [0, 32], sizes = [8, 32], strides = [1, 1]} : vector<8x128xf32> to vector<8x32xf32>
    %cst_260 = arith.constant 0.000000e+00 : f32
    %840 = vector.broadcast %cst_260 : f32 to vector<8x32xf32>
    %841 = arith.subf %840, %839 : vector<8x32xf32>
    %842 = math.exp %841 : vector<8x32xf32>
    %cst_261 = arith.constant 1.000000e+00 : f32
    %843 = vector.broadcast %cst_261 : f32 to vector<8x32xf32>
    %844 = arith.addf %843, %842 : vector<8x32xf32>
    %845 = tpu.reciprocal %844 {approx = true} : vector<8x32xf32> -> vector<8x32xf32>
    %846 = vector.extract_strided_slice %831 {offsets = [0, 64], sizes = [8, 32], strides = [1, 1]} : vector<8x128xf32> to vector<8x32xf32>
    %847 = math.tanh %846 : vector<8x32xf32>
    %848 = vector.extract_strided_slice %831 {offsets = [0, 96], sizes = [8, 32], strides = [1, 1]} : vector<8x128xf32> to vector<8x32xf32>
    %cst_262 = arith.constant 0.000000e+00 : f32
    %849 = vector.broadcast %cst_262 : f32 to vector<8x32xf32>
    %850 = arith.subf %849, %848 : vector<8x32xf32>
    %851 = math.exp %850 : vector<8x32xf32>
    %cst_263 = arith.constant 1.000000e+00 : f32
    %852 = vector.broadcast %cst_263 : f32 to vector<8x32xf32>
    %853 = arith.addf %852, %851 : vector<8x32xf32>
    %854 = tpu.reciprocal %853 {approx = true} : vector<8x32xf32> -> vector<8x32xf32>
    %855 = arith.mulf %845, %771 : vector<8x32xf32>
    %856 = arith.mulf %838, %847 : vector<8x32xf32>
    %857 = arith.addf %855, %856 : vector<8x32xf32>
    %858 = math.tanh %857 : vector<8x32xf32>
    %859 = arith.mulf %854, %858 : vector<8x32xf32>
    %860 = vector.broadcast %827 : vector<8x1xf32> to vector<8x32xf32>
    %861 = arith.mulf %860, %859 : vector<8x32xf32>
    %cst_264 = arith.constant 1.000000e+00 : f32
    %862 = vector.broadcast %cst_264 : f32 to vector<8x1xf32>
    %863 = arith.subf %862, %827 : vector<8x1xf32>
    %864 = vector.broadcast %863 : vector<8x1xf32> to vector<8x32xf32>
    %865 = arith.mulf %864, %764 : vector<8x32xf32>
    %866 = arith.addf %861, %865 : vector<8x32xf32>
    %867 = vector.broadcast %827 : vector<8x1xf32> to vector<8x32xf32>
    %868 = arith.mulf %866, %867 : vector<8x32xf32>
    %c64_265 = arith.constant 64 : index
    %c0_266 = arith.constant 0 : index
    %869 = vector.load %arg13[%c64_265, %c0_266] : memref<72x32xf32, #tpu.memory_space<vmem>>, vector<8x32xf32>
    tpu.vector_store %arg13[%c64_265, %c0_266], %868 {strides = array<i32>} : memref<72x32xf32, #tpu.memory_space<vmem>>, vector<8x32xf32>,
    %c0_267 = arith.constant 0 : index
    %c0_268 = arith.constant 0 : index
    %c0_269 = arith.constant 0 : index
    %870 = vector.load %arg1[%c0_267, %c0_268, %c0_269] : memref<9x8x1xf32, #tpu.memory_space<vmem>>, vector<1x8x1xf32>
    %871 = vector.shape_cast %870 : vector<1x8x1xf32> to vector<8x1xf32>
    %c0_270 = arith.constant 0 : index
    %c128_271 = arith.constant 128 : index
    %872 = vector.load %arg12[%c0_270, %c128_271] : memref<72x256xf32, #tpu.memory_space<vmem>>, vector<8x128xf32>
    %873 = arith.truncf %815 : vector<8x32xf32> to vector<8x32xbf16>
    %cst_272 = arith.constant dense<0.000000e+00> : vector<8x128xf32>
    %874 = tpu.matmul %873, %8, %cst_272 {dimension_numbers = #tpu.dot_dimension_numbers<[1], [0], [0], [1], [0, 0, 1, 1], [], []>} : vector<8x32xbf16>, vector<32x128xbf16>, vector<8x128xf32> -> vector<8x128xf32>
    %875 = arith.addf %872, %874 : vector<8x128xf32>
    %876 = vector.extract_strided_slice %875 {offsets = [0, 0], sizes = [8, 32], strides = [1, 1]} : vector<8x128xf32> to vector<8x32xf32>
    %cst_273 = arith.constant 0.000000e+00 : f32
    %877 = vector.broadcast %cst_273 : f32 to vector<8x32xf32>
    %878 = arith.subf %877, %876 : vector<8x32xf32>
    %879 = math.exp %878 : vector<8x32xf32>
    %cst_274 = arith.constant 1.000000e+00 : f32
    %880 = vector.broadcast %cst_274 : f32 to vector<8x32xf32>
    %881 = arith.addf %880, %879 : vector<8x32xf32>
    %882 = tpu.reciprocal %881 {approx = true} : vector<8x32xf32> -> vector<8x32xf32>
    %883 = vector.extract_strided_slice %875 {offsets = [0, 32], sizes = [8, 32], strides = [1, 1]} : vector<8x128xf32> to vector<8x32xf32>
    %cst_275 = arith.constant 0.000000e+00 : f32
    %884 = vector.broadcast %cst_275 : f32 to vector<8x32xf32>
    %885 = arith.subf %884, %883 : vector<8x32xf32>
    %886 = math.exp %885 : vector<8x32xf32>
    %cst_276 = arith.constant 1.000000e+00 : f32
    %887 = vector.broadcast %cst_276 : f32 to vector<8x32xf32>
    %888 = arith.addf %887, %886 : vector<8x32xf32>
    %889 = tpu.reciprocal %888 {approx = true} : vector<8x32xf32> -> vector<8x32xf32>
    %890 = vector.extract_strided_slice %875 {offsets = [0, 64], sizes = [8, 32], strides = [1, 1]} : vector<8x128xf32> to vector<8x32xf32>
    %891 = math.tanh %890 : vector<8x32xf32>
    %892 = vector.extract_strided_slice %875 {offsets = [0, 96], sizes = [8, 32], strides = [1, 1]} : vector<8x128xf32> to vector<8x32xf32>
    %cst_277 = arith.constant 0.000000e+00 : f32
    %893 = vector.broadcast %cst_277 : f32 to vector<8x32xf32>
    %894 = arith.subf %893, %892 : vector<8x32xf32>
    %895 = math.exp %894 : vector<8x32xf32>
    %cst_278 = arith.constant 1.000000e+00 : f32
    %896 = vector.broadcast %cst_278 : f32 to vector<8x32xf32>
    %897 = arith.addf %896, %895 : vector<8x32xf32>
    %898 = tpu.reciprocal %897 {approx = true} : vector<8x32xf32> -> vector<8x32xf32>
    %899 = arith.mulf %889, %822 : vector<8x32xf32>
    %900 = arith.mulf %882, %891 : vector<8x32xf32>
    %901 = arith.addf %899, %900 : vector<8x32xf32>
    %902 = math.tanh %901 : vector<8x32xf32>
    %903 = arith.mulf %898, %902 : vector<8x32xf32>
    %904 = vector.broadcast %871 : vector<8x1xf32> to vector<8x32xf32>
    %905 = arith.mulf %904, %903 : vector<8x32xf32>
    %cst_279 = arith.constant 1.000000e+00 : f32
    %906 = vector.broadcast %cst_279 : f32 to vector<8x1xf32>
    %907 = arith.subf %906, %871 : vector<8x1xf32>
    %908 = vector.broadcast %907 : vector<8x1xf32> to vector<8x32xf32>
    %909 = arith.mulf %908, %815 : vector<8x32xf32>
    %910 = arith.addf %905, %909 : vector<8x32xf32>
    %911 = vector.broadcast %871 : vector<8x1xf32> to vector<8x32xf32>
    %912 = arith.mulf %910, %911 : vector<8x32xf32>
    %c0_280 = arith.constant 0 : index
    %c0_281 = arith.constant 0 : index
    %913 = vector.load %arg14[%c0_280, %c0_281] : memref<72x32xf32, #tpu.memory_space<vmem>>, vector<8x32xf32>
    tpu.vector_store %arg14[%c0_280, %c0_281], %912 {strides = array<i32>} : memref<72x32xf32, #tpu.memory_space<vmem>>, vector<8x32xf32>,
    %c0_282 = arith.constant 0 : index
    %c0_283 = arith.constant 0 : index
    %914 = vector.load %arg13[%c0_282, %c0_283] : memref<72x32xf32, #tpu.memory_space<vmem>>, vector<72x32xf32>
    %cst_284 = arith.constant 0.000000e+00 : f32
    %915 = vector.broadcast %cst_284 : f32 to vector<72x32xf32>
    %916 = arith.maximumf %914, %915 : vector<72x32xf32>
    %917 = arith.truncf %916 : vector<72x32xf32> to vector<72x32xbf16>
    %c0_285 = arith.constant 0 : index
    %c0_286 = arith.constant 0 : index
    %918 = vector.load %arg14[%c0_285, %c0_286] : memref<72x32xf32, #tpu.memory_space<vmem>>, vector<72x32xf32>
    %cst_287 = arith.constant 0.000000e+00 : f32
    %919 = vector.broadcast %cst_287 : f32 to vector<72x32xf32>
    %920 = arith.maximumf %918, %919 : vector<72x32xf32>
    %921 = arith.truncf %920 : vector<72x32xf32> to vector<72x32xbf16>
    %c0_288 = arith.constant 0 : index
    %c0_289 = arith.constant 0 : index
    %922 = vector.load %arg6[%c0_288, %c0_289] : memref<32x128xbf16, #tpu.memory_space<vmem>>, vector<32x128xbf16>
    %cst_290 = arith.constant dense<0.000000e+00> : vector<72x128xf32>
    %923 = tpu.matmul %917, %922, %cst_290 {dimension_numbers = #tpu.dot_dimension_numbers<[1], [0], [0], [1], [0, 0, 1, 1], [], []>} : vector<72x32xbf16>, vector<32x128xbf16>, vector<72x128xf32> -> vector<72x128xf32>
    %c0_291 = arith.constant 0 : index
    %c0_292 = arith.constant 0 : index
    %924 = vector.load %arg7[%c0_291, %c0_292] : memref<32x128xbf16, #tpu.memory_space<vmem>>, vector<32x128xbf16>
    %cst_293 = arith.constant dense<0.000000e+00> : vector<72x128xf32>
    %925 = tpu.matmul %921, %924, %cst_293 {dimension_numbers = #tpu.dot_dimension_numbers<[1], [0], [0], [1], [0, 0, 1, 1], [], []>} : vector<72x32xbf16>, vector<32x128xbf16>, vector<72x128xf32> -> vector<72x128xf32>
    %926 = arith.addf %923, %925 : vector<72x128xf32>
    %c0_294 = arith.constant 0 : index
    %c0_295 = arith.constant 0 : index
    %927 = vector.load %arg8[%c0_294, %c0_295] : memref<1x128xf32, #tpu.memory_space<vmem>>, vector<1x128xf32>
    %928 = vector.broadcast %927 : vector<1x128xf32> to vector<72x128xf32>
    %929 = arith.addf %926, %928 : vector<72x128xf32>
    %cst_296 = arith.constant 0.000000e+00 : f32
    %930 = vector.broadcast %cst_296 : f32 to vector<72x128xf32>
    %931 = arith.maximumf %929, %930 : vector<72x128xf32>
    %c0_297 = arith.constant 0 : index
    %c0_298 = arith.constant 0 : index
    %932 = vector.load %arg9[%c0_297, %c0_298] : memref<1x128xf32, #tpu.memory_space<vmem>>, vector<1x128xf32>
    %933 = vector.broadcast %932 : vector<1x128xf32> to vector<72x128xf32>
    %934 = arith.mulf %931, %933 : vector<72x128xf32>
    %cst_299 = arith.constant dense<0.000000e+00> : vector<72xf32>
    %935 = vector.multi_reduction <add>, %934, %cst_299 [1] : vector<72x128xf32> to vector<72xf32>
    %936 = vector.shape_cast %935 : vector<72xf32> to vector<72x1xf32>
    %c0_300 = arith.constant 0 : index
    %c0_301 = arith.constant 0 : index
    %937 = vector.load %arg10[%c0_300, %c0_301] : memref<1x1xf32, #tpu.memory_space<vmem>>, vector<1x1xf32>
    %938 = vector.broadcast %937 : vector<1x1xf32> to vector<72x1xf32>
    %939 = arith.addf %936, %938 : vector<72x1xf32>
    %cst_302 = arith.constant 0.000000e+00 : f32
    %940 = vector.broadcast %cst_302 : f32 to vector<72x1xf32>
    %941 = arith.subf %940, %939 : vector<72x1xf32>
    %942 = math.exp %941 : vector<72x1xf32>
    %cst_303 = arith.constant 1.000000e+00 : f32
    %943 = vector.broadcast %cst_303 : f32 to vector<72x1xf32>
    %944 = arith.addf %943, %942 : vector<72x1xf32>
    %945 = tpu.reciprocal %944 {approx = true} : vector<72x1xf32> -> vector<72x1xf32>
    %946 = vector.shape_cast %945 : vector<72x1xf32> to vector<9x8xf32>
    %c0_304 = arith.constant 0 : index
    %c0_305 = arith.constant 0 : index
    %947 = vector.load %arg11[%c0_304, %c0_305] : memref<9x8xf32, #tpu.memory_space<vmem>>, vector<9x8xf32>
    tpu.vector_store %arg11[%c0_304, %c0_305], %946 {strides = array<i32>} : memref<9x8xf32, #tpu.memory_space<vmem>>, vector<9x8xf32>,
    return
  }
}

</mosaic_0001>

<llo_original>
// kernel: tpu_custom_call.1
$region0: #{tpu_custom_call.1}
  #allocation0 [shape = 'u32[]', space=smem, size = 0x4, offset = 0x4, fixed_abs, tag = 'smem constant byte address 0x4 - core index']
  #allocation1 [shape = 'u32[144,128]{1,0:T(1,128)}', space=vmem, size = 0x12000, scoped, tag = 'internal scratch']
  #allocation2 [shape = 'f32[72,256]{1,0:T(8,128)}', space=vmem, size = 0x12000, scoped, tag = 'scratch operand']
  #allocation3 [shape = 'f32[72,32]{1,0:T(8,128)}', space=vmem, size = 0x9000, scoped, tag = 'scratch operand']
  #allocation4 [shape = 'f32[72,32]{1,0:T(8,128)}', space=vmem, size = 0x9000, scoped, tag = 'scratch operand']
  #allocation5 [shape = 'f32[1,1]{1,0:T(1,128)S(1)}', space=vmem, size = 0x200, scoped, tag = 'scoped memory for tpu_custom_call.1']
  %s0 = inlined_call_operand.vmem [shape: bf16[72,32], index: 0, kind: input, shape index: {}]
  %s1 = inlined_call_operand.vmem [shape: f32[9,8,1], index: 1, kind: input, shape index: {}]
  %s2 = inlined_call_operand.vmem [shape: bf16[32,256], index: 2, kind: input, shape index: {}]
  %s3 = inlined_call_operand.vmem [shape: f32[1,256], index: 3, kind: input, shape index: {}]
  %s4 = inlined_call_operand.vmem [shape: bf16[32,128], index: 4, kind: input, shape index: {}]
  %s5 = inlined_call_operand.vmem [shape: bf16[32,128], index: 5, kind: input, shape index: {}]
  %s6 = inlined_call_operand.vmem [shape: bf16[32,128], index: 6, kind: input, shape index: {}]
  %s7 = inlined_call_operand.vmem [shape: bf16[32,128], index: 7, kind: input, shape index: {}]
  %s8 = inlined_call_operand.vmem [shape: f32[1,128], index: 8, kind: input, shape index: {}]
  %s9 = inlined_call_operand.vmem [shape: f32[1,128], index: 9, kind: input, shape index: {}]
  %s10 = inlined_call_operand.<no memory space> [shape: f32[1,1], index: 10, kind: input, shape index: {}]
  %s11 = inlined_call_operand.vmem [shape: f32[9,8], index: 11, kind: output, shape index: {}]
  %s12 = sld [smem:[#allocation0]]
  $region54: #{tpu_custom_call.1} parent=0
    _
  %s14 = ssub.s32 1, %s12
  %s15 = scalar_select 0, %s14, %s12
  %v16 = vstv %s10
  %17 = vst [vmem:[#allocation5] sm:$0x1] %v16
  // Predicated region
  $region2: #{tpu_custom_call.1} parent=0 // pred_check
    _
  $region3: #{tpu_custom_call.1} parent=0 // pred_check_branch
    %19 = sbr.rel (0) target = $region5
  $region4: #{tpu_custom_call.1} parent=0 // pred_region
    _
  $region5: #{tpu_custom_call.1} parent=0 // pred_fallthru
    _
  // Predicated region
  $region6: #{tpu_custom_call.1} parent=0 // pred_check
    _
  $region7: #{tpu_custom_call.1} parent=0 // pred_check_branch
    %21 = sbr.rel (0) target = $region9
  $region8: #{tpu_custom_call.1} parent=0 // pred_region
    _
  $region9: #{tpu_custom_call.1} parent=0 // pred_fallthru
    _
  // Predicated region
  $region10: #{tpu_custom_call.1} parent=0 // pred_check
    _
  $region11: #{tpu_custom_call.1} parent=0 // pred_check_branch
    %23 = sbr.rel (0) target = $region13
  $region12: #{tpu_custom_call.1} parent=0 // pred_region
    _
  $region13: #{tpu_custom_call.1} parent=0 // pred_fallthru
    _
  // Predicated region
  $region14: #{tpu_custom_call.1} parent=0 // pred_check
    _
  $region15: #{tpu_custom_call.1} parent=0 // pred_check_branch
    %25 = sbr.rel (0) target = $region17
  $region16: #{tpu_custom_call.1} parent=0 // pred_region
    _
  $region17: #{tpu_custom_call.1} parent=0 // pred_fallthru
    _
  // Predicated region
  $region18: #{tpu_custom_call.1} parent=0 // pred_check
    _
  $region19: #{tpu_custom_call.1} parent=0 // pred_check_branch
    %27 = sbr.rel (0) target = $region21
  $region20: #{tpu_custom_call.1} parent=0 // pred_region
    _
  $region21: #{tpu_custom_call.1} parent=0 // pred_fallthru
    _
  // Predicated region
  $region22: #{tpu_custom_call.1} parent=0 // pred_check
    _
  $region23: #{tpu_custom_call.1} parent=0 // pred_check_branch
    %29 = sbr.rel (0) target = $region25
  $region24: #{tpu_custom_call.1} parent=0 // pred_region
    _
  $region25: #{tpu_custom_call.1} parent=0 // pred_fallthru
    _
  // Predicated region
  $region26: #{tpu_custom_call.1} parent=0 // pred_check
    _
  $region27: #{tpu_custom_call.1} parent=0 // pred_check_branch
    %31 = sbr.rel (0) target = $region29
  $region28: #{tpu_custom_call.1} parent=0 // pred_region
    _
  $region29: #{tpu_custom_call.1} parent=0 // pred_fallthru
    _
  // Predicated region
  $region30: #{tpu_custom_call.1} parent=0 // pred_check
    _
  $region31: #{tpu_custom_call.1} parent=0 // pred_check_branch
    %33 = sbr.rel (0) target = $region33
  $region32: #{tpu_custom_call.1} parent=0 // pred_region
    _
  $region33: #{tpu_custom_call.1} parent=0 // pred_fallthru
    _
  // Predicated region
  $region34: #{tpu_custom_call.1} parent=0 // pred_check
    _
  $region35: #{tpu_custom_call.1} parent=0 // pred_check_branch
    %35 = sbr.rel (0) target = $region37
  $region36: #{tpu_custom_call.1} parent=0 // pred_region
    _
  $region37: #{tpu_custom_call.1} parent=0 // pred_fallthru
    _
  // Predicated region
  $region38: #{tpu_custom_call.1} parent=0 // pred_check
    _
  $region39: #{tpu_custom_call.1} parent=0 // pred_check_branch
    %37 = sbr.rel (0) target = $region41
  $region40: #{tpu_custom_call.1} parent=0 // pred_region
    _
  $region41: #{tpu_custom_call.1} parent=0 // pred_fallthru
    _
  // Predicated region
  $region42: #{tpu_custom_call.1} parent=0 // pred_check
    _
  $region43: #{tpu_custom_call.1} parent=0 // pred_check_branch
    %39 = sbr.rel (0) target = $region45
  $region44: #{tpu_custom_call.1} parent=0 // pred_region
    _
  $region45: #{tpu_custom_call.1} parent=0 // pred_fallthru
    _
  %v41 = vld [vmem:[%s0] sm:$0xf]
  %v42 = vld [vmem:[%s0 + $0x4] sm:$0xf]
  %v43 = vld [vmem:[%s0 + $0x8] sm:$0xf]
  %v44 = vld [vmem:[%s0 + $0xc] sm:$0xf]
  %v45 = vld [vmem:[%s0 + $0x10] sm:$0xf]
  %v46 = vld [vmem:[%s0 + $0x14] sm:$0xf]
  %v47 = vld [vmem:[%s0 + $0x18] sm:$0xf]
  %v48 = vld [vmem:[%s0 + $0x1c] sm:$0xf]
  %v49 = vld [vmem:[%s0 + $0x20] sm:$0xf]
  %v50 = vld [vmem:[%s2] sm:$0xff]
  %v51 = vld [vmem:[%s2 + $0x8] sm:$0xff]
  %v52 = vld [vmem:[%s2 + $0x10] sm:$0xff]
  %v53 = vld [vmem:[%s2 + $0x18] sm:$0xff]
  %v54 = vld [vmem:[%s3] sm:$0x3]
  %v56 = vlaneseq
  %v57 = vshrl.u32 %v56, 7
  %v58 = vsub.s32 0, %v57
  %v59 = vrot.slane %v54, %v58
  %v60 = vlaneseq
  %v61 = vshrl.u32 %v60, 7
  %v62 = vsub.s32 1, %v61
  %v63 = vrot.slane %v54, %v62
  %v75 = vunpack.c.l.b16 %v41
  %v76 = vunpack.c.l.b16 %v42
  %v77 = vunpack.c.l.b16 %v43
  %v78 = vunpack.c.l.b16 %v44
  %v79 = vunpack.c.l.b16 %v45
  %v80 = vunpack.c.l.b16 %v46
  %v81 = vunpack.c.l.b16 %v47
  %v82 = vunpack.c.l.b16 %v48
  %v83 = vunpack.c.l.b16 %v49
  %v84 = vpack.c.b16 %v76, %v75
  %v85 = vpack.c.b16 %v78, %v77
  %v86 = vpack.c.b16 %v80, %v79
  %v87 = vpack.c.b16 %v82, %v81
  %v88 = vpack.c.b16 %v83, %v83
  %v93 = vunpack.c.l.b16 %v50
  %v94 = vunpack.c.h.b16 %v50
  %v95 = vunpack.c.l.b16 %v51
  %v96 = vunpack.c.h.b16 %v51
  %v97 = vunpack.c.l.b16 %v52
  %v98 = vunpack.c.h.b16 %v52
  %v99 = vunpack.c.l.b16 %v53
  %v100 = vunpack.c.h.b16 %v53
  %v101 = vpack.c.b16 %v95, %v93
  %v102 = vpack.c.b16 %v96, %v94
  %v103 = vpack.c.b16 %v99, %v97
  %v104 = vpack.c.b16 %v100, %v98
  %vm109 = vcmask 261120
  %v111 = vsel %vm109, %v84, 0
  %v114 = vsel %vm109, %v85, 0
  %v117 = vsel %vm109, %v86, 0
  %v120 = vsel %vm109, %v87, 0
  %v123 = vsel %vm109, %v88, 0
  %125 = vmatprep.subr.bf16.mxu0 0
  %126 = vmatpush1.bf16.msra.mxu0 0
  %127 = vmatprep.subr.bf16.mxu0 0
  %128 = vmatpush1.bf16.msra.mxu0 0
  %129 = vmatprep.subr.bf16.mxu0 0
  %130 = vmatpush1.bf16.msra.mxu0 0
  %131 = vmatprep.subr.bf16.mxu0 0
  %132 = vmatpush1.bf16.msra.mxu0 0
  %133 = vmatprep.subr.bf16.mxu0 0
  %134 = vmatpush1.bf16.msra.mxu0 0
  %135 = vmatprep.subr.bf16.mxu0 0
  %136 = vmatpush1.bf16.msra.mxu0 0
  %137 = vmatprep.subr.bf16.mxu0 %v104
  %138 = vmatpush1.bf16.msra.mxu0 %v103
  %139 = vmatprep.subr.bf16.mxu0 %v102
  %140 = vmatpush1.bf16.msra.mxu0 %v101
  %141 = vmatprep.subr.bf16.mxu0 0
  %142 = vmatpush2.bf16.msra.mxu0 0
  %143 = vmatprep.subr.bf16.mxu0 0
  %144 = vmatpush2.bf16.msra.mxu0 0
  %145 = vmatprep.subr.bf16.mxu0 0
  %146 = vmatpush2.bf16.msra.mxu0 0
  %147 = vmatprep.subr.bf16.mxu0 0
  %148 = vmatpush2.bf16.msra.mxu0 0
  %149 = vmatprep.subr.bf16.mxu0 0
  %150 = vmatpush2.bf16.msra.mxu0 0
  %151 = vmatprep.subr.bf16.mxu0 0
  %152 = vmatpush2.bf16.msra.mxu0 0
  %153 = vmatprep.subr.bf16.mxu0 0
  %154 = vmatpush2.bf16.msra.mxu0 0
  %155 = vmatprep.subr.bf16.mxu0 0
  %156 = vmatpush2.bf16.msra.mxu0 0
  %157 = vmatprep.mubr.bf16.mxu0 0
  %158 = vmatmul.mubr.bf16.gmra.mxu0 %v111
  %v159 = vpop.f32.mrf.mxu0
  %v160 = vadd.f32 %v59, %v159
  %v161 = vpop.f32.mrf.mxu0
  %v162 = vadd.f32 %v63, %v161
  %v163 = vpop.f32.mrf.mxu0
  %v164 = vadd.f32 %v59, %v163
  %v165 = vpop.f32.mrf.mxu0
  %v166 = vadd.f32 %v63, %v165
  %167 = vmatprep.mubr.bf16.mxu0 0
  %168 = vmatmul.mubr.bf16.gmra.mxu0 %v114
  %v169 = vpop.f32.mrf.mxu0
  %v170 = vadd.f32 %v59, %v169
  %v171 = vpop.f32.mrf.mxu0
  %v172 = vadd.f32 %v63, %v171
  %v173 = vpop.f32.mrf.mxu0
  %v174 = vadd.f32 %v59, %v173
  %v175 = vpop.f32.mrf.mxu0
  %v176 = vadd.f32 %v63, %v175
  %177 = vmatprep.mubr.bf16.mxu0 0
  %178 = vmatmul.mubr.bf16.gmra.mxu0 %v117
  %v179 = vpop.f32.mrf.mxu0
  %v180 = vadd.f32 %v59, %v179
  %v181 = vpop.f32.mrf.mxu0
  %v182 = vadd.f32 %v63, %v181
  %v183 = vpop.f32.mrf.mxu0
  %v184 = vadd.f32 %v59, %v183
  %v185 = vpop.f32.mrf.mxu0
  %v186 = vadd.f32 %v63, %v185
  %187 = vmatprep.mubr.bf16.mxu0 0
  %188 = vmatmul.mubr.bf16.gmra.mxu0 %v120
  %v189 = vpop.f32.mrf.mxu0
  %v190 = vadd.f32 %v59, %v189
  %v191 = vpop.f32.mrf.mxu0
  %v192 = vadd.f32 %v63, %v191
  %v193 = vpop.f32.mrf.mxu0
  %v194 = vadd.f32 %v59, %v193
  %v195 = vpop.f32.mrf.mxu0
  %v196 = vadd.f32 %v63, %v195
  %197 = vmatprep.mubr.bf16.mxu0 0
  %198 = vmatmul.mubr.bf16.gmra.mxu0 %v123
  %v199 = vpop.f32.mrf.mxu0
  %v200 = vadd.f32 %v59, %v199
  %v201 = vpop.f32.mrf.mxu0
  %v202 = vadd.f32 %v63, %v201
  %v203 = vpop.f32.mrf.mxu0
  %v204 = vpop.f32.mrf.mxu0
  %205 = vdwg.mxu0
  %206 = vst [vmem:[#allocation2] sm:$0xff] %v160
  %207 = vst [vmem:[#allocation2 + $0x8] sm:$0xff] %v162
  %208 = vst [vmem:[#allocation2 + $0x10] sm:$0xff] %v164
  %209 = vst [vmem:[#allocation2 + $0x18] sm:$0xff] %v166
  %210 = vst [vmem:[#allocation2 + $0x20] sm:$0xff] %v170
  %211 = vst [vmem:[#allocation2 + $0x28] sm:$0xff] %v172
  %212 = vst [vmem:[#allocation2 + $0x30] sm:$0xff] %v174
  %213 = vst [vmem:[#allocation2 + $0x38] sm:$0xff] %v176
  %214 = vst [vmem:[#allocation2 + $0x40] sm:$0xff] %v180
  %215 = vst [vmem:[#allocation2 + $0x48] sm:$0xff] %v182
  %216 = vst [vmem:[#allocation2 + $0x50] sm:$0xff] %v184
  %217 = vst [vmem:[#allocation2 + $0x58] sm:$0xff] %v186
  %218 = vst [vmem:[#allocation2 + $0x60] sm:$0xff] %v190
  %219 = vst [vmem:[#allocation2 + $0x68] sm:$0xff] %v192
  %220 = vst [vmem:[#allocation2 + $0x70] sm:$0xff] %v194
  %221 = vst [vmem:[#allocation2 + $0x78] sm:$0xff] %v196
  %222 = vst [vmem:[#allocation2 + $0x80] sm:$0xff] %v200
  %223 = vst [vmem:[#allocation2 + $0x88] sm:$0xff] %v202
  %v224 = vld [vmem:[%s4] sm:$0xf]
  %v225 = vld [vmem:[%s4 + $0x4] sm:$0xf]
  %v226 = vld [vmem:[%s4 + $0x8] sm:$0xf]
  %v227 = vld [vmem:[%s4 + $0xc] sm:$0xf]
  %v228 = vld [vmem:[%s5] sm:$0xf]
  %v229 = vld [vmem:[%s5 + $0x4] sm:$0xf]
  %v230 = vld [vmem:[%s5 + $0x8] sm:$0xf]
  %v231 = vld [vmem:[%s5 + $0xc] sm:$0xf]
  %v232 = vld [vmem:[%s1] sm:$0xff]
  %v233 = vld [vmem:[#allocation2] sm:$0xff]
  %v238 = vunpack.c.l.b16 %v224
  %v239 = vunpack.c.l.b16 %v225
  %v240 = vunpack.c.l.b16 %v226
  %v241 = vunpack.c.l.b16 %v227
  %v242 = vpack.c.b16 %v239, %v238
  %v243 = vpack.c.b16 %v241, %v240
  %v247 = vsel %vm109, 0, 0
  %249 = vmatprep.subr.bf16.mxu0 0
  %250 = vmatpush1.bf16.msra.mxu0 0
  %251 = vmatprep.subr.bf16.mxu0 0
  %252 = vmatpush1.bf16.msra.mxu0 0
  %253 = vmatprep.subr.bf16.mxu0 0
  %254 = vmatpush1.bf16.msra.mxu0 0
  %255 = vmatprep.subr.bf16.mxu0 0
  %256 = vmatpush1.bf16.msra.mxu0 0
  %257 = vmatprep.subr.bf16.mxu0 0
  %258 = vmatpush1.bf16.msra.mxu0 0
  %259 = vmatprep.subr.bf16.mxu0 0
  %260 = vmatpush1.bf16.msra.mxu0 0
  %261 = vmatprep.subr.bf16.mxu0 0
  %262 = vmatpush1.bf16.msra.mxu0 %v243
  %263 = vmatprep.subr.bf16.mxu0 0
  %264 = vmatpush1.bf16.msra.mxu0 %v242
  %265 = vmatprep.subr.bf16.mxu0 0
  %266 = vmatpush2.bf16.msra.mxu0 0
  %267 = vmatprep.subr.bf16.mxu0 0
  %268 = vmatpush2.bf16.msra.mxu0 0
  %269 = vmatprep.subr.bf16.mxu0 0
  %270 = vmatpush2.bf16.msra.mxu0 0
  %271 = vmatprep.subr.bf16.mxu0 0
  %272 = vmatpush2.bf16.msra.mxu0 0
  %273 = vmatprep.subr.bf16.mxu0 0
  %274 = vmatpush2.bf16.msra.mxu0 0
  %275 = vmatprep.subr.bf16.mxu0 0
  %276 = vmatpush2.bf16.msra.mxu0 0
  %277 = vmatprep.subr.bf16.mxu0 0
  %278 = vmatpush2.bf16.msra.mxu0 0
  %279 = vmatprep.subr.bf16.mxu0 0
  %280 = vmatpush2.bf16.msra.mxu0 0
  %281 = vmatprep.mubr.bf16.mxu0 0
  %282 = vmatmul.mubr.bf16.gmra.mxu0 %v247
  %v283 = vpop.f32.mrf.mxu0
  %v284 = vadd.f32 0.0, %v283
  %v285 = vpop.f32.mrf.mxu0
  %v286 = vpop.f32.mrf.mxu0
  %v287 = vpop.f32.mrf.mxu0
  %288 = vdwg.mxu0
  %v289 = vadd.f32 %v233, %v284
  %v290 = vsub.f32 0.0, %v289
  %v291 = vmul.f32 %v290, 1.442695
  %v292 = vpow.pop %v291
  %v293 = vadd.f32 %v292, 1.0
  %v294 = vrcp.pop %v293
  %v295 = vtanh.pop %v289
  %v296 = vmul.f32 %v294, 0.0
  %298 = vrot.lane.b32.xlu0 %v295, 64
  %v299 = vpop.permute.xlu0 %298
  %v301 = vmul.f32 %v294, %v299
  %303 = vrot.lane.b32.xlu0 %v301, 32
  %v304 = vpop.permute.xlu0 %303
  %v306 = vadd.f32 %v296, %v304
  %v307 = vtanh.pop %v306
  %309 = vrot.lane.b32.xlu0 %v307, 64
  %v310 = vpop.permute.xlu0 %309
  %v312 = vmul.f32 %v294, %v310
  %314 = vset.pattern.permute.xlu0 0
  %315 = vperm.xlu0 %314, %v232
  %v316 = vpop.permute.xlu0 %315
  %v318 = vmul.f32 %v316, %v312
  %v319 = vsub.f32 1.0, %v232
  %321 = vset.pattern.permute.xlu0 0
  %322 = vperm.xlu0 %321, %v319
  %v323 = vpop.permute.xlu0 %322
  %v325 = vmul.f32 %v323, 0.0
  %v326 = vadd.f32 %v318, %v325
  %v327 = vmul.f32 %v316, %v306
  %v328 = vadd.f32 %v327, %v325
  %v329 = vmul.f32 %v326, %v316
  %331 = vrot.lane.b32.xlu0 %v329, 32
  %v332 = vpop.permute.xlu0 %331
  %334 = vst.msk [vmem:[#allocation3] sm:$0xff] %vm109, %v332
  %s335 = scalar_lea.vmem %s1, 64
  %v336 = vld [vmem:[%s335] sm:$0xff]
  %v337 = vld [vmem:[#allocation2 + $0x88] sm:$0xff]
  %v342 = vunpack.c.l.b16 %v228
  %v343 = vunpack.c.l.b16 %v229
  %v344 = vunpack.c.l.b16 %v230
  %v345 = vunpack.c.l.b16 %v231
  %v346 = vpack.c.b16 %v343, %v342
  %v347 = vpack.c.b16 %v345, %v344
  %350 = vmatprep.subr.bf16.mxu0 0
  %351 = vmatpush1.bf16.msra.mxu0 0
  %352 = vmatprep.subr.bf16.mxu0 0
  %353 = vmatpush1.bf16.msra.mxu0 0
  %354 = vmatprep.subr.bf16.mxu0 0
  %355 = vmatpush1.bf16.msra.mxu0 0
  %356 = vmatprep.subr.bf16.mxu0 0
  %357 = vmatpush1.bf16.msra.mxu0 0
  %358 = vmatprep.subr.bf16.mxu0 0
  %359 = vmatpush1.bf16.msra.mxu0 0
  %360 = vmatprep.subr.bf16.mxu0 0
  %361 = vmatpush1.bf16.msra.mxu0 0
  %362 = vmatprep.subr.bf16.mxu0 0
  %363 = vmatpush1.bf16.msra.mxu0 %v347
  %364 = vmatprep.subr.bf16.mxu0 0
  %365 = vmatpush1.bf16.msra.mxu0 %v346
  %366 = vmatprep.subr.bf16.mxu0 0
  %367 = vmatpush2.bf16.msra.mxu0 0
  %368 = vmatprep.subr.bf16.mxu0 0
  %369 = vmatpush2.bf16.msra.mxu0 0
  %370 = vmatprep.subr.bf16.mxu0 0
  %371 = vmatpush2.bf16.msra.mxu0 0
  %372 = vmatprep.subr.bf16.mxu0 0
  %373 = vmatpush2.bf16.msra.mxu0 0
  %374 = vmatprep.subr.bf16.mxu0 0
  %375 = vmatpush2.bf16.msra.mxu0 0
  %376 = vmatprep.subr.bf16.mxu0 0
  %377 = vmatpush2.bf16.msra.mxu0 0
  %378 = vmatprep.subr.bf16.mxu0 0
  %379 = vmatpush2.bf16.msra.mxu0 0
  %380 = vmatprep.subr.bf16.mxu0 0
  %381 = vmatpush2.bf16.msra.mxu0 0
  %382 = vmatprep.mubr.bf16.mxu0 0
  %383 = vmatmul.mubr.bf16.gmra.mxu0 %v247
  %v384 = vpop.f32.mrf.mxu0
  %v385 = vadd.f32 0.0, %v384
  %v386 = vpop.f32.mrf.mxu0
  %v387 = vpop.f32.mrf.mxu0
  %v388 = vpop.f32.mrf.mxu0
  %389 = vdwg.mxu0
  %v390 = vadd.f32 %v337, %v385
  %v391 = vsub.f32 0.0, %v390
  %v392 = vmul.f32 %v391, 1.442695
  %v393 = vpow.pop %v392
  %v394 = vadd.f32 %v393, 1.0
  %v395 = vrcp.pop %v394
  %v396 = vtanh.pop %v390
  %v397 = vmul.f32 %v395, 0.0
  %399 = vrot.lane.b32.xlu0 %v396, 64
  %v400 = vpop.permute.xlu0 %399
  %v402 = vmul.f32 %v395, %v400
  %404 = vrot.lane.b32.xlu0 %v402, 32
  %v405 = vpop.permute.xlu0 %404
  %v407 = vadd.f32 %v397, %v405
  %v408 = vtanh.pop %v407
  %410 = vrot.lane.b32.xlu0 %v408, 64
  %v411 = vpop.permute.xlu0 %410
  %v413 = vmul.f32 %v395, %v411
  %415 = vset.pattern.permute.xlu0 0
  %416 = vperm.xlu0 %415, %v336
  %v417 = vpop.permute.xlu0 %416
  %v419 = vmul.f32 %v417, %v413
  %v420 = vsub.f32 1.0, %v336
  %422 = vset.pattern.permute.xlu0 0
  %423 = vperm.xlu0 %422, %v420
  %v424 = vpop.permute.xlu0 %423
  %v426 = vmul.f32 %v424, 0.0
  %v427 = vadd.f32 %v419, %v426
  %v428 = vmul.f32 %v417, %v407
  %v429 = vadd.f32 %v428, %v426
  %v430 = vmul.f32 %v427, %v417
  %432 = vrot.lane.b32.xlu0 %v430, 32
  %v433 = vpop.permute.xlu0 %432
  %435 = vst.msk [vmem:[#allocation4 + $0x40] sm:$0xff] %vm109, %v433
  %s436 = scalar_lea.vmem %s1, 8
  %v437 = vld [vmem:[%s436] sm:$0xff]
  %v438 = vld [vmem:[#allocation2 + $0x10] sm:$0xff]
  %v439 = vpack.c.bf16 %v326, %v326
  %441 = vrot.lane.b32.xlu0 %v439, 32
  %v442 = vpop.permute.xlu0 %441
  %v444 = vsel %vm109, %v442, 0
  %446 = vmatprep.subr.bf16.mxu0 0
  %447 = vmatpush1.bf16.msra.mxu0 0
  %448 = vmatprep.subr.bf16.mxu0 0
  %449 = vmatpush1.bf16.msra.mxu0 0
  %450 = vmatprep.subr.bf16.mxu0 0
  %451 = vmatpush1.bf16.msra.mxu0 0
  %452 = vmatprep.subr.bf16.mxu0 0
  %453 = vmatpush1.bf16.msra.mxu0 0
  %454 = vmatprep.subr.bf16.mxu0 0
  %455 = vmatpush1.bf16.msra.mxu0 0
  %456 = vmatprep.subr.bf16.mxu0 0
  %457 = vmatpush1.bf16.msra.mxu0 0
  %458 = vmatprep.subr.bf16.mxu0 0
  %459 = vmatpush1.bf16.msra.mxu0 %v243
  %460 = vmatprep.subr.bf16.mxu0 0
  %461 = vmatpush1.bf16.msra.mxu0 %v242
  %462 = vmatprep.subr.bf16.mxu0 0
  %463 = vmatpush2.bf16.msra.mxu0 0
  %464 = vmatprep.subr.bf16.mxu0 0
  %465 = vmatpush2.bf16.msra.mxu0 0
  %466 = vmatprep.subr.bf16.mxu0 0
  %467 = vmatpush2.bf16.msra.mxu0 0
  %468 = vmatprep.subr.bf16.mxu0 0
  %469 = vmatpush2.bf16.msra.mxu0 0
  %470 = vmatprep.subr.bf16.mxu0 0
  %471 = vmatpush2.bf16.msra.mxu0 0
  %472 = vmatprep.subr.bf16.mxu0 0
  %473 = vmatpush2.bf16.msra.mxu0 0
  %474 = vmatprep.subr.bf16.mxu0 0
  %475 = vmatpush2.bf16.msra.mxu0 0
  %476 = vmatprep.subr.bf16.mxu0 0
  %477 = vmatpush2.bf16.msra.mxu0 0
  %478 = vmatprep.mubr.bf16.mxu0 0
  %479 = vmatmul.mubr.bf16.gmra.mxu0 %v444
  %v480 = vpop.f32.mrf.mxu0
  %v481 = vadd.f32 0.0, %v480
  %v482 = vpop.f32.mrf.mxu0
  %v483 = vpop.f32.mrf.mxu0
  %v484 = vpop.f32.mrf.mxu0
  %485 = vdwg.mxu0
  %v486 = vadd.f32 %v438, %v481
  %v487 = vsub.f32 0.0, %v486
  %v488 = vmul.f32 %v487, 1.442695
  %v489 = vpow.pop %v488
  %v490 = vadd.f32 %v489, 1.0
  %v491 = vrcp.pop %v490
  %v492 = vtanh.pop %v486
  %v493 = vmul.f32 %v491, %v328
  %495 = vrot.lane.b32.xlu0 %v492, 64
  %v496 = vpop.permute.xlu0 %495
  %v498 = vmul.f32 %v491, %v496
  %500 = vrot.lane.b32.xlu0 %v498, 32
  %v501 = vpop.permute.xlu0 %500
  %v503 = vadd.f32 %v493, %v501
  %v504 = vtanh.pop %v503
  %506 = vrot.lane.b32.xlu0 %v504, 64
  %v507 = vpop.permute.xlu0 %506
  %v509 = vmul.f32 %v491, %v507
  %511 = vset.pattern.permute.xlu0 0
  %512 = vperm.xlu0 %511, %v437
  %v513 = vpop.permute.xlu0 %512
  %v515 = vmul.f32 %v513, %v509
  %v516 = vsub.f32 1.0, %v437
  %518 = vset.pattern.permute.xlu0 0
  %519 = vperm.xlu0 %518, %v516
  %v520 = vpop.permute.xlu0 %519
  %v522 = vmul.f32 %v520, %v326
  %v523 = vadd.f32 %v515, %v522
  %v524 = vmul.f32 %v513, %v503
  %v525 = vmul.f32 %v520, %v328
  %v526 = vadd.f32 %v524, %v525
  %v527 = vmul.f32 %v523, %v513
  %529 = vrot.lane.b32.xlu0 %v527, 32
  %v530 = vpop.permute.xlu0 %529
  %532 = vst.msk [vmem:[#allocation3 + $0x8] sm:$0xff] %vm109, %v530
  %s533 = scalar_lea.vmem %s1, 56
  %v534 = vld [vmem:[%s533] sm:$0xff]
  %v535 = vld [vmem:[#allocation2 + $0x78] sm:$0xff]
  %v536 = vpack.c.bf16 %v427, %v427
  %538 = vrot.lane.b32.xlu0 %v536, 32
  %v539 = vpop.permute.xlu0 %538
  %v541 = vsel %vm109, %v539, 0
  %543 = vmatprep.subr.bf16.mxu0 0
  %544 = vmatpush1.bf16.msra.mxu0 0
  %545 = vmatprep.subr.bf16.mxu0 0
  %546 = vmatpush1.bf16.msra.mxu0 0
  %547 = vmatprep.subr.bf16.mxu0 0
  %548 = vmatpush1.bf16.msra.mxu0 0
  %549 = vmatprep.subr.bf16.mxu0 0
  %550 = vmatpush1.bf16.msra.mxu0 0
  %551 = vmatprep.subr.bf16.mxu0 0
  %552 = vmatpush1.bf16.msra.mxu0 0
  %553 = vmatprep.subr.bf16.mxu0 0
  %554 = vmatpush1.bf16.msra.mxu0 0
  %555 = vmatprep.subr.bf16.mxu0 0
  %556 = vmatpush1.bf16.msra.mxu0 %v347
  %557 = vmatprep.subr.bf16.mxu0 0
  %558 = vmatpush1.bf16.msra.mxu0 %v346
  %559 = vmatprep.subr.bf16.mxu0 0
  %560 = vmatpush2.bf16.msra.mxu0 0
  %561 = vmatprep.subr.bf16.mxu0 0
  %562 = vmatpush2.bf16.msra.mxu0 0
  %563 = vmatprep.subr.bf16.mxu0 0
  %564 = vmatpush2.bf16.msra.mxu0 0
  %565 = vmatprep.subr.bf16.mxu0 0
  %566 = vmatpush2.bf16.msra.mxu0 0
  %567 = vmatprep.subr.bf16.mxu0 0
  %568 = vmatpush2.bf16.msra.mxu0 0
  %569 = vmatprep.subr.bf16.mxu0 0
  %570 = vmatpush2.bf16.msra.mxu0 0
  %571 = vmatprep.subr.bf16.mxu0 0
  %572 = vmatpush2.bf16.msra.mxu0 0
  %573 = vmatprep.subr.bf16.mxu0 0
  %574 = vmatpush2.bf16.msra.mxu0 0
  %575 = vmatprep.mubr.bf16.mxu0 0
  %576 = vmatmul.mubr.bf16.gmra.mxu0 %v541
  %v577 = vpop.f32.mrf.mxu0
  %v578 = vadd.f32 0.0, %v577
  %v579 = vpop.f32.mrf.mxu0
  %v580 = vpop.f32.mrf.mxu0
  %v581 = vpop.f32.mrf.mxu0
  %582 = vdwg.mxu0
  %v583 = vadd.f32 %v535, %v578
  %v584 = vsub.f32 0.0, %v583
  %v585 = vmul.f32 %v584, 1.442695
  %v586 = vpow.pop %v585
  %v587 = vadd.f32 %v586, 1.0
  %v588 = vrcp.pop %v587
  %v589 = vtanh.pop %v583
  %v590 = vmul.f32 %v588, %v429
  %592 = vrot.lane.b32.xlu0 %v589, 64
  %v593 = vpop.permute.xlu0 %592
  %v595 = vmul.f32 %v588, %v593
  %597 = vrot.lane.b32.xlu0 %v595, 32
  %v598 = vpop.permute.xlu0 %597
  %v600 = vadd.f32 %v590, %v598
  %v601 = vtanh.pop %v600
  %603 = vrot.lane.b32.xlu0 %v601, 64
  %v604 = vpop.permute.xlu0 %603
  %v606 = vmul.f32 %v588, %v604
  %608 = vset.pattern.permute.xlu0 0
  %609 = vperm.xlu0 %608, %v534
  %v610 = vpop.permute.xlu0 %609
  %v612 = vmul.f32 %v610, %v606
  %v613 = vsub.f32 1.0, %v534
  %615 = vset.pattern.permute.xlu0 0
  %616 = vperm.xlu0 %615, %v613
  %v617 = vpop.permute.xlu0 %616
  %v619 = vmul.f32 %v617, %v427
  %v620 = vadd.f32 %v612, %v619
  %v621 = vmul.f32 %v610, %v600
  %v622 = vmul.f32 %v617, %v429
  %v623 = vadd.f32 %v621, %v622
  %v624 = vmul.f32 %v620, %v610
  %626 = vrot.lane.b32.xlu0 %v624, 32
  %v627 = vpop.permute.xlu0 %626
  %629 = vst.msk [vmem:[#allocation4 + $0x38] sm:$0xff] %vm109, %v627
  %s630 = scalar_lea.vmem %s1, 16
  %v631 = vld [vmem:[%s630] sm:$0xff]
  %v632 = vld [vmem:[#allocation2 + $0x20] sm:$0xff]
  %v633 = vpack.c.bf16 %v523, %v523
  %635 = vrot.lane.b32.xlu0 %v633, 32
  %v636 = vpop.permute.xlu0 %635
  %v638 = vsel %vm109, %v636, 0
  %640 = vmatprep.subr.bf16.mxu0 0
  %641 = vmatpush1.bf16.msra.mxu0 0
  %642 = vmatprep.subr.bf16.mxu0 0
  %643 = vmatpush1.bf16.msra.mxu0 0
  %644 = vmatprep.subr.bf16.mxu0 0
  %645 = vmatpush1.bf16.msra.mxu0 0
  %646 = vmatprep.subr.bf16.mxu0 0
  %647 = vmatpush1.bf16.msra.mxu0 0
  %648 = vmatprep.subr.bf16.mxu0 0
  %649 = vmatpush1.bf16.msra.mxu0 0
  %650 = vmatprep.subr.bf16.mxu0 0
  %651 = vmatpush1.bf16.msra.mxu0 0
  %652 = vmatprep.subr.bf16.mxu0 0
  %653 = vmatpush1.bf16.msra.mxu0 %v243
  %654 = vmatprep.subr.bf16.mxu0 0
  %655 = vmatpush1.bf16.msra.mxu0 %v242
  %656 = vmatprep.subr.bf16.mxu0 0
  %657 = vmatpush2.bf16.msra.mxu0 0
  %658 = vmatprep.subr.bf16.mxu0 0
  %659 = vmatpush2.bf16.msra.mxu0 0
  %660 = vmatprep.subr.bf16.mxu0 0
  %661 = vmatpush2.bf16.msra.mxu0 0
  %662 = vmatprep.subr.bf16.mxu0 0
  %663 = vmatpush2.bf16.msra.mxu0 0
  %664 = vmatprep.subr.bf16.mxu0 0
  %665 = vmatpush2.bf16.msra.mxu0 0
  %666 = vmatprep.subr.bf16.mxu0 0
  %667 = vmatpush2.bf16.msra.mxu0 0
  %668 = vmatprep.subr.bf16.mxu0 0
  %669 = vmatpush2.bf16.msra.mxu0 0
  %670 = vmatprep.subr.bf16.mxu0 0
  %671 = vmatpush2.bf16.msra.mxu0 0
  %672 = vmatprep.mubr.bf16.mxu0 0
  %673 = vmatmul.mubr.bf16.gmra.mxu0 %v638
  %v674 = vpop.f32.mrf.mxu0
  %v675 = vadd.f32 0.0, %v674
  %v676 = vpop.f32.mrf.mxu0
  %v677 = vpop.f32.mrf.mxu0
  %v678 = vpop.f32.mrf.mxu0
  %679 = vdwg.mxu0
  %v680 = vadd.f32 %v632, %v675
  %v681 = vsub.f32 0.0, %v680
  %v682 = vmul.f32 %v681, 1.442695
  %v683 = vpow.pop %v682
  %v684 = vadd.f32 %v683, 1.0
  %v685 = vrcp.pop %v684
  %v686 = vtanh.pop %v680
  %v687 = vmul.f32 %v685, %v526
  %689 = vrot.lane.b32.xlu0 %v686, 64
  %v690 = vpop.permute.xlu0 %689
  %v692 = vmul.f32 %v685, %v690
  %694 = vrot.lane.b32.xlu0 %v692, 32
  %v695 = vpop.permute.xlu0 %694
  %v697 = vadd.f32 %v687, %v695
  %v698 = vtanh.pop %v697
  %700 = vrot.lane.b32.xlu0 %v698, 64
  %v701 = vpop.permute.xlu0 %700
  %v703 = vmul.f32 %v685, %v701
  %705 = vset.pattern.permute.xlu0 0
  %706 = vperm.xlu0 %705, %v631
  %v707 = vpop.permute.xlu0 %706
  %v709 = vmul.f32 %v707, %v703
  %v710 = vsub.f32 1.0, %v631
  %712 = vset.pattern.permute.xlu0 0
  %713 = vperm.xlu0 %712, %v710
  %v714 = vpop.permute.xlu0 %713
  %v716 = vmul.f32 %v714, %v523
  %v717 = vadd.f32 %v709, %v716
  %v718 = vmul.f32 %v707, %v697
  %v719 = vmul.f32 %v714, %v526
  %v720 = vadd.f32 %v718, %v719
  %v721 = vmul.f32 %v717, %v707
  %723 = vrot.lane.b32.xlu0 %v721, 32
  %v724 = vpop.permute.xlu0 %723
  %726 = vst.msk [vmem:[#allocation3 + $0x10] sm:$0xff] %vm109, %v724
  %s727 = scalar_lea.vmem %s1, 48
  %v728 = vld [vmem:[%s727] sm:$0xff]
  %v729 = vld [vmem:[#allocation2 + $0x68] sm:$0xff]
  %v730 = vpack.c.bf16 %v620, %v620
  %732 = vrot.lane.b32.xlu0 %v730, 32
  %v733 = vpop.permute.xlu0 %732
  %v735 = vsel %vm109, %v733, 0
  %737 = vmatprep.subr.bf16.mxu0 0
  %738 = vmatpush1.bf16.msra.mxu0 0
  %739 = vmatprep.subr.bf16.mxu0 0
  %740 = vmatpush1.bf16.msra.mxu0 0
  %741 = vmatprep.subr.bf16.mxu0 0
  %742 = vmatpush1.bf16.msra.mxu0 0
  %743 = vmatprep.subr.bf16.mxu0 0
  %744 = vmatpush1.bf16.msra.mxu0 0
  %745 = vmatprep.subr.bf16.mxu0 0
  %746 = vmatpush1.bf16.msra.mxu0 0
  %747 = vmatprep.subr.bf16.mxu0 0
  %748 = vmatpush1.bf16.msra.mxu0 0
  %749 = vmatprep.subr.bf16.mxu0 0
  %750 = vmatpush1.bf16.msra.mxu0 %v347
  %751 = vmatprep.subr.bf16.mxu0 0
  %752 = vmatpush1.bf16.msra.mxu0 %v346
  %753 = vmatprep.subr.bf16.mxu0 0
  %754 = vmatpush2.bf16.msra.mxu0 0
  %755 = vmatprep.subr.bf16.mxu0 0
  %756 = vmatpush2.bf16.msra.mxu0 0
  %757 = vmatprep.subr.bf16.mxu0 0
  %758 = vmatpush2.bf16.msra.mxu0 0
  %759 = vmatprep.subr.bf16.mxu0 0
  %760 = vmatpush2.bf16.msra.mxu0 0
  %761 = vmatprep.subr.bf16.mxu0 0
  %762 = vmatpush2.bf16.msra.mxu0 0
  %763 = vmatprep.subr.bf16.mxu0 0
  %764 = vmatpush2.bf16.msra.mxu0 0
  %765 = vmatprep.subr.bf16.mxu0 0
  %766 = vmatpush2.bf16.msra.mxu0 0
  %767 = vmatprep.subr.bf16.mxu0 0
  %768 = vmatpush2.bf16.msra.mxu0 0
  %769 = vmatprep.mubr.bf16.mxu0 0
  %770 = vmatmul.mubr.bf16.gmra.mxu0 %v735
  %v771 = vpop.f32.mrf.mxu0
  %v772 = vadd.f32 0.0, %v771
  %v773 = vpop.f32.mrf.mxu0
  %v774 = vpop.f32.mrf.mxu0
  %v775 = vpop.f32.mrf.mxu0
  %776 = vdwg.mxu0
  %v777 = vadd.f32 %v729, %v772
  %v778 = vsub.f32 0.0, %v777
  %v779 = vmul.f32 %v778, 1.442695
  %v780 = vpow.pop %v779
  %v781 = vadd.f32 %v780, 1.0
  %v782 = vrcp.pop %v781
  %v783 = vtanh.pop %v777
  %v784 = vmul.f32 %v782, %v623
  %786 = vrot.lane.b32.xlu0 %v783, 64
  %v787 = vpop.permute.xlu0 %786
  %v789 = vmul.f32 %v782, %v787
  %791 = vrot.lane.b32.xlu0 %v789, 32
  %v792 = vpop.permute.xlu0 %791
  %v794 = vadd.f32 %v784, %v792
  %v795 = vtanh.pop %v794
  %797 = vrot.lane.b32.xlu0 %v795, 64
  %v798 = vpop.permute.xlu0 %797
  %v800 = vmul.f32 %v782, %v798
  %802 = vset.pattern.permute.xlu0 0
  %803 = vperm.xlu0 %802, %v728
  %v804 = vpop.permute.xlu0 %803
  %v806 = vmul.f32 %v804, %v800
  %v807 = vsub.f32 1.0, %v728
  %809 = vset.pattern.permute.xlu0 0
  %810 = vperm.xlu0 %809, %v807
  %v811 = vpop.permute.xlu0 %810
  %v813 = vmul.f32 %v811, %v620
  %v814 = vadd.f32 %v806, %v813
  %v815 = vmul.f32 %v804, %v794
  %v816 = vmul.f32 %v811, %v623
  %v817 = vadd.f32 %v815, %v816
  %v818 = vmul.f32 %v814, %v804
  %820 = vrot.lane.b32.xlu0 %v818, 32
  %v821 = vpop.permute.xlu0 %820
  %823 = vst.msk [vmem:[#allocation4 + $0x30] sm:$0xff] %vm109, %v821
  %s824 = scalar_lea.vmem %s1, 24
  %v825 = vld [vmem:[%s824] sm:$0xff]
  %v826 = vld [vmem:[#allocation2 + $0x30] sm:$0xff]
  %v827 = vpack.c.bf16 %v717, %v717
  %829 = vrot.lane.b32.xlu0 %v827, 32
  %v830 = vpop.permute.xlu0 %829
  %v832 = vsel %vm109, %v830, 0
  %834 = vmatprep.subr.bf16.mxu0 0
  %835 = vmatpush1.bf16.msra.mxu0 0
  %836 = vmatprep.subr.bf16.mxu0 0
  %837 = vmatpush1.bf16.msra.mxu0 0
  %838 = vmatprep.subr.bf16.mxu0 0
  %839 = vmatpush1.bf16.msra.mxu0 0
  %840 = vmatprep.subr.bf16.mxu0 0
  %841 = vmatpush1.bf16.msra.mxu0 0
  %842 = vmatprep.subr.bf16.mxu0 0
  %843 = vmatpush1.bf16.msra.mxu0 0
  %844 = vmatprep.subr.bf16.mxu0 0
  %845 = vmatpush1.bf16.msra.mxu0 0
  %846 = vmatprep.subr.bf16.mxu0 0
  %847 = vmatpush1.bf16.msra.mxu0 %v243
  %848 = vmatprep.subr.bf16.mxu0 0
  %849 = vmatpush1.bf16.msra.mxu0 %v242
  %850 = vmatprep.subr.bf16.mxu0 0
  %851 = vmatpush2.bf16.msra.mxu0 0
  %852 = vmatprep.subr.bf16.mxu0 0
  %853 = vmatpush2.bf16.msra.mxu0 0
  %854 = vmatprep.subr.bf16.mxu0 0
  %855 = vmatpush2.bf16.msra.mxu0 0
  %856 = vmatprep.subr.bf16.mxu0 0
  %857 = vmatpush2.bf16.msra.mxu0 0
  %858 = vmatprep.subr.bf16.mxu0 0
  %859 = vmatpush2.bf16.msra.mxu0 0
  %860 = vmatprep.subr.bf16.mxu0 0
  %861 = vmatpush2.bf16.msra.mxu0 0
  %862 = vmatprep.subr.bf16.mxu0 0
  %863 = vmatpush2.bf16.msra.mxu0 0
  %864 = vmatprep.subr.bf16.mxu0 0
  %865 = vmatpush2.bf16.msra.mxu0 0
  %866 = vmatprep.mubr.bf16.mxu0 0
  %867 = vmatmul.mubr.bf16.gmra.mxu0 %v832
  %v868 = vpop.f32.mrf.mxu0
  %v869 = vadd.f32 0.0, %v868
  %v870 = vpop.f32.mrf.mxu0
  %v871 = vpop.f32.mrf.mxu0
  %v872 = vpop.f32.mrf.mxu0
  %873 = vdwg.mxu0
  %v874 = vadd.f32 %v826, %v869
  %v875 = vsub.f32 0.0, %v874
  %v876 = vmul.f32 %v875, 1.442695
  %v877 = vpow.pop %v876
  %v878 = vadd.f32 %v877, 1.0
  %v879 = vrcp.pop %v878
  %v880 = vtanh.pop %v874
  %v881 = vmul.f32 %v879, %v720
  %883 = vrot.lane.b32.xlu0 %v880, 64
  %v884 = vpop.permute.xlu0 %883
  %v886 = vmul.f32 %v879, %v884
  %888 = vrot.lane.b32.xlu0 %v886, 32
  %v889 = vpop.permute.xlu0 %888
  %v891 = vadd.f32 %v881, %v889
  %v892 = vtanh.pop %v891
  %894 = vrot.lane.b32.xlu0 %v892, 64
  %v895 = vpop.permute.xlu0 %894
  %v897 = vmul.f32 %v879, %v895
  %899 = vset.pattern.permute.xlu0 0
  %900 = vperm.xlu0 %899, %v825
  %v901 = vpop.permute.xlu0 %900
  %v903 = vmul.f32 %v901, %v897
  %v904 = vsub.f32 1.0, %v825
  %906 = vset.pattern.permute.xlu0 0
  %907 = vperm.xlu0 %906, %v904
  %v908 = vpop.permute.xlu0 %907
  %v910 = vmul.f32 %v908, %v717
  %v911 = vadd.f32 %v903, %v910
  %v912 = vmul.f32 %v901, %v891
  %v913 = vmul.f32 %v908, %v720
  %v914 = vadd.f32 %v912, %v913
  %v915 = vmul.f32 %v911, %v901
  %917 = vrot.lane.b32.xlu0 %v915, 32
  %v918 = vpop.permute.xlu0 %917
  %920 = vst.msk [vmem:[#allocation3 + $0x18] sm:$0xff] %vm109, %v918
  %s921 = scalar_lea.vmem %s1, 40
  %v922 = vld [vmem:[%s921] sm:$0xff]
  %v923 = vld [vmem:[#allocation2 + $0x58] sm:$0xff]
  %v924 = vpack.c.bf16 %v814, %v814
  %926 = vrot.lane.b32.xlu0 %v924, 32
  %v927 = vpop.permute.xlu0 %926
  %v929 = vsel %vm109, %v927, 0
  %931 = vmatprep.subr.bf16.mxu0 0
  %932 = vmatpush1.bf16.msra.mxu0 0
  %933 = vmatprep.subr.bf16.mxu0 0
  %934 = vmatpush1.bf16.msra.mxu0 0
  %935 = vmatprep.subr.bf16.mxu0 0
  %936 = vmatpush1.bf16.msra.mxu0 0
  %937 = vmatprep.subr.bf16.mxu0 0
  %938 = vmatpush1.bf16.msra.mxu0 0
  %939 = vmatprep.subr.bf16.mxu0 0
  %940 = vmatpush1.bf16.msra.mxu0 0
  %941 = vmatprep.subr.bf16.mxu0 0
  %942 = vmatpush1.bf16.msra.mxu0 0
  %943 = vmatprep.subr.bf16.mxu0 0
  %944 = vmatpush1.bf16.msra.mxu0 %v347
  %945 = vmatprep.subr.bf16.mxu0 0
  %946 = vmatpush1.bf16.msra.mxu0 %v346
  %947 = vmatprep.subr.bf16.mxu0 0
  %948 = vmatpush2.bf16.msra.mxu0 0
  %949 = vmatprep.subr.bf16.mxu0 0
  %950 = vmatpush2.bf16.msra.mxu0 0
  %951 = vmatprep.subr.bf16.mxu0 0
  %952 = vmatpush2.bf16.msra.mxu0 0
  %953 = vmatprep.subr.bf16.mxu0 0
  %954 = vmatpush2.bf16.msra.mxu0 0
  %955 = vmatprep.subr.bf16.mxu0 0
  %956 = vmatpush2.bf16.msra.mxu0 0
  %957 = vmatprep.subr.bf16.mxu0 0
  %958 = vmatpush2.bf16.msra.mxu0 0
  %959 = vmatprep.subr.bf16.mxu0 0
  %960 = vmatpush2.bf16.msra.mxu0 0
  %961 = vmatprep.subr.bf16.mxu0 0
  %962 = vmatpush2.bf16.msra.mxu0 0
  %963 = vmatprep.mubr.bf16.mxu0 0
  %964 = vmatmul.mubr.bf16.gmra.mxu0 %v929
  %v965 = vpop.f32.mrf.mxu0
  %v966 = vadd.f32 0.0, %v965
  %v967 = vpop.f32.mrf.mxu0
  %v968 = vpop.f32.mrf.mxu0
  %v969 = vpop.f32.mrf.mxu0
  %970 = vdwg.mxu0
  %v971 = vadd.f32 %v923, %v966
  %v972 = vsub.f32 0.0, %v971
  %v973 = vmul.f32 %v972, 1.442695
  %v974 = vpow.pop %v973
  %v975 = vadd.f32 %v974, 1.0
  %v976 = vrcp.pop %v975
  %v977 = vtanh.pop %v971
  %v978 = vmul.f32 %v976, %v817
  %980 = vrot.lane.b32.xlu0 %v977, 64
  %v981 = vpop.permute.xlu0 %980
  %v983 = vmul.f32 %v976, %v981
  %985 = vrot.lane.b32.xlu0 %v983, 32
  %v986 = vpop.permute.xlu0 %985
  %v988 = vadd.f32 %v978, %v986
  %v989 = vtanh.pop %v988
  %991 = vrot.lane.b32.xlu0 %v989, 64
  %v992 = vpop.permute.xlu0 %991
  %v994 = vmul.f32 %v976, %v992
  %996 = vset.pattern.permute.xlu0 0
  %997 = vperm.xlu0 %996, %v922
  %v998 = vpop.permute.xlu0 %997
  %v1000 = vmul.f32 %v998, %v994
  %v1001 = vsub.f32 1.0, %v922
  %1003 = vset.pattern.permute.xlu0 0
  %1004 = vperm.xlu0 %1003, %v1001
  %v1005 = vpop.permute.xlu0 %1004
  %v1007 = vmul.f32 %v1005, %v814
  %v1008 = vadd.f32 %v1000, %v1007
  %v1009 = vmul.f32 %v998, %v988
  %v1010 = vmul.f32 %v1005, %v817
  %v1011 = vadd.f32 %v1009, %v1010
  %v1012 = vmul.f32 %v1008, %v998
  %1014 = vrot.lane.b32.xlu0 %v1012, 32
  %v1015 = vpop.permute.xlu0 %1014
  %1017 = vst.msk [vmem:[#allocation4 + $0x28] sm:$0xff] %vm109, %v1015
  %s1018 = scalar_lea.vmem %s1, 32
  %v1019 = vld [vmem:[%s1018] sm:$0xff]
  %v1020 = vld [vmem:[#allocation2 + $0x40] sm:$0xff]
  %v1021 = vpack.c.bf16 %v911, %v911
  %1023 = vrot.lane.b32.xlu0 %v1021, 32
  %v1024 = vpop.permute.xlu0 %1023
  %v1026 = vsel %vm109, %v1024, 0
  %1028 = vmatprep.subr.bf16.mxu0 0
  %1029 = vmatpush1.bf16.msra.mxu0 0
  %1030 = vmatprep.subr.bf16.mxu0 0
  %1031 = vmatpush1.bf16.msra.mxu0 0
  %1032 = vmatprep.subr.bf16.mxu0 0
  %1033 = vmatpush1.bf16.msra.mxu0 0
  %1034 = vmatprep.subr.bf16.mxu0 0
  %1035 = vmatpush1.bf16.msra.mxu0 0
  %1036 = vmatprep.subr.bf16.mxu0 0
  %1037 = vmatpush1.bf16.msra.mxu0 0
  %1038 = vmatprep.subr.bf16.mxu0 0
  %1039 = vmatpush1.bf16.msra.mxu0 0
  %1040 = vmatprep.subr.bf16.mxu0 0
  %1041 = vmatpush1.bf16.msra.mxu0 %v243
  %1042 = vmatprep.subr.bf16.mxu0 0
  %1043 = vmatpush1.bf16.msra.mxu0 %v242
  %1044 = vmatprep.subr.bf16.mxu0 0
  %1045 = vmatpush2.bf16.msra.mxu0 0
  %1046 = vmatprep.subr.bf16.mxu0 0
  %1047 = vmatpush2.bf16.msra.mxu0 0
  %1048 = vmatprep.subr.bf16.mxu0 0
  %1049 = vmatpush2.bf16.msra.mxu0 0
  %1050 = vmatprep.subr.bf16.mxu0 0
  %1051 = vmatpush2.bf16.msra.mxu0 0
  %1052 = vmatprep.subr.bf16.mxu0 0
  %1053 = vmatpush2.bf16.msra.mxu0 0
  %1054 = vmatprep.subr.bf16.mxu0 0
  %1055 = vmatpush2.bf16.msra.mxu0 0
  %1056 = vmatprep.subr.bf16.mxu0 0
  %1057 = vmatpush2.bf16.msra.mxu0 0
  %1058 = vmatprep.subr.bf16.mxu0 0
  %1059 = vmatpush2.bf16.msra.mxu0 0
  %1060 = vmatprep.mubr.bf16.mxu0 0
  %1061 = vmatmul.mubr.bf16.gmra.mxu0 %v1026
  %v1062 = vpop.f32.mrf.mxu0
  %v1063 = vadd.f32 0.0, %v1062
  %v1064 = vpop.f32.mrf.mxu0
  %v1065 = vpop.f32.mrf.mxu0
  %v1066 = vpop.f32.mrf.mxu0
  %1067 = vdwg.mxu0
  %v1068 = vadd.f32 %v1020, %v1063
  %v1069 = vsub.f32 0.0, %v1068
  %v1070 = vmul.f32 %v1069, 1.442695
  %v1071 = vpow.pop %v1070
  %v1072 = vadd.f32 %v1071, 1.0
  %v1073 = vrcp.pop %v1072
  %v1074 = vtanh.pop %v1068
  %v1075 = vmul.f32 %v1073, %v914
  %1077 = vrot.lane.b32.xlu0 %v1074, 64
  %v1078 = vpop.permute.xlu0 %1077
  %v1080 = vmul.f32 %v1073, %v1078
  %1082 = vrot.lane.b32.xlu0 %v1080, 32
  %v1083 = vpop.permute.xlu0 %1082
  %v1085 = vadd.f32 %v1075, %v1083
  %v1086 = vtanh.pop %v1085
  %1088 = vrot.lane.b32.xlu0 %v1086, 64
  %v1089 = vpop.permute.xlu0 %1088
  %v1091 = vmul.f32 %v1073, %v1089
  %1093 = vset.pattern.permute.xlu0 0
  %1094 = vperm.xlu0 %1093, %v1019
  %v1095 = vpop.permute.xlu0 %1094
  %v1097 = vmul.f32 %v1095, %v1091
  %v1098 = vsub.f32 1.0, %v1019
  %1100 = vset.pattern.permute.xlu0 0
  %1101 = vperm.xlu0 %1100, %v1098
  %v1102 = vpop.permute.xlu0 %1101
  %v1104 = vmul.f32 %v1102, %v911
  %v1105 = vadd.f32 %v1097, %v1104
  %v1106 = vmul.f32 %v1095, %v1085
  %v1107 = vmul.f32 %v1102, %v914
  %v1108 = vadd.f32 %v1106, %v1107
  %v1109 = vmul.f32 %v1105, %v1095
  %1111 = vrot.lane.b32.xlu0 %v1109, 32
  %v1112 = vpop.permute.xlu0 %1111
  %1114 = vst.msk [vmem:[#allocation3 + $0x20] sm:$0xff] %vm109, %v1112
  %v1115 = vld [vmem:[%s1018] sm:$0xff]
  %v1116 = vld [vmem:[#allocation2 + $0x48] sm:$0xff]
  %v1117 = vpack.c.bf16 %v1008, %v1008
  %1119 = vrot.lane.b32.xlu0 %v1117, 32
  %v1120 = vpop.permute.xlu0 %1119
  %v1122 = vsel %vm109, %v1120, 0
  %1124 = vmatprep.subr.bf16.mxu0 0
  %1125 = vmatpush1.bf16.msra.mxu0 0
  %1126 = vmatprep.subr.bf16.mxu0 0
  %1127 = vmatpush1.bf16.msra.mxu0 0
  %1128 = vmatprep.subr.bf16.mxu0 0
  %1129 = vmatpush1.bf16.msra.mxu0 0
  %1130 = vmatprep.subr.bf16.mxu0 0
  %1131 = vmatpush1.bf16.msra.mxu0 0
  %1132 = vmatprep.subr.bf16.mxu0 0
  %1133 = vmatpush1.bf16.msra.mxu0 0
  %1134 = vmatprep.subr.bf16.mxu0 0
  %1135 = vmatpush1.bf16.msra.mxu0 0
  %1136 = vmatprep.subr.bf16.mxu0 0
  %1137 = vmatpush1.bf16.msra.mxu0 %v347
  %1138 = vmatprep.subr.bf16.mxu0 0
  %1139 = vmatpush1.bf16.msra.mxu0 %v346
  %1140 = vmatprep.subr.bf16.mxu0 0
  %1141 = vmatpush2.bf16.msra.mxu0 0
  %1142 = vmatprep.subr.bf16.mxu0 0
  %1143 = vmatpush2.bf16.msra.mxu0 0
  %1144 = vmatprep.subr.bf16.mxu0 0
  %1145 = vmatpush2.bf16.msra.mxu0 0
  %1146 = vmatprep.subr.bf16.mxu0 0
  %1147 = vmatpush2.bf16.msra.mxu0 0
  %1148 = vmatprep.subr.bf16.mxu0 0
  %1149 = vmatpush2.bf16.msra.mxu0 0
  %1150 = vmatprep.subr.bf16.mxu0 0
  %1151 = vmatpush2.bf16.msra.mxu0 0
  %1152 = vmatprep.subr.bf16.mxu0 0
  %1153 = vmatpush2.bf16.msra.mxu0 0
  %1154 = vmatprep.subr.bf16.mxu0 0
  %1155 = vmatpush2.bf16.msra.mxu0 0
  %1156 = vmatprep.mubr.bf16.mxu0 0
  %1157 = vmatmul.mubr.bf16.gmra.mxu0 %v1122
  %v1158 = vpop.f32.mrf.mxu0
  %v1159 = vadd.f32 0.0, %v1158
  %v1160 = vpop.f32.mrf.mxu0
  %v1161 = vpop.f32.mrf.mxu0
  %v1162 = vpop.f32.mrf.mxu0
  %1163 = vdwg.mxu0
  %v1164 = vadd.f32 %v1116, %v1159
  %v1165 = vsub.f32 0.0, %v1164
  %v1166 = vmul.f32 %v1165, 1.442695
  %v1167 = vpow.pop %v1166
  %v1168 = vadd.f32 %v1167, 1.0
  %v1169 = vrcp.pop %v1168
  %v1170 = vtanh.pop %v1164
  %v1171 = vmul.f32 %v1169, %v1011
  %1173 = vrot.lane.b32.xlu0 %v1170, 64
  %v1174 = vpop.permute.xlu0 %1173
  %v1176 = vmul.f32 %v1169, %v1174
  %1178 = vrot.lane.b32.xlu0 %v1176, 32
  %v1179 = vpop.permute.xlu0 %1178
  %v1181 = vadd.f32 %v1171, %v1179
  %v1182 = vtanh.pop %v1181
  %1184 = vrot.lane.b32.xlu0 %v1182, 64
  %v1185 = vpop.permute.xlu0 %1184
  %v1187 = vmul.f32 %v1169, %v1185
  %1189 = vset.pattern.permute.xlu0 0
  %1190 = vperm.xlu0 %1189, %v1115
  %v1191 = vpop.permute.xlu0 %1190
  %v1193 = vmul.f32 %v1191, %v1187
  %v1194 = vsub.f32 1.0, %v1115
  %1196 = vset.pattern.permute.xlu0 0
  %1197 = vperm.xlu0 %1196, %v1194
  %v1198 = vpop.permute.xlu0 %1197
  %v1200 = vmul.f32 %v1198, %v1008
  %v1201 = vadd.f32 %v1193, %v1200
  %v1202 = vmul.f32 %v1191, %v1181
  %v1203 = vmul.f32 %v1198, %v1011
  %v1204 = vadd.f32 %v1202, %v1203
  %v1205 = vmul.f32 %v1201, %v1191
  %1207 = vrot.lane.b32.xlu0 %v1205, 32
  %v1208 = vpop.permute.xlu0 %1207
  %1210 = vst.msk [vmem:[#allocation4 + $0x20] sm:$0xff] %vm109, %v1208
  %v1211 = vld [vmem:[%s921] sm:$0xff]
  %v1212 = vld [vmem:[#allocation2 + $0x50] sm:$0xff]
  %v1213 = vpack.c.bf16 %v1105, %v1105
  %1215 = vrot.lane.b32.xlu0 %v1213, 32
  %v1216 = vpop.permute.xlu0 %1215
  %v1218 = vsel %vm109, %v1216, 0
  %1220 = vmatprep.subr.bf16.mxu0 0
  %1221 = vmatpush1.bf16.msra.mxu0 0
  %1222 = vmatprep.subr.bf16.mxu0 0
  %1223 = vmatpush1.bf16.msra.mxu0 0
  %1224 = vmatprep.subr.bf16.mxu0 0
  %1225 = vmatpush1.bf16.msra.mxu0 0
  %1226 = vmatprep.subr.bf16.mxu0 0
  %1227 = vmatpush1.bf16.msra.mxu0 0
  %1228 = vmatprep.subr.bf16.mxu0 0
  %1229 = vmatpush1.bf16.msra.mxu0 0
  %1230 = vmatprep.subr.bf16.mxu0 0
  %1231 = vmatpush1.bf16.msra.mxu0 0
  %1232 = vmatprep.subr.bf16.mxu0 0
  %1233 = vmatpush1.bf16.msra.mxu0 %v243
  %1234 = vmatprep.subr.bf16.mxu0 0
  %1235 = vmatpush1.bf16.msra.mxu0 %v242
  %1236 = vmatprep.subr.bf16.mxu0 0
  %1237 = vmatpush2.bf16.msra.mxu0 0
  %1238 = vmatprep.subr.bf16.mxu0 0
  %1239 = vmatpush2.bf16.msra.mxu0 0
  %1240 = vmatprep.subr.bf16.mxu0 0
  %1241 = vmatpush2.bf16.msra.mxu0 0
  %1242 = vmatprep.subr.bf16.mxu0 0
  %1243 = vmatpush2.bf16.msra.mxu0 0
  %1244 = vmatprep.subr.bf16.mxu0 0
  %1245 = vmatpush2.bf16.msra.mxu0 0
  %1246 = vmatprep.subr.bf16.mxu0 0
  %1247 = vmatpush2.bf16.msra.mxu0 0
  %1248 = vmatprep.subr.bf16.mxu0 0
  %1249 = vmatpush2.bf16.msra.mxu0 0
  %1250 = vmatprep.subr.bf16.mxu0 0
  %1251 = vmatpush2.bf16.msra.mxu0 0
  %1252 = vmatprep.mubr.bf16.mxu0 0
  %1253 = vmatmul.mubr.bf16.gmra.mxu0 %v1218
  %v1254 = vpop.f32.mrf.mxu0
  %v1255 = vadd.f32 0.0, %v1254
  %v1256 = vpop.f32.mrf.mxu0
  %v1257 = vpop.f32.mrf.mxu0
  %v1258 = vpop.f32.mrf.mxu0
  %1259 = vdwg.mxu0
  %v1260 = vadd.f32 %v1212, %v1255
  %v1261 = vsub.f32 0.0, %v1260
  %v1262 = vmul.f32 %v1261, 1.442695
  %v1263 = vpow.pop %v1262
  %v1264 = vadd.f32 %v1263, 1.0
  %v1265 = vrcp.pop %v1264
  %v1266 = vtanh.pop %v1260
  %v1267 = vmul.f32 %v1265, %v1108
  %1269 = vrot.lane.b32.xlu0 %v1266, 64
  %v1270 = vpop.permute.xlu0 %1269
  %v1272 = vmul.f32 %v1265, %v1270
  %1274 = vrot.lane.b32.xlu0 %v1272, 32
  %v1275 = vpop.permute.xlu0 %1274
  %v1277 = vadd.f32 %v1267, %v1275
  %v1278 = vtanh.pop %v1277
  %1280 = vrot.lane.b32.xlu0 %v1278, 64
  %v1281 = vpop.permute.xlu0 %1280
  %v1283 = vmul.f32 %v1265, %v1281
  %1285 = vset.pattern.permute.xlu0 0
  %1286 = vperm.xlu0 %1285, %v1211
  %v1287 = vpop.permute.xlu0 %1286
  %v1289 = vmul.f32 %v1287, %v1283
  %v1290 = vsub.f32 1.0, %v1211
  %1292 = vset.pattern.permute.xlu0 0
  %1293 = vperm.xlu0 %1292, %v1290
  %v1294 = vpop.permute.xlu0 %1293
  %v1296 = vmul.f32 %v1294, %v1105
  %v1297 = vadd.f32 %v1289, %v1296
  %v1298 = vmul.f32 %v1287, %v1277
  %v1299 = vmul.f32 %v1294, %v1108
  %v1300 = vadd.f32 %v1298, %v1299
  %v1301 = vmul.f32 %v1297, %v1287
  %1303 = vrot.lane.b32.xlu0 %v1301, 32
  %v1304 = vpop.permute.xlu0 %1303
  %1306 = vst.msk [vmem:[#allocation3 + $0x28] sm:$0xff] %vm109, %v1304
  %v1307 = vld [vmem:[%s824] sm:$0xff]
  %v1308 = vld [vmem:[#allocation2 + $0x38] sm:$0xff]
  %v1309 = vpack.c.bf16 %v1201, %v1201
  %1311 = vrot.lane.b32.xlu0 %v1309, 32
  %v1312 = vpop.permute.xlu0 %1311
  %v1314 = vsel %vm109, %v1312, 0
  %1316 = vmatprep.subr.bf16.mxu0 0
  %1317 = vmatpush1.bf16.msra.mxu0 0
  %1318 = vmatprep.subr.bf16.mxu0 0
  %1319 = vmatpush1.bf16.msra.mxu0 0
  %1320 = vmatprep.subr.bf16.mxu0 0
  %1321 = vmatpush1.bf16.msra.mxu0 0
  %1322 = vmatprep.subr.bf16.mxu0 0
  %1323 = vmatpush1.bf16.msra.mxu0 0
  %1324 = vmatprep.subr.bf16.mxu0 0
  %1325 = vmatpush1.bf16.msra.mxu0 0
  %1326 = vmatprep.subr.bf16.mxu0 0
  %1327 = vmatpush1.bf16.msra.mxu0 0
  %1328 = vmatprep.subr.bf16.mxu0 0
  %1329 = vmatpush1.bf16.msra.mxu0 %v347
  %1330 = vmatprep.subr.bf16.mxu0 0
  %1331 = vmatpush1.bf16.msra.mxu0 %v346
  %1332 = vmatprep.subr.bf16.mxu0 0
  %1333 = vmatpush2.bf16.msra.mxu0 0
  %1334 = vmatprep.subr.bf16.mxu0 0
  %1335 = vmatpush2.bf16.msra.mxu0 0
  %1336 = vmatprep.subr.bf16.mxu0 0
  %1337 = vmatpush2.bf16.msra.mxu0 0
  %1338 = vmatprep.subr.bf16.mxu0 0
  %1339 = vmatpush2.bf16.msra.mxu0 0
  %1340 = vmatprep.subr.bf16.mxu0 0
  %1341 = vmatpush2.bf16.msra.mxu0 0
  %1342 = vmatprep.subr.bf16.mxu0 0
  %1343 = vmatpush2.bf16.msra.mxu0 0
  %1344 = vmatprep.subr.bf16.mxu0 0
  %1345 = vmatpush2.bf16.msra.mxu0 0
  %1346 = vmatprep.subr.bf16.mxu0 0
  %1347 = vmatpush2.bf16.msra.mxu0 0
  %1348 = vmatprep.mubr.bf16.mxu0 0
  %1349 = vmatmul.mubr.bf16.gmra.mxu0 %v1314
  %v1350 = vpop.f32.mrf.mxu0
  %v1351 = vadd.f32 0.0, %v1350
  %v1352 = vpop.f32.mrf.mxu0
  %v1353 = vpop.f32.mrf.mxu0
  %v1354 = vpop.f32.mrf.mxu0
  %1355 = vdwg.mxu0
  %v1356 = vadd.f32 %v1308, %v1351
  %v1357 = vsub.f32 0.0, %v1356
  %v1358 = vmul.f32 %v1357, 1.442695
  %v1359 = vpow.pop %v1358
  %v1360 = vadd.f32 %v1359, 1.0
  %v1361 = vrcp.pop %v1360
  %v1362 = vtanh.pop %v1356
  %v1363 = vmul.f32 %v1361, %v1204
  %1365 = vrot.lane.b32.xlu0 %v1362, 64
  %v1366 = vpop.permute.xlu0 %1365
  %v1368 = vmul.f32 %v1361, %v1366
  %1370 = vrot.lane.b32.xlu0 %v1368, 32
  %v1371 = vpop.permute.xlu0 %1370
  %v1373 = vadd.f32 %v1363, %v1371
  %v1374 = vtanh.pop %v1373
  %1376 = vrot.lane.b32.xlu0 %v1374, 64
  %v1377 = vpop.permute.xlu0 %1376
  %v1379 = vmul.f32 %v1361, %v1377
  %1381 = vset.pattern.permute.xlu0 0
  %1382 = vperm.xlu0 %1381, %v1307
  %v1383 = vpop.permute.xlu0 %1382
  %v1385 = vmul.f32 %v1383, %v1379
  %v1386 = vsub.f32 1.0, %v1307
  %1388 = vset.pattern.permute.xlu0 0
  %1389 = vperm.xlu0 %1388, %v1386
  %v1390 = vpop.permute.xlu0 %1389
  %v1392 = vmul.f32 %v1390, %v1201
  %v1393 = vadd.f32 %v1385, %v1392
  %v1394 = vmul.f32 %v1383, %v1373
  %v1395 = vmul.f32 %v1390, %v1204
  %v1396 = vadd.f32 %v1394, %v1395
  %v1397 = vmul.f32 %v1393, %v1383
  %1399 = vrot.lane.b32.xlu0 %v1397, 32
  %v1400 = vpop.permute.xlu0 %1399
  %1402 = vst.msk [vmem:[#allocation4 + $0x18] sm:$0xff] %vm109, %v1400
  %v1403 = vld [vmem:[%s727] sm:$0xff]
  %v1404 = vld [vmem:[#allocation2 + $0x60] sm:$0xff]
  %v1405 = vpack.c.bf16 %v1297, %v1297
  %1407 = vrot.lane.b32.xlu0 %v1405, 32
  %v1408 = vpop.permute.xlu0 %1407
  %v1410 = vsel %vm109, %v1408, 0
  %1412 = vmatprep.subr.bf16.mxu0 0
  %1413 = vmatpush1.bf16.msra.mxu0 0
  %1414 = vmatprep.subr.bf16.mxu0 0
  %1415 = vmatpush1.bf16.msra.mxu0 0
  %1416 = vmatprep.subr.bf16.mxu0 0
  %1417 = vmatpush1.bf16.msra.mxu0 0
  %1418 = vmatprep.subr.bf16.mxu0 0
  %1419 = vmatpush1.bf16.msra.mxu0 0
  %1420 = vmatprep.subr.bf16.mxu0 0
  %1421 = vmatpush1.bf16.msra.mxu0 0
  %1422 = vmatprep.subr.bf16.mxu0 0
  %1423 = vmatpush1.bf16.msra.mxu0 0
  %1424 = vmatprep.subr.bf16.mxu0 0
  %1425 = vmatpush1.bf16.msra.mxu0 %v243
  %1426 = vmatprep.subr.bf16.mxu0 0
  %1427 = vmatpush1.bf16.msra.mxu0 %v242
  %1428 = vmatprep.subr.bf16.mxu0 0
  %1429 = vmatpush2.bf16.msra.mxu0 0
  %1430 = vmatprep.subr.bf16.mxu0 0
  %1431 = vmatpush2.bf16.msra.mxu0 0
  %1432 = vmatprep.subr.bf16.mxu0 0
  %1433 = vmatpush2.bf16.msra.mxu0 0
  %1434 = vmatprep.subr.bf16.mxu0 0
  %1435 = vmatpush2.bf16.msra.mxu0 0
  %1436 = vmatprep.subr.bf16.mxu0 0
  %1437 = vmatpush2.bf16.msra.mxu0 0
  %1438 = vmatprep.subr.bf16.mxu0 0
  %1439 = vmatpush2.bf16.msra.mxu0 0
  %1440 = vmatprep.subr.bf16.mxu0 0
  %1441 = vmatpush2.bf16.msra.mxu0 0
  %1442 = vmatprep.subr.bf16.mxu0 0
  %1443 = vmatpush2.bf16.msra.mxu0 0
  %1444 = vmatprep.mubr.bf16.mxu0 0
  %1445 = vmatmul.mubr.bf16.gmra.mxu0 %v1410
  %v1446 = vpop.f32.mrf.mxu0
  %v1447 = vadd.f32 0.0, %v1446
  %v1448 = vpop.f32.mrf.mxu0
  %v1449 = vpop.f32.mrf.mxu0
  %v1450 = vpop.f32.mrf.mxu0
  %1451 = vdwg.mxu0
  %v1452 = vadd.f32 %v1404, %v1447
  %v1453 = vsub.f32 0.0, %v1452
  %v1454 = vmul.f32 %v1453, 1.442695
  %v1455 = vpow.pop %v1454
  %v1456 = vadd.f32 %v1455, 1.0
  %v1457 = vrcp.pop %v1456
  %v1458 = vtanh.pop %v1452
  %v1459 = vmul.f32 %v1457, %v1300
  %1461 = vrot.lane.b32.xlu0 %v1458, 64
  %v1462 = vpop.permute.xlu0 %1461
  %v1464 = vmul.f32 %v1457, %v1462
  %1466 = vrot.lane.b32.xlu0 %v1464, 32
  %v1467 = vpop.permute.xlu0 %1466
  %v1469 = vadd.f32 %v1459, %v1467
  %v1470 = vtanh.pop %v1469
  %1472 = vrot.lane.b32.xlu0 %v1470, 64
  %v1473 = vpop.permute.xlu0 %1472
  %v1475 = vmul.f32 %v1457, %v1473
  %1477 = vset.pattern.permute.xlu0 0
  %1478 = vperm.xlu0 %1477, %v1403
  %v1479 = vpop.permute.xlu0 %1478
  %v1481 = vmul.f32 %v1479, %v1475
  %v1482 = vsub.f32 1.0, %v1403
  %1484 = vset.pattern.permute.xlu0 0
  %1485 = vperm.xlu0 %1484, %v1482
  %v1486 = vpop.permute.xlu0 %1485
  %v1488 = vmul.f32 %v1486, %v1297
  %v1489 = vadd.f32 %v1481, %v1488
  %v1490 = vmul.f32 %v1479, %v1469
  %v1491 = vmul.f32 %v1486, %v1300
  %v1492 = vadd.f32 %v1490, %v1491
  %v1493 = vmul.f32 %v1489, %v1479
  %1495 = vrot.lane.b32.xlu0 %v1493, 32
  %v1496 = vpop.permute.xlu0 %1495
  %1498 = vst.msk [vmem:[#allocation3 + $0x30] sm:$0xff] %vm109, %v1496
  %v1499 = vld [vmem:[%s630] sm:$0xff]
  %v1500 = vld [vmem:[#allocation2 + $0x28] sm:$0xff]
  %v1501 = vpack.c.bf16 %v1393, %v1393
  %1503 = vrot.lane.b32.xlu0 %v1501, 32
  %v1504 = vpop.permute.xlu0 %1503
  %v1506 = vsel %vm109, %v1504, 0
  %1508 = vmatprep.subr.bf16.mxu0 0
  %1509 = vmatpush1.bf16.msra.mxu0 0
  %1510 = vmatprep.subr.bf16.mxu0 0
  %1511 = vmatpush1.bf16.msra.mxu0 0
  %1512 = vmatprep.subr.bf16.mxu0 0
  %1513 = vmatpush1.bf16.msra.mxu0 0
  %1514 = vmatprep.subr.bf16.mxu0 0
  %1515 = vmatpush1.bf16.msra.mxu0 0
  %1516 = vmatprep.subr.bf16.mxu0 0
  %1517 = vmatpush1.bf16.msra.mxu0 0
  %1518 = vmatprep.subr.bf16.mxu0 0
  %1519 = vmatpush1.bf16.msra.mxu0 0
  %1520 = vmatprep.subr.bf16.mxu0 0
  %1521 = vmatpush1.bf16.msra.mxu0 %v347
  %1522 = vmatprep.subr.bf16.mxu0 0
  %1523 = vmatpush1.bf16.msra.mxu0 %v346
  %1524 = vmatprep.subr.bf16.mxu0 0
  %1525 = vmatpush2.bf16.msra.mxu0 0
  %1526 = vmatprep.subr.bf16.mxu0 0
  %1527 = vmatpush2.bf16.msra.mxu0 0
  %1528 = vmatprep.subr.bf16.mxu0 0
  %1529 = vmatpush2.bf16.msra.mxu0 0
  %1530 = vmatprep.subr.bf16.mxu0 0
  %1531 = vmatpush2.bf16.msra.mxu0 0
  %1532 = vmatprep.subr.bf16.mxu0 0
  %1533 = vmatpush2.bf16.msra.mxu0 0
  %1534 = vmatprep.subr.bf16.mxu0 0
  %1535 = vmatpush2.bf16.msra.mxu0 0
  %1536 = vmatprep.subr.bf16.mxu0 0
  %1537 = vmatpush2.bf16.msra.mxu0 0
  %1538 = vmatprep.subr.bf16.mxu0 0
  %1539 = vmatpush2.bf16.msra.mxu0 0
  %1540 = vmatprep.mubr.bf16.mxu0 0
  %1541 = vmatmul.mubr.bf16.gmra.mxu0 %v1506
  %v1542 = vpop.f32.mrf.mxu0
  %v1543 = vadd.f32 0.0, %v1542
  %v1544 = vpop.f32.mrf.mxu0
  %v1545 = vpop.f32.mrf.mxu0
  %v1546 = vpop.f32.mrf.mxu0
  %1547 = vdwg.mxu0
  %v1548 = vadd.f32 %v1500, %v1543
  %v1549 = vsub.f32 0.0, %v1548
  %v1550 = vmul.f32 %v1549, 1.442695
  %v1551 = vpow.pop %v1550
  %v1552 = vadd.f32 %v1551, 1.0
  %v1553 = vrcp.pop %v1552
  %v1554 = vtanh.pop %v1548
  %v1555 = vmul.f32 %v1553, %v1396
  %1557 = vrot.lane.b32.xlu0 %v1554, 64
  %v1558 = vpop.permute.xlu0 %1557
  %v1560 = vmul.f32 %v1553, %v1558
  %1562 = vrot.lane.b32.xlu0 %v1560, 32
  %v1563 = vpop.permute.xlu0 %1562
  %v1565 = vadd.f32 %v1555, %v1563
  %v1566 = vtanh.pop %v1565
  %1568 = vrot.lane.b32.xlu0 %v1566, 64
  %v1569 = vpop.permute.xlu0 %1568
  %v1571 = vmul.f32 %v1553, %v1569
  %1573 = vset.pattern.permute.xlu0 0
  %1574 = vperm.xlu0 %1573, %v1499
  %v1575 = vpop.permute.xlu0 %1574
  %v1577 = vmul.f32 %v1575, %v1571
  %v1578 = vsub.f32 1.0, %v1499
  %1580 = vset.pattern.permute.xlu0 0
  %1581 = vperm.xlu0 %1580, %v1578
  %v1582 = vpop.permute.xlu0 %1581
  %v1584 = vmul.f32 %v1582, %v1393
  %v1585 = vadd.f32 %v1577, %v1584
  %v1586 = vmul.f32 %v1575, %v1565
  %v1587 = vmul.f32 %v1582, %v1396
  %v1588 = vadd.f32 %v1586, %v1587
  %v1589 = vmul.f32 %v1585, %v1575
  %1591 = vrot.lane.b32.xlu0 %v1589, 32
  %v1592 = vpop.permute.xlu0 %1591
  %1594 = vst.msk [vmem:[#allocation4 + $0x10] sm:$0xff] %vm109, %v1592
  %v1595 = vld [vmem:[%s533] sm:$0xff]
  %v1596 = vld [vmem:[#allocation2 + $0x70] sm:$0xff]
  %v1597 = vpack.c.bf16 %v1489, %v1489
  %1599 = vrot.lane.b32.xlu0 %v1597, 32
  %v1600 = vpop.permute.xlu0 %1599
  %v1602 = vsel %vm109, %v1600, 0
  %1604 = vmatprep.subr.bf16.mxu0 0
  %1605 = vmatpush1.bf16.msra.mxu0 0
  %1606 = vmatprep.subr.bf16.mxu0 0
  %1607 = vmatpush1.bf16.msra.mxu0 0
  %1608 = vmatprep.subr.bf16.mxu0 0
  %1609 = vmatpush1.bf16.msra.mxu0 0
  %1610 = vmatprep.subr.bf16.mxu0 0
  %1611 = vmatpush1.bf16.msra.mxu0 0
  %1612 = vmatprep.subr.bf16.mxu0 0
  %1613 = vmatpush1.bf16.msra.mxu0 0
  %1614 = vmatprep.subr.bf16.mxu0 0
  %1615 = vmatpush1.bf16.msra.mxu0 0
  %1616 = vmatprep.subr.bf16.mxu0 0
  %1617 = vmatpush1.bf16.msra.mxu0 %v243
  %1618 = vmatprep.subr.bf16.mxu0 0
  %1619 = vmatpush1.bf16.msra.mxu0 %v242
  %1620 = vmatprep.subr.bf16.mxu0 0
  %1621 = vmatpush2.bf16.msra.mxu0 0
  %1622 = vmatprep.subr.bf16.mxu0 0
  %1623 = vmatpush2.bf16.msra.mxu0 0
  %1624 = vmatprep.subr.bf16.mxu0 0
  %1625 = vmatpush2.bf16.msra.mxu0 0
  %1626 = vmatprep.subr.bf16.mxu0 0
  %1627 = vmatpush2.bf16.msra.mxu0 0
  %1628 = vmatprep.subr.bf16.mxu0 0
  %1629 = vmatpush2.bf16.msra.mxu0 0
  %1630 = vmatprep.subr.bf16.mxu0 0
  %1631 = vmatpush2.bf16.msra.mxu0 0
  %1632 = vmatprep.subr.bf16.mxu0 0
  %1633 = vmatpush2.bf16.msra.mxu0 0
  %1634 = vmatprep.subr.bf16.mxu0 0
  %1635 = vmatpush2.bf16.msra.mxu0 0
  %1636 = vmatprep.mubr.bf16.mxu0 0
  %1637 = vmatmul.mubr.bf16.gmra.mxu0 %v1602
  %v1638 = vpop.f32.mrf.mxu0
  %v1639 = vadd.f32 0.0, %v1638
  %v1640 = vpop.f32.mrf.mxu0
  %v1641 = vpop.f32.mrf.mxu0
  %v1642 = vpop.f32.mrf.mxu0
  %1643 = vdwg.mxu0
  %v1644 = vadd.f32 %v1596, %v1639
  %v1645 = vsub.f32 0.0, %v1644
  %v1646 = vmul.f32 %v1645, 1.442695
  %v1647 = vpow.pop %v1646
  %v1648 = vadd.f32 %v1647, 1.0
  %v1649 = vrcp.pop %v1648
  %v1650 = vtanh.pop %v1644
  %v1651 = vmul.f32 %v1649, %v1492
  %1653 = vrot.lane.b32.xlu0 %v1650, 64
  %v1654 = vpop.permute.xlu0 %1653
  %v1656 = vmul.f32 %v1649, %v1654
  %1658 = vrot.lane.b32.xlu0 %v1656, 32
  %v1659 = vpop.permute.xlu0 %1658
  %v1661 = vadd.f32 %v1651, %v1659
  %v1662 = vtanh.pop %v1661
  %1664 = vrot.lane.b32.xlu0 %v1662, 64
  %v1665 = vpop.permute.xlu0 %1664
  %v1667 = vmul.f32 %v1649, %v1665
  %1669 = vset.pattern.permute.xlu0 0
  %1670 = vperm.xlu0 %1669, %v1595
  %v1671 = vpop.permute.xlu0 %1670
  %v1673 = vmul.f32 %v1671, %v1667
  %v1674 = vsub.f32 1.0, %v1595
  %1676 = vset.pattern.permute.xlu0 0
  %1677 = vperm.xlu0 %1676, %v1674
  %v1678 = vpop.permute.xlu0 %1677
  %v1680 = vmul.f32 %v1678, %v1489
  %v1681 = vadd.f32 %v1673, %v1680
  %v1682 = vmul.f32 %v1671, %v1661
  %v1683 = vmul.f32 %v1678, %v1492
  %v1684 = vadd.f32 %v1682, %v1683
  %v1685 = vmul.f32 %v1681, %v1671
  %1687 = vrot.lane.b32.xlu0 %v1685, 32
  %v1688 = vpop.permute.xlu0 %1687
  %1690 = vst.msk [vmem:[#allocation3 + $0x38] sm:$0xff] %vm109, %v1688
  %v1691 = vld [vmem:[%s436] sm:$0xff]
  %v1692 = vld [vmem:[#allocation2 + $0x18] sm:$0xff]
  %v1693 = vpack.c.bf16 %v1585, %v1585
  %1695 = vrot.lane.b32.xlu0 %v1693, 32
  %v1696 = vpop.permute.xlu0 %1695
  %v1698 = vsel %vm109, %v1696, 0
  %1700 = vmatprep.subr.bf16.mxu0 0
  %1701 = vmatpush1.bf16.msra.mxu0 0
  %1702 = vmatprep.subr.bf16.mxu0 0
  %1703 = vmatpush1.bf16.msra.mxu0 0
  %1704 = vmatprep.subr.bf16.mxu0 0
  %1705 = vmatpush1.bf16.msra.mxu0 0
  %1706 = vmatprep.subr.bf16.mxu0 0
  %1707 = vmatpush1.bf16.msra.mxu0 0
  %1708 = vmatprep.subr.bf16.mxu0 0
  %1709 = vmatpush1.bf16.msra.mxu0 0
  %1710 = vmatprep.subr.bf16.mxu0 0
  %1711 = vmatpush1.bf16.msra.mxu0 0
  %1712 = vmatprep.subr.bf16.mxu0 0
  %1713 = vmatpush1.bf16.msra.mxu0 %v347
  %1714 = vmatprep.subr.bf16.mxu0 0
  %1715 = vmatpush1.bf16.msra.mxu0 %v346
  %1716 = vmatprep.subr.bf16.mxu0 0
  %1717 = vmatpush2.bf16.msra.mxu0 0
  %1718 = vmatprep.subr.bf16.mxu0 0
  %1719 = vmatpush2.bf16.msra.mxu0 0
  %1720 = vmatprep.subr.bf16.mxu0 0
  %1721 = vmatpush2.bf16.msra.mxu0 0
  %1722 = vmatprep.subr.bf16.mxu0 0
  %1723 = vmatpush2.bf16.msra.mxu0 0
  %1724 = vmatprep.subr.bf16.mxu0 0
  %1725 = vmatpush2.bf16.msra.mxu0 0
  %1726 = vmatprep.subr.bf16.mxu0 0
  %1727 = vmatpush2.bf16.msra.mxu0 0
  %1728 = vmatprep.subr.bf16.mxu0 0
  %1729 = vmatpush2.bf16.msra.mxu0 0
  %1730 = vmatprep.subr.bf16.mxu0 0
  %1731 = vmatpush2.bf16.msra.mxu0 0
  %1732 = vmatprep.mubr.bf16.mxu0 0
  %1733 = vmatmul.mubr.bf16.gmra.mxu0 %v1698
  %v1734 = vpop.f32.mrf.mxu0
  %v1735 = vadd.f32 0.0, %v1734
  %v1736 = vpop.f32.mrf.mxu0
  %v1737 = vpop.f32.mrf.mxu0
  %v1738 = vpop.f32.mrf.mxu0
  %1739 = vdwg.mxu0
  %v1740 = vadd.f32 %v1692, %v1735
  %v1741 = vsub.f32 0.0, %v1740
  %v1742 = vmul.f32 %v1741, 1.442695
  %v1743 = vpow.pop %v1742
  %v1744 = vadd.f32 %v1743, 1.0
  %v1745 = vrcp.pop %v1744
  %v1746 = vtanh.pop %v1740
  %v1747 = vmul.f32 %v1745, %v1588
  %1749 = vrot.lane.b32.xlu0 %v1746, 64
  %v1750 = vpop.permute.xlu0 %1749
  %v1752 = vmul.f32 %v1745, %v1750
  %1754 = vrot.lane.b32.xlu0 %v1752, 32
  %v1755 = vpop.permute.xlu0 %1754
  %v1757 = vadd.f32 %v1747, %v1755
  %v1758 = vtanh.pop %v1757
  %1760 = vrot.lane.b32.xlu0 %v1758, 64
  %v1761 = vpop.permute.xlu0 %1760
  %v1763 = vmul.f32 %v1745, %v1761
  %1765 = vset.pattern.permute.xlu0 0
  %1766 = vperm.xlu0 %1765, %v1691
  %v1767 = vpop.permute.xlu0 %1766
  %v1769 = vmul.f32 %v1767, %v1763
  %v1770 = vsub.f32 1.0, %v1691
  %1772 = vset.pattern.permute.xlu0 0
  %1773 = vperm.xlu0 %1772, %v1770
  %v1774 = vpop.permute.xlu0 %1773
  %v1776 = vmul.f32 %v1774, %v1585
  %v1777 = vadd.f32 %v1769, %v1776
  %v1778 = vmul.f32 %v1767, %v1757
  %v1779 = vmul.f32 %v1774, %v1588
  %v1780 = vadd.f32 %v1778, %v1779
  %v1781 = vmul.f32 %v1777, %v1767
  %1783 = vrot.lane.b32.xlu0 %v1781, 32
  %v1784 = vpop.permute.xlu0 %1783
  %1786 = vst.msk [vmem:[#allocation4 + $0x8] sm:$0xff] %vm109, %v1784
  %v1787 = vld [vmem:[%s335] sm:$0xff]
  %v1788 = vld [vmem:[#allocation2 + $0x80] sm:$0xff]
  %v1789 = vpack.c.bf16 %v1681, %v1681
  %1791 = vrot.lane.b32.xlu0 %v1789, 32
  %v1792 = vpop.permute.xlu0 %1791
  %v1794 = vsel %vm109, %v1792, 0
  %1796 = vmatprep.subr.bf16.mxu0 0
  %1797 = vmatpush1.bf16.msra.mxu0 0
  %1798 = vmatprep.subr.bf16.mxu0 0
  %1799 = vmatpush1.bf16.msra.mxu0 0
  %1800 = vmatprep.subr.bf16.mxu0 0
  %1801 = vmatpush1.bf16.msra.mxu0 0
  %1802 = vmatprep.subr.bf16.mxu0 0
  %1803 = vmatpush1.bf16.msra.mxu0 0
  %1804 = vmatprep.subr.bf16.mxu0 0
  %1805 = vmatpush1.bf16.msra.mxu0 0
  %1806 = vmatprep.subr.bf16.mxu0 0
  %1807 = vmatpush1.bf16.msra.mxu0 0
  %1808 = vmatprep.subr.bf16.mxu0 0
  %1809 = vmatpush1.bf16.msra.mxu0 %v243
  %1810 = vmatprep.subr.bf16.mxu0 0
  %1811 = vmatpush1.bf16.msra.mxu0 %v242
  %1812 = vmatprep.subr.bf16.mxu0 0
  %1813 = vmatpush2.bf16.msra.mxu0 0
  %1814 = vmatprep.subr.bf16.mxu0 0
  %1815 = vmatpush2.bf16.msra.mxu0 0
  %1816 = vmatprep.subr.bf16.mxu0 0
  %1817 = vmatpush2.bf16.msra.mxu0 0
  %1818 = vmatprep.subr.bf16.mxu0 0
  %1819 = vmatpush2.bf16.msra.mxu0 0
  %1820 = vmatprep.subr.bf16.mxu0 0
  %1821 = vmatpush2.bf16.msra.mxu0 0
  %1822 = vmatprep.subr.bf16.mxu0 0
  %1823 = vmatpush2.bf16.msra.mxu0 0
  %1824 = vmatprep.subr.bf16.mxu0 0
  %1825 = vmatpush2.bf16.msra.mxu0 0
  %1826 = vmatprep.subr.bf16.mxu0 0
  %1827 = vmatpush2.bf16.msra.mxu0 0
  %1828 = vmatprep.mubr.bf16.mxu0 0
  %1829 = vmatmul.mubr.bf16.gmra.mxu0 %v1794
  %v1830 = vpop.f32.mrf.mxu0
  %v1831 = vadd.f32 0.0, %v1830
  %v1832 = vpop.f32.mrf.mxu0
  %v1833 = vpop.f32.mrf.mxu0
  %v1834 = vpop.f32.mrf.mxu0
  %1835 = vdwg.mxu0
  %v1836 = vadd.f32 %v1788, %v1831
  %v1837 = vsub.f32 0.0, %v1836
  %v1838 = vmul.f32 %v1837, 1.442695
  %v1839 = vpow.pop %v1838
  %v1840 = vadd.f32 %v1839, 1.0
  %v1841 = vrcp.pop %v1840
  %v1842 = vtanh.pop %v1836
  %v1843 = vmul.f32 %v1841, %v1684
  %1845 = vrot.lane.b32.xlu0 %v1842, 64
  %v1846 = vpop.permute.xlu0 %1845
  %v1848 = vmul.f32 %v1841, %v1846
  %1850 = vrot.lane.b32.xlu0 %v1848, 32
  %v1851 = vpop.permute.xlu0 %1850
  %v1853 = vadd.f32 %v1843, %v1851
  %v1854 = vtanh.pop %v1853
  %1856 = vrot.lane.b32.xlu0 %v1854, 64
  %v1857 = vpop.permute.xlu0 %1856
  %v1859 = vmul.f32 %v1841, %v1857
  %1861 = vset.pattern.permute.xlu0 0
  %1862 = vperm.xlu0 %1861, %v1787
  %v1863 = vpop.permute.xlu0 %1862
  %v1865 = vmul.f32 %v1863, %v1859
  %v1866 = vsub.f32 1.0, %v1787
  %1868 = vset.pattern.permute.xlu0 0
  %1869 = vperm.xlu0 %1868, %v1866
  %v1870 = vpop.permute.xlu0 %1869
  %v1872 = vmul.f32 %v1870, %v1681
  %v1873 = vadd.f32 %v1865, %v1872
  %v1874 = vmul.f32 %v1873, %v1863
  %1876 = vrot.lane.b32.xlu0 %v1874, 32
  %v1877 = vpop.permute.xlu0 %1876
  %1879 = vst.msk [vmem:[#allocation3 + $0x40] sm:$0xff] %vm109, %v1877
  %v1880 = vld [vmem:[%s1] sm:$0xff]
  %v1881 = vld [vmem:[#allocation2 + $0x8] sm:$0xff]
  %v1882 = vpack.c.bf16 %v1777, %v1777
  %1884 = vrot.lane.b32.xlu0 %v1882, 32
  %v1885 = vpop.permute.xlu0 %1884
  %v1887 = vsel %vm109, %v1885, 0
  %1889 = vmatprep.subr.bf16.mxu0 0
  %1890 = vmatpush1.bf16.msra.mxu0 0
  %1891 = vmatprep.subr.bf16.mxu0 0
  %1892 = vmatpush1.bf16.msra.mxu0 0
  %1893 = vmatprep.subr.bf16.mxu0 0
  %1894 = vmatpush1.bf16.msra.mxu0 0
  %1895 = vmatprep.subr.bf16.mxu0 0
  %1896 = vmatpush1.bf16.msra.mxu0 0
  %1897 = vmatprep.subr.bf16.mxu0 0
  %1898 = vmatpush1.bf16.msra.mxu0 0
  %1899 = vmatprep.subr.bf16.mxu0 0
  %1900 = vmatpush1.bf16.msra.mxu0 0
  %1901 = vmatprep.subr.bf16.mxu0 0
  %1902 = vmatpush1.bf16.msra.mxu0 %v347
  %1903 = vmatprep.subr.bf16.mxu0 0
  %1904 = vmatpush1.bf16.msra.mxu0 %v346
  %1905 = vmatprep.subr.bf16.mxu0 0
  %1906 = vmatpush2.bf16.msra.mxu0 0
  %1907 = vmatprep.subr.bf16.mxu0 0
  %1908 = vmatpush2.bf16.msra.mxu0 0
  %1909 = vmatprep.subr.bf16.mxu0 0
  %1910 = vmatpush2.bf16.msra.mxu0 0
  %1911 = vmatprep.subr.bf16.mxu0 0
  %1912 = vmatpush2.bf16.msra.mxu0 0
  %1913 = vmatprep.subr.bf16.mxu0 0
  %1914 = vmatpush2.bf16.msra.mxu0 0
  %1915 = vmatprep.subr.bf16.mxu0 0
  %1916 = vmatpush2.bf16.msra.mxu0 0
  %1917 = vmatprep.subr.bf16.mxu0 0
  %1918 = vmatpush2.bf16.msra.mxu0 0
  %1919 = vmatprep.subr.bf16.mxu0 0
  %1920 = vmatpush2.bf16.msra.mxu0 0
  %1921 = vmatprep.mubr.bf16.mxu0 0
  %1922 = vmatmul.mubr.bf16.gmra.mxu0 %v1887
  %v1923 = vpop.f32.mrf.mxu0
  %v1924 = vadd.f32 0.0, %v1923
  %v1925 = vpop.f32.mrf.mxu0
  %v1926 = vpop.f32.mrf.mxu0
  %v1927 = vpop.f32.mrf.mxu0
  %1928 = vdwg.mxu0
  %v1929 = vadd.f32 %v1881, %v1924
  %v1930 = vsub.f32 0.0, %v1929
  %v1931 = vmul.f32 %v1930, 1.442695
  %v1932 = vpow.pop %v1931
  %v1933 = vadd.f32 %v1932, 1.0
  %v1934 = vrcp.pop %v1933
  %v1935 = vtanh.pop %v1929
  %v1936 = vmul.f32 %v1934, %v1780
  %1938 = vrot.lane.b32.xlu0 %v1935, 64
  %v1939 = vpop.permute.xlu0 %1938
  %v1941 = vmul.f32 %v1934, %v1939
  %1943 = vrot.lane.b32.xlu0 %v1941, 32
  %v1944 = vpop.permute.xlu0 %1943
  %v1946 = vadd.f32 %v1936, %v1944
  %v1947 = vtanh.pop %v1946
  %1949 = vrot.lane.b32.xlu0 %v1947, 64
  %v1950 = vpop.permute.xlu0 %1949
  %v1952 = vmul.f32 %v1934, %v1950
  %1954 = vset.pattern.permute.xlu0 0
  %1955 = vperm.xlu0 %1954, %v1880
  %v1956 = vpop.permute.xlu0 %1955
  %v1958 = vmul.f32 %v1956, %v1952
  %v1959 = vsub.f32 1.0, %v1880
  %1961 = vset.pattern.permute.xlu0 0
  %1962 = vperm.xlu0 %1961, %v1959
  %v1963 = vpop.permute.xlu0 %1962
  %v1965 = vmul.f32 %v1963, %v1777
  %v1966 = vadd.f32 %v1958, %v1965
  %v1967 = vmul.f32 %v1966, %v1956
  %1969 = vrot.lane.b32.xlu0 %v1967, 32
  %v1970 = vpop.permute.xlu0 %1969
  %1972 = vst.msk [vmem:[#allocation4] sm:$0xff] %vm109, %v1970
  %v1973 = vld [vmem:[#allocation3] sm:$0xff]
  %v1974 = vld [vmem:[#allocation3 + $0x8] sm:$0xff]
  %v1975 = vld [vmem:[#allocation3 + $0x10] sm:$0xff]
  %v1976 = vld [vmem:[#allocation3 + $0x18] sm:$0xff]
  %v1977 = vld [vmem:[#allocation3 + $0x20] sm:$0xff]
  %v1978 = vld [vmem:[#allocation3 + $0x28] sm:$0xff]
  %v1979 = vld [vmem:[#allocation3 + $0x30] sm:$0xff]
  %v1980 = vld [vmem:[#allocation3 + $0x38] sm:$0xff]
  %v1981 = vld [vmem:[#allocation3 + $0x40] sm:$0xff]
  %v1982 = vmax.f32 %v1973, 0.0
  %v1983 = vmax.f32 %v1974, 0.0
  %v1984 = vmax.f32 %v1975, 0.0
  %v1985 = vmax.f32 %v1976, 0.0
  %v1986 = vmax.f32 %v1977, 0.0
  %v1987 = vmax.f32 %v1978, 0.0
  %v1988 = vmax.f32 %v1979, 0.0
  %v1989 = vmax.f32 %v1980, 0.0
  %v1990 = vmax.f32 %v1981, 0.0
  %v1991 = vpack.c.bf16 %v1983, %v1982
  %v1992 = vpack.c.bf16 %v1985, %v1984
  %v1993 = vpack.c.bf16 %v1987, %v1986
  %v1994 = vpack.c.bf16 %v1989, %v1988
  %v1995 = vpack.c.bf16 %v1990, %v1990
  %v1996 = vld [vmem:[#allocation4] sm:$0xff]
  %v1997 = vld [vmem:[#allocation4 + $0x8] sm:$0xff]
  %v1998 = vld [vmem:[#allocation4 + $0x10] sm:$0xff]
  %v1999 = vld [vmem:[#allocation4 + $0x18] sm:$0xff]
  %v2000 = vld [vmem:[#allocation4 + $0x20] sm:$0xff]
  %v2001 = vld [vmem:[#allocation4 + $0x28] sm:$0xff]
  %v2002 = vld [vmem:[#allocation4 + $0x30] sm:$0xff]
  %v2003 = vld [vmem:[#allocation4 + $0x38] sm:$0xff]
  %v2004 = vld [vmem:[#allocation4 + $0x40] sm:$0xff]
  %v2005 = vmax.f32 %v1996, 0.0
  %v2006 = vmax.f32 %v1997, 0.0
  %v2007 = vmax.f32 %v1998, 0.0
  %v2008 = vmax.f32 %v1999, 0.0
  %v2009 = vmax.f32 %v2000, 0.0
  %v2010 = vmax.f32 %v2001, 0.0
  %v2011 = vmax.f32 %v2002, 0.0
  %v2012 = vmax.f32 %v2003, 0.0
  %v2013 = vmax.f32 %v2004, 0.0
  %v2014 = vpack.c.bf16 %v2006, %v2005
  %v2015 = vpack.c.bf16 %v2008, %v2007
  %v2016 = vpack.c.bf16 %v2010, %v2009
  %v2017 = vpack.c.bf16 %v2012, %v2011
  %v2018 = vpack.c.bf16 %v2013, %v2013
  %v2019 = vld [vmem:[%s6] sm:$0xf]
  %v2020 = vld [vmem:[%s6 + $0x4] sm:$0xf]
  %v2021 = vld [vmem:[%s6 + $0x8] sm:$0xf]
  %v2022 = vld [vmem:[%s6 + $0xc] sm:$0xf]
  %v2023 = vld [vmem:[%s7] sm:$0xf]
  %v2024 = vld [vmem:[%s7 + $0x4] sm:$0xf]
  %v2025 = vld [vmem:[%s7 + $0x8] sm:$0xf]
  %v2026 = vld [vmem:[%s7 + $0xc] sm:$0xf]
  %v2031 = vunpack.c.l.b16 %v2023
  %v2032 = vunpack.c.l.b16 %v2024
  %v2033 = vunpack.c.l.b16 %v2025
  %v2034 = vunpack.c.l.b16 %v2026
  %v2035 = vpack.c.b16 %v2032, %v2031
  %v2036 = vpack.c.b16 %v2034, %v2033
  %v2040 = vsel %vm109, %v2014, 0
  %v2043 = vsel %vm109, %v2015, 0
  %v2046 = vsel %vm109, %v2016, 0
  %v2049 = vsel %vm109, %v2017, 0
  %v2052 = vsel %vm109, %v2018, 0
  %2054 = vmatprep.subr.bf16.mxu0 0
  %2055 = vmatpush1.bf16.msra.mxu0 0
  %2056 = vmatprep.subr.bf16.mxu0 0
  %2057 = vmatpush1.bf16.msra.mxu0 0
  %2058 = vmatprep.subr.bf16.mxu0 0
  %2059 = vmatpush1.bf16.msra.mxu0 0
  %2060 = vmatprep.subr.bf16.mxu0 0
  %2061 = vmatpush1.bf16.msra.mxu0 0
  %2062 = vmatprep.subr.bf16.mxu0 0
  %2063 = vmatpush1.bf16.msra.mxu0 0
  %2064 = vmatprep.subr.bf16.mxu0 0
  %2065 = vmatpush1.bf16.msra.mxu0 0
  %2066 = vmatprep.subr.bf16.mxu0 0
  %2067 = vmatpush1.bf16.msra.mxu0 %v2036
  %2068 = vmatprep.subr.bf16.mxu0 0
  %2069 = vmatpush1.bf16.msra.mxu0 %v2035
  %2070 = vmatprep.subr.bf16.mxu0 0
  %2071 = vmatpush2.bf16.msra.mxu0 0
  %2072 = vmatprep.subr.bf16.mxu0 0
  %2073 = vmatpush2.bf16.msra.mxu0 0
  %2074 = vmatprep.subr.bf16.mxu0 0
  %2075 = vmatpush2.bf16.msra.mxu0 0
  %2076 = vmatprep.subr.bf16.mxu0 0
  %2077 = vmatpush2.bf16.msra.mxu0 0
  %2078 = vmatprep.subr.bf16.mxu0 0
  %2079 = vmatpush2.bf16.msra.mxu0 0
  %2080 = vmatprep.subr.bf16.mxu0 0
  %2081 = vmatpush2.bf16.msra.mxu0 0
  %2082 = vmatprep.subr.bf16.mxu0 0
  %2083 = vmatpush2.bf16.msra.mxu0 0
  %2084 = vmatprep.subr.bf16.mxu0 0
  %2085 = vmatpush2.bf16.msra.mxu0 0
  %2086 = vmatprep.mubr.bf16.mxu0 0
  %2087 = vmatmul.mubr.bf16.gmra.mxu0 %v2040
  %v2088 = vpop.f32.mrf.mxu0
  %v2089 = vadd.f32 0.0, %v2088
  %v2090 = vpop.f32.mrf.mxu0
  %v2091 = vpop.f32.mrf.mxu0
  %v2092 = vadd.f32 0.0, %v2091
  %v2093 = vpop.f32.mrf.mxu0
  %2094 = vmatprep.mubr.bf16.mxu0 0
  %2095 = vmatmul.mubr.bf16.gmra.mxu0 %v2043
  %v2096 = vpop.f32.mrf.mxu0
  %v2097 = vadd.f32 0.0, %v2096
  %v2098 = vpop.f32.mrf.mxu0
  %v2099 = vpop.f32.mrf.mxu0
  %v2100 = vadd.f32 0.0, %v2099
  %v2101 = vpop.f32.mrf.mxu0
  %2102 = vmatprep.mubr.bf16.mxu0 0
  %2103 = vmatmul.mubr.bf16.gmra.mxu0 %v2046
  %v2104 = vpop.f32.mrf.mxu0
  %v2105 = vadd.f32 0.0, %v2104
  %v2106 = vpop.f32.mrf.mxu0
  %v2107 = vpop.f32.mrf.mxu0
  %v2108 = vadd.f32 0.0, %v2107
  %v2109 = vpop.f32.mrf.mxu0
  %2110 = vmatprep.mubr.bf16.mxu0 0
  %2111 = vmatmul.mubr.bf16.gmra.mxu0 %v2049
  %v2112 = vpop.f32.mrf.mxu0
  %v2113 = vadd.f32 0.0, %v2112
  %v2114 = vpop.f32.mrf.mxu0
  %v2115 = vpop.f32.mrf.mxu0
  %v2116 = vadd.f32 0.0, %v2115
  %v2117 = vpop.f32.mrf.mxu0
  %2118 = vmatprep.mubr.bf16.mxu0 0
  %2119 = vmatmul.mubr.bf16.gmra.mxu0 %v2052
  %v2120 = vpop.f32.mrf.mxu0
  %v2121 = vadd.f32 0.0, %v2120
  %v2122 = vpop.f32.mrf.mxu0
  %v2123 = vpop.f32.mrf.mxu0
  %v2124 = vpop.f32.mrf.mxu0
  %2125 = vdwg.mxu0
  %v2130 = vunpack.c.l.b16 %v2019
  %v2131 = vunpack.c.l.b16 %v2020
  %v2132 = vunpack.c.l.b16 %v2021
  %v2133 = vunpack.c.l.b16 %v2022
  %v2134 = vpack.c.b16 %v2131, %v2130
  %v2135 = vpack.c.b16 %v2133, %v2132
  %v2139 = vsel %vm109, %v1991, 0
  %v2142 = vsel %vm109, %v1992, 0
  %v2145 = vsel %vm109, %v1993, 0
  %v2148 = vsel %vm109, %v1994, 0
  %v2151 = vsel %vm109, %v1995, 0
  %2153 = vmatprep.subr.bf16.mxu0 0
  %2154 = vmatpush1.bf16.msra.mxu0 0
  %2155 = vmatprep.subr.bf16.mxu0 0
  %2156 = vmatpush1.bf16.msra.mxu0 0
  %2157 = vmatprep.subr.bf16.mxu0 0
  %2158 = vmatpush1.bf16.msra.mxu0 0
  %2159 = vmatprep.subr.bf16.mxu0 0
  %2160 = vmatpush1.bf16.msra.mxu0 0
  %2161 = vmatprep.subr.bf16.mxu0 0
  %2162 = vmatpush1.bf16.msra.mxu0 0
  %2163 = vmatprep.subr.bf16.mxu0 0
  %2164 = vmatpush1.bf16.msra.mxu0 0
  %2165 = vmatprep.subr.bf16.mxu0 0
  %2166 = vmatpush1.bf16.msra.mxu0 %v2135
  %2167 = vmatprep.subr.bf16.mxu0 0
  %2168 = vmatpush1.bf16.msra.mxu0 %v2134
  %2169 = vmatprep.subr.bf16.mxu0 0
  %2170 = vmatpush2.bf16.msra.mxu0 0
  %2171 = vmatprep.subr.bf16.mxu0 0
  %2172 = vmatpush2.bf16.msra.mxu0 0
  %2173 = vmatprep.subr.bf16.mxu0 0
  %2174 = vmatpush2.bf16.msra.mxu0 0
  %2175 = vmatprep.subr.bf16.mxu0 0
  %2176 = vmatpush2.bf16.msra.mxu0 0
  %2177 = vmatprep.subr.bf16.mxu0 0
  %2178 = vmatpush2.bf16.msra.mxu0 0
  %2179 = vmatprep.subr.bf16.mxu0 0
  %2180 = vmatpush2.bf16.msra.mxu0 0
  %2181 = vmatprep.subr.bf16.mxu0 0
  %2182 = vmatpush2.bf16.msra.mxu0 0
  %2183 = vmatprep.subr.bf16.mxu0 0
  %2184 = vmatpush2.bf16.msra.mxu0 0
  %2185 = vmatprep.mubr.bf16.mxu0 0
  %2186 = vmatmul.mubr.bf16.gmra.mxu0 %v2139
  %v2187 = vpop.f32.mrf.mxu0
  %v2188 = vadd.f32 %v2089, %v2187
  %v2189 = vpop.f32.mrf.mxu0
  %v2190 = vpop.f32.mrf.mxu0
  %v2191 = vadd.f32 %v2092, %v2190
  %v2192 = vpop.f32.mrf.mxu0
  %2193 = vmatprep.mubr.bf16.mxu0 0
  %2194 = vmatmul.mubr.bf16.gmra.mxu0 %v2142
  %v2195 = vpop.f32.mrf.mxu0
  %v2196 = vadd.f32 %v2097, %v2195
  %v2197 = vpop.f32.mrf.mxu0
  %v2198 = vpop.f32.mrf.mxu0
  %v2199 = vadd.f32 %v2100, %v2198
  %v2200 = vpop.f32.mrf.mxu0
  %2201 = vmatprep.mubr.bf16.mxu0 0
  %2202 = vmatmul.mubr.bf16.gmra.mxu0 %v2145
  %v2203 = vpop.f32.mrf.mxu0
  %v2204 = vadd.f32 %v2105, %v2203
  %v2205 = vpop.f32.mrf.mxu0
  %v2206 = vpop.f32.mrf.mxu0
  %v2207 = vadd.f32 %v2108, %v2206
  %v2208 = vpop.f32.mrf.mxu0
  %2209 = vmatprep.mubr.bf16.mxu0 0
  %2210 = vmatmul.mubr.bf16.gmra.mxu0 %v2148
  %v2211 = vpop.f32.mrf.mxu0
  %v2212 = vadd.f32 %v2113, %v2211
  %v2213 = vpop.f32.mrf.mxu0
  %v2214 = vpop.f32.mrf.mxu0
  %v2215 = vadd.f32 %v2116, %v2214
  %v2216 = vpop.f32.mrf.mxu0
  %2217 = vmatprep.mubr.bf16.mxu0 0
  %2218 = vmatmul.mubr.bf16.gmra.mxu0 %v2151
  %v2219 = vpop.f32.mrf.mxu0
  %v2220 = vadd.f32 %v2121, %v2219
  %v2221 = vpop.f32.mrf.mxu0
  %v2222 = vpop.f32.mrf.mxu0
  %v2223 = vpop.f32.mrf.mxu0
  %2224 = vdwg.mxu0
  %v2225 = vld [vmem:[%s8] sm:$0x1]
  %v2227 = vlaneseq
  %v2228 = vshrl.u32 %v2227, 7
  %v2229 = vsub.s32 0, %v2228
  %v2230 = vrot.slane %v2225, %v2229
  %v2232 = vadd.f32 %v2188, %v2230
  %v2233 = vadd.f32 %v2191, %v2230
  %v2234 = vadd.f32 %v2196, %v2230
  %v2235 = vadd.f32 %v2199, %v2230
  %v2236 = vadd.f32 %v2204, %v2230
  %v2237 = vadd.f32 %v2207, %v2230
  %v2238 = vadd.f32 %v2212, %v2230
  %v2239 = vadd.f32 %v2215, %v2230
  %v2240 = vadd.f32 %v2220, %v2230
  %v2241 = vmax.f32 %v2232, 0.0
  %v2242 = vmax.f32 %v2233, 0.0
  %v2243 = vmax.f32 %v2234, 0.0
  %v2244 = vmax.f32 %v2235, 0.0
  %v2245 = vmax.f32 %v2236, 0.0
  %v2246 = vmax.f32 %v2237, 0.0
  %v2247 = vmax.f32 %v2238, 0.0
  %v2248 = vmax.f32 %v2239, 0.0
  %v2249 = vmax.f32 %v2240, 0.0
  %v2250 = vld [vmem:[%s9] sm:$0x1]
  %v2252 = vlaneseq
  %v2253 = vshrl.u32 %v2252, 7
  %v2254 = vsub.s32 0, %v2253
  %v2255 = vrot.slane %v2250, %v2254
  %v2257 = vmul.f32 %v2241, %v2255
  %v2258 = vmul.f32 %v2242, %v2255
  %v2259 = vmul.f32 %v2243, %v2255
  %v2260 = vmul.f32 %v2244, %v2255
  %v2261 = vmul.f32 %v2245, %v2255
  %v2262 = vmul.f32 %v2246, %v2255
  %v2263 = vmul.f32 %v2247, %v2255
  %v2264 = vmul.f32 %v2248, %v2255
  %v2265 = vmul.f32 %v2249, %v2255
  %2266 = vadd.xlane.f32.xlu0 %v2257
  %v2267 = vpop.xlane.xlu0 %2266
  %2268 = vadd.xlane.f32.xlu0 %v2258
  %v2269 = vpop.xlane.xlu0 %2268
  %2270 = vadd.xlane.f32.xlu0 %v2259
  %v2271 = vpop.xlane.xlu0 %2270
  %2272 = vadd.xlane.f32.xlu0 %v2260
  %v2273 = vpop.xlane.xlu0 %2272
  %2274 = vadd.xlane.f32.xlu0 %v2261
  %v2275 = vpop.xlane.xlu0 %2274
  %2276 = vadd.xlane.f32.xlu0 %v2262
  %v2277 = vpop.xlane.xlu0 %2276
  %2278 = vadd.xlane.f32.xlu0 %v2263
  %v2279 = vpop.xlane.xlu0 %2278
  %2280 = vadd.xlane.f32.xlu0 %v2264
  %v2281 = vpop.xlane.xlu0 %2280
  %2282 = vadd.xlane.f32.xlu0 %v2265
  %v2283 = vpop.xlane.xlu0 %2282
  %v2284 = vld [vmem:[#allocation5] sm:$0x1]
  %v2286 = vlaneseq
  %v2287 = vshrl.u32 %v2286, 7
  %v2288 = vsub.s32 0, %v2287
  %v2289 = vrot.slane %v2284, %v2288
  %v2291 = vadd.f32 %v2267, %v2289
  %v2292 = vadd.f32 %v2269, %v2289
  %v2293 = vadd.f32 %v2271, %v2289
  %v2294 = vadd.f32 %v2273, %v2289
  %v2295 = vadd.f32 %v2275, %v2289
  %v2296 = vadd.f32 %v2277, %v2289
  %v2297 = vadd.f32 %v2279, %v2289
  %v2298 = vadd.f32 %v2281, %v2289
  %v2299 = vadd.f32 %v2283, %v2289
  %v2300 = vsub.f32 0.0, %v2291
  %v2301 = vsub.f32 0.0, %v2292
  %v2302 = vsub.f32 0.0, %v2293
  %v2303 = vsub.f32 0.0, %v2294
  %v2304 = vsub.f32 0.0, %v2295
  %v2305 = vsub.f32 0.0, %v2296
  %v2306 = vsub.f32 0.0, %v2297
  %v2307 = vsub.f32 0.0, %v2298
  %v2308 = vsub.f32 0.0, %v2299
  %v2309 = vmul.f32 %v2300, 1.442695
  %v2310 = vpow.pop %v2309
  %v2311 = vmul.f32 %v2301, 1.442695
  %v2312 = vpow.pop %v2311
  %v2313 = vmul.f32 %v2302, 1.442695
  %v2314 = vpow.pop %v2313
  %v2315 = vmul.f32 %v2303, 1.442695
  %v2316 = vpow.pop %v2315
  %v2317 = vmul.f32 %v2304, 1.442695
  %v2318 = vpow.pop %v2317
  %v2319 = vmul.f32 %v2305, 1.442695
  %v2320 = vpow.pop %v2319
  %v2321 = vmul.f32 %v2306, 1.442695
  %v2322 = vpow.pop %v2321
  %v2323 = vmul.f32 %v2307, 1.442695
  %v2324 = vpow.pop %v2323
  %v2325 = vmul.f32 %v2308, 1.442695
  %v2326 = vpow.pop %v2325
  %v2327 = vadd.f32 %v2310, 1.0
  %v2328 = vadd.f32 %v2312, 1.0
  %v2329 = vadd.f32 %v2314, 1.0
  %v2330 = vadd.f32 %v2316, 1.0
  %v2331 = vadd.f32 %v2318, 1.0
  %v2332 = vadd.f32 %v2320, 1.0
  %v2333 = vadd.f32 %v2322, 1.0
  %v2334 = vadd.f32 %v2324, 1.0
  %v2335 = vadd.f32 %v2326, 1.0
  %v2336 = vrcp.pop %v2327
  %v2337 = vrcp.pop %v2328
  %v2338 = vrcp.pop %v2329
  %v2339 = vrcp.pop %v2330
  %v2340 = vrcp.pop %v2331
  %v2341 = vrcp.pop %v2332
  %v2342 = vrcp.pop %v2333
  %v2343 = vrcp.pop %v2334
  %v2344 = vrcp.pop %v2335
  %2354 = vset.pattern.permute.xlu0 0
  %2355 = vperm.xlu0 %2354, %v2336
  %v2356 = vpop.permute.xlu0 %2355
  %2357 = vset.pattern.permute.xlu0 0
  %2358 = vperm.xlu0 %2357, %v2337
  %v2359 = vpop.permute.xlu0 %2358
  %2360 = vset.pattern.permute.xlu0 0
  %2361 = vperm.xlu0 %2360, %v2338
  %v2362 = vpop.permute.xlu0 %2361
  %2363 = vset.pattern.permute.xlu0 0
  %2364 = vperm.xlu0 %2363, %v2339
  %v2365 = vpop.permute.xlu0 %2364
  %2366 = vset.pattern.permute.xlu0 0
  %2367 = vperm.xlu0 %2366, %v2340
  %v2368 = vpop.permute.xlu0 %2367
  %2369 = vset.pattern.permute.xlu0 0
  %2370 = vperm.xlu0 %2369, %v2341
  %v2371 = vpop.permute.xlu0 %2370
  %2372 = vset.pattern.permute.xlu0 0
  %2373 = vperm.xlu0 %2372, %v2342
  %v2374 = vpop.permute.xlu0 %2373
  %2375 = vset.pattern.permute.xlu0 0
  %2376 = vperm.xlu0 %2375, %v2343
  %v2377 = vpop.permute.xlu0 %2376
  %2378 = vset.pattern.permute.xlu0 0
  %2379 = vperm.xlu0 %2378, %v2344
  %v2380 = vpop.permute.xlu0 %2379
  %v2381 = vlaneseq
  %v2382 = vand.u32 %v2381, 127
  %v2383 = vlaneseq
  %v2384 = vshrl.u32 %v2383, 7
  %v2385 = vsub.s32 %v2382, %v2384
  %v2386 = vrot.slane %v2356, %v2385
  %v2387 = vlaneseq
  %v2388 = vshrl.u32 %v2387, 7
  %v2389 = vsub.s32 %v2382, %v2388
  %v2390 = vrot.slane %v2359, %v2389
  %v2391 = vlaneseq
  %v2392 = vshrl.u32 %v2391, 7
  %v2393 = vsub.s32 %v2382, %v2392
  %v2394 = vrot.slane %v2362, %v2393
  %v2395 = vlaneseq
  %v2396 = vshrl.u32 %v2395, 7
  %v2397 = vsub.s32 %v2382, %v2396
  %v2398 = vrot.slane %v2365, %v2397
  %v2399 = vlaneseq
  %v2400 = vshrl.u32 %v2399, 7
  %v2401 = vsub.s32 %v2382, %v2400
  %v2402 = vrot.slane %v2368, %v2401
  %v2403 = vlaneseq
  %v2404 = vshrl.u32 %v2403, 7
  %v2405 = vsub.s32 %v2382, %v2404
  %v2406 = vrot.slane %v2371, %v2405
  %v2407 = vlaneseq
  %v2408 = vshrl.u32 %v2407, 7
  %v2409 = vsub.s32 %v2382, %v2408
  %v2410 = vrot.slane %v2374, %v2409
  %v2411 = vlaneseq
  %v2412 = vshrl.u32 %v2411, 7
  %v2413 = vsub.s32 %v2382, %v2412
  %v2414 = vrot.slane %v2377, %v2413
  %v2415 = vlaneseq
  %v2416 = vshrl.u32 %v2415, 7
  %v2417 = vsub.s32 %v2382, %v2416
  %v2418 = vrot.slane %v2380, %v2417
  %vm2419 = vcmask 1041409
  %v2420 = vsel %vm2419, %v2390, %v2386
  %vm2421 = vcmask 1042434
  %v2422 = vsel %vm2421, %v2394, %v2420
  %vm2423 = vcmask 1043459
  %v2424 = vsel %vm2423, %v2398, %v2422
  %vm2425 = vcmask 1044484
  %v2426 = vsel %vm2425, %v2402, %v2424
  %vm2427 = vcmask 1045509
  %v2428 = vsel %vm2427, %v2406, %v2426
  %vm2429 = vcmask 1046534
  %v2430 = vsel %vm2429, %v2410, %v2428
  %vm2431 = vcmask 1047559
  %v2432 = vsel %vm2431, %v2414, %v2430
  %vm2435 = vcmask 64512
  %2436 = vst.msk [vmem:[%s11] sm:$0xff] %vm2435, %v2432
  %vm2437 = vcmask 57344
  %2438 = vst.msk [vmem:[%s11 + $0x8] sm:$0x1] %vm2437, %v2418
  // Predicated region
  $region46: #{tpu_custom_call.1} parent=0 // pred_check
    _
  $region47: #{tpu_custom_call.1} parent=0 // pred_check_branch
    %2440 = sbr.rel (0) target = $region49
  $region48: #{tpu_custom_call.1} parent=0 // pred_region
    _
  $region49: #{tpu_custom_call.1} parent=0 // pred_fallthru
    _
  // Predicated region
  $region50: #{tpu_custom_call.1} parent=0 // pred_check
    _
  $region51: #{tpu_custom_call.1} parent=0 // pred_check_branch
    %2442 = sbr.rel (0) target = $region53
  $region52: #{tpu_custom_call.1} parent=0 // pred_region
    _
  $region53: #{tpu_custom_call.1} parent=0 // pred_fallthru
    _

</llo_original>
